<compile_context>
chip_gen: v6e
topology: v6e:2x2x1
jax: 0.10.0
libtpu: 0.0.40
codegen_flags: <defaults>
</compile_context>

<pallas_src>
import functools

import jax
import jax.numpy as jnp
from jax import lax
from jax.experimental import pallas as pl
from jax.experimental.pallas import tpu as pltpu

_BN_EPS = 1e-5


def _bn_affine(bn):
    """Fold eval-mode BatchNorm into y = x*a + c (per channel)."""
    g, b, rm, rv = bn
    a = g / jnp.sqrt(rv + _BN_EPS)
    return a, b - rm * a


def flow_step_forward(x_nchw, sldj, p):
    """Forward (reverse=False) flow step. x_nchw: (B, C, H, W)."""
    B, C, H, W = x_nchw.shape
    Cc = C // 2
    M = p['w2'].shape[0]
    HW = H * W
    f32 = jnp.float32

    # Two "parallel" grid steps when possible (keeps both v7x TCs busy); the
    # remaining batch is folded onto the lane axis inside each step (v5e/v6e
    # pay only one extra ~0.35us prologue for the second step).
    G = 2 if (B % 2 == 0 and B >= 2) else 1
    Bp = B // G
    L = Bp * HW                                   # lane extent per grid step

    # ------------------------ parameter folding (glue) -----------------------
    a0, c0 = _bn_affine(p['bn0'])                 # (Cc,)
    a1, c1 = _bn_affine(p['bn1'])                 # (M,)
    a2, c2 = _bn_affine(p['bn2'])                 # (M,)

    ansc = jnp.exp(p['an_logs']).astype(f32)      # ActNorm scale, exp hoisted
    anb = p['an_bias'].astype(f32)
    winv = p['w_inv'].astype(f32)

    # ActNorm + InvConv + in_norm folded into one (C+Cc, C) matrix + bias:
    #   z      = winv @ ((x + anb) * ansc)        = A @ x + bz
    #   h0_pre = a0 * z[Cc:] + c0                 = (a0*A[Cc:]) @ x + (a0*bz[Cc:]+c0)
    A = winv * ansc[None, :]
    bz = jnp.dot(winv, ansc * anb, precision=lax.Precision.HIGHEST)
    Wf = jnp.concatenate([A, a0[:, None] * A[Cc:]], axis=0)        # (C+Cc, C)
    bfv = jnp.concatenate([bz, a0 * bz[Cc:] + c0])                 # (C+Cc,)

    # Conv weights flattened so each 3x3 conv is a single matmul over stacked
    # taps; column index = (kh*3+kw)*Cin + cin.  BN1/BN2 scales folded in.
    w1f = jnp.transpose(p['w1'], (0, 2, 3, 1)).reshape(M, 9 * Cc)
    w1f = (a1[:, None] * w1f).astype(jnp.bfloat16)                 # (M, 9*Cc)
    w2f = (a2[:, None] * p['w2'][:, :, 0, 0]).astype(jnp.bfloat16) # (M, M)
    # out_conv: group even (-> s) then odd (-> t) output channels so one
    # matmul produces both halves; kept f32 (feeds exp/log-det).
    w3_sel = jnp.concatenate([p['w3'][0::2], p['w3'][1::2]], axis=0)
    w3f = jnp.transpose(w3_sel, (0, 2, 3, 1)).reshape(2 * Cc, 9 * M).astype(f32)
    b3r = jnp.concatenate([p['b3'][0::2], p['b3'][1::2]]).astype(f32)

    # Pack the 5 remaining per-channel column params into ONE sublane-padded
    # (5*S, 1) array -> a single tiny input DMA instead of five.
    S = 8 * (-(-max(C + Cc, M, 2 * Cc, Cc) // 8))

    def _slot(v):
        v = v.astype(f32)
        return jnp.concatenate([v, jnp.zeros((S - v.shape[0],), f32)])

    pcol = jnp.concatenate(
        [_slot(bfv), _slot(c1), _slot(c2), _slot(b3r), _slot(p['coup_scale'])]
    ).reshape(-1, 1)

    # Per-tap source-validity masks (== zero padding of the SAME conv), tiled
    # over the Bp images folded onto the lane axis.  They also kill any
    # cross-image leakage from the lane-axis rotations.
    yy, xx = jnp.meshgrid(jnp.arange(H), jnp.arange(W), indexing='ij')
    offs, rows = [], []
    for kh in range(3):
        for kw in range(3):
            dy, dx = kh - 1, kw - 1
            offs.append(dy * W + dx)
            ok = (yy + dy >= 0) & (yy + dy < H) & (xx + dx >= 0) & (xx + dx < W)
            rows.append(jnp.tile(ok.reshape(HW), Bp))
    mask9 = jnp.stack(rows).astype(f32)           # (9, L)

    # NCHW -> (B, C, H*W): channels on sublanes, pixels on lanes (reshape only,
    # no transpose anywhere in the glue).
    x3 = x_nchw.reshape(B, C, HW).astype(f32)

    def kernel(x_ref, wf_ref, pc_ref, m9_ref, w1_ref, w2_ref, w3_ref,
               y_ref, ldj_ref):
        # Fold this step's Bp images onto lanes: (C, L), lane-aligned pieces.
        x2 = jnp.concatenate([x_ref[b] for b in range(Bp)], axis=-1)

        pc = pc_ref[...]
        bfc = pc[0 * S:0 * S + C + Cc]            # fused ActNorm/InvConv/BN0 bias
        c1c = pc[1 * S:1 * S + M]                 # mid_norm bias
        c2c = pc[2 * S:2 * S + M]                 # out_norm bias
        b3c = pc[3 * S:3 * S + 2 * Cc]            # out_conv bias (s|t order)
        csc = pc[4 * S:4 * S + Cc]                # coupling scale
        m9 = m9_ref[...]

        # ActNorm + InvConv 1x1 + in_norm: one exact small matmul.  Rows [:C]
        # are the InvConv output (identity half feeds y directly), rows [C:]
        # are the pre-ReLU input of the coupling NN.
        zz = jnp.dot(wf_ref[...], x2, preferred_element_type=jnp.float32,
                     precision=lax.Precision.HIGHEST) + bfc
        x_change = zz[:Cc]
        x_id = zz[Cc:C]
        h = jnp.maximum(zz[C:], 0.0)              # relu(in_norm(x_id))

        def tap_stack(a):
            """(Cin, L) -> (9*Cin, L): boundary-masked shifted views stacked
            along the contraction axis (XLU roll, no unaligned lane slices)."""
            parts = []
            for k, off in enumerate(offs):
                if off == 0:
                    parts.append(a)               # center tap: no roll, no mask
                else:
                    v = pltpu.roll(a, shift=(-off) % L, axis=1)
                    parts.append(v * m9[k:k + 1, :])
            return jnp.concatenate(parts, axis=0)

        # in_conv 3x3 (+ mid_norm scale folded): ONE matmul, K = 9*Cc.
        t1 = tap_stack(h).astype(jnp.bfloat16)
        h = jnp.dot(w1_ref[...], t1, preferred_element_type=jnp.float32)
        h = jnp.maximum(h + c1c, 0.0)

        # mid_conv 1x1 (+ out_norm scale folded).
        h = jnp.dot(w2_ref[...], h.astype(jnp.bfloat16),
                    preferred_element_type=jnp.float32)
        h = jnp.maximum(h + c2c, 0.0)

        # out_conv 3x3 (+bias), s/t merged; f32 HIGHEST keeps the s-path
        # (feeds exp and the log-det) accurate.
        t3 = tap_stack(h)
        st = jnp.dot(w3_ref[...], t3, preferred_element_type=jnp.float32,
                     precision=lax.Precision.HIGHEST) + b3c

        s = csc * jnp.tanh(st[:Cc])
        t = st[Cc:]

        y2 = jnp.concatenate([(x_change + t) * jnp.exp(s), x_id], axis=0)

        # Per-image full-block stores (lane-aligned, 256-lane slices) and one
        # lane-dense (Bp, 128) log-det store for the whole step.
        ldj_rows = []
        for b in range(Bp):
            sl = s[:, b * HW:(b + 1) * HW]
            y_ref[b] = y2[:, b * HW:(b + 1) * HW]
            r = jnp.sum(jnp.sum(sl, axis=1, keepdims=True), axis=0, keepdims=True)
            ldj_rows.append(jnp.broadcast_to(r, (1, 128)))
        ldj_ref[0] = jnp.concatenate(ldj_rows, axis=0)

    full = lambda a: pl.BlockSpec(a.shape, lambda g, _n=a.ndim: (0,) * _n)

    y3, ldj3 = pl.pallas_call(
        kernel,
        grid=(G,),
        in_specs=[pl.BlockSpec((Bp, C, HW), lambda g: (g, 0, 0)),
                  full(Wf), full(pcol), full(mask9),
                  full(w1f), full(w2f), full(w3f)],
        out_specs=(pl.BlockSpec((Bp, C, HW), lambda g: (g, 0, 0)),
                   pl.BlockSpec((1, Bp, 128), lambda g: (g, 0, 0))),
        out_shape=(jax.ShapeDtypeStruct((B, C, HW), f32),
                   jax.ShapeDtypeStruct((G, Bp, 128), f32)),
        compiler_params=pltpu.CompilerParams(
            dimension_semantics=("parallel",)),
    )(x3, Wf, pcol, mask9, w1f, w2f, w3f)

    y = y3.reshape(B, C, H, W)
    coup_ldj = ldj3.reshape(B, 128)[:, 0]

    # Parameter-only scalar log-det terms (computed once in glue).
    an_ldj = jnp.sum(p['an_logs']) * H * W
    # TODO(synk): slogdet (LU decomposition) has no clean Pallas equivalent;
    # parameter-only scalar computed host-side in plain JAX.
    inv_ldj = jnp.linalg.slogdet(p['w_inv'])[1] * H * W
    return y, sldj + an_ldj + inv_ldj + coup_ldj


# --------------------------- Parameter creation ----------------------------- #
def init_params(key, C, M):
    Cc = C // 2
    ks = jax.random.split(key, 20)

    def bn(k0, k1, k2, k3, n):
        gamma = 1.0 + 0.1 * jax.random.normal(k0, (n,), jnp.float32)
        beta = 0.1 * jax.random.normal(k1, (n,), jnp.float32)
        rmean = 0.1 * jax.random.normal(k2, (n,), jnp.float32)
        rvar = 1.0 + 0.1 * jax.random.uniform(k3, (n,), jnp.float32)
        return gamma, beta, rmean, rvar

    q, _ = jnp.linalg.qr(jax.random.normal(ks[2], (C, C), jnp.float32))
    return dict(
        an_bias=0.1 * jax.random.normal(ks[0], (C,), jnp.float32),   # ActNorm bias
        an_logs=0.1 * jax.random.normal(ks[1], (C,), jnp.float32),   # ActNorm logs
        w_inv=q.astype(jnp.float32),                                 # InvConv weight
        bn0=bn(ks[3], ks[4], ks[5], ks[6], Cc),
        bn1=bn(ks[7], ks[8], ks[9], ks[10], M),
        bn2=bn(ks[11], ks[12], ks[13], ks[14], M),
        w1=0.05 * jax.random.normal(ks[15], (M, Cc, 3, 3), jnp.float32),   # in_conv
        w2=0.05 * jax.random.normal(ks[16], (M, M, 1, 1), jnp.float32),    # mid_conv
        # PyTorch zero-inits out_conv; use small values so the path does work.
        w3=0.05 * jax.random.normal(ks[17], (2 * Cc, M, 3, 3), jnp.float32),
        b3=0.05 * jax.random.normal(ks[18], (2 * Cc,), jnp.float32),
        coup_scale=jnp.ones((Cc,), jnp.float32),                     # Coupling.scale
    )


# ---------------------------- Pure-JAX reference ---------------------------- #
def reference_forward(x, sldj, p):
    B, C, H, W = x.shape
    Cc = C // 2
    dn = ('NCHW', 'OIHW', 'NCHW')
    conv = functools.partial(lax.conv_general_dilated, window_strides=(1, 1),
                             dimension_numbers=dn, precision=lax.Precision.HIGHEST)

    def bn(h, bnp):
        g, b, rm, rv = (v.reshape(1, -1, 1, 1) for v in bnp)
        return (h - rm) / jnp.sqrt(rv + _BN_EPS) * g + b

    xa = (x + p['an_bias'].reshape(1, C, 1, 1)) * jnp.exp(p['an_logs']).reshape(1, C, 1, 1)
    sldj = sldj + jnp.sum(p['an_logs']) * H * W
    z = conv(xa, p['w_inv'].reshape(C, C, 1, 1), padding='VALID')
    sldj = sldj + jnp.linalg.slogdet(p['w_inv'])[1] * H * W
    x_change, x_id = z[:, :Cc], z[:, Cc:]
    h = jax.nn.relu(bn(x_id, p['bn0']))
    h = conv(h, p['w1'], padding=((1, 1), (1, 1)))
    h = jax.nn.relu(bn(h, p['bn1']))
    h = conv(h, p['w2'], padding='VALID')
    h = jax.nn.relu(bn(h, p['bn2']))
    st = conv(h, p['w3'], padding=((1, 1), (1, 1))) + p['b3'].reshape(1, -1, 1, 1)
    s, t = st[:, 0::2], st[:, 1::2]
    s = p['coup_scale'].reshape(1, Cc, 1, 1) * jnp.tanh(s)
    x_change = (x_change + t) * jnp.exp(s)
    sldj = sldj + s.reshape(B, -1).sum(-1)
    return jnp.concatenate([x_change, x_id], axis=1), sldj


# ----------------------------------- Main ----------------------------------- #
if __name__ == "__main__":
    B, C, H, W, MID = 4, 4, 16, 16, 8     # B=4 exercises the batch lane-folding
    key = jax.random.PRNGKey(0)
    kx, kp = jax.random.split(key)
    x = jax.random.normal(kx, (B, C, H, W), jnp.float32)
    sldj = jnp.zeros((B,), jnp.float32)
    params = init_params(kp, C, MID)

    y, sldj_out = jax.jit(flow_step_forward)(x, sldj, params)
    jax.block_until_ready((y, sldj_out))

    y_ref, sldj_ref = reference_forward(x, sldj, params)
    assert y.shape == (B, C, H, W) and sldj_out.shape == (B,)
    # Identity half and out_conv run f32 HIGHEST; in/mid convs run bf16 MXU.
    assert jnp.allclose(y, y_ref, atol=5e-3, rtol=5e-3), float(jnp.max(jnp.abs(y - y_ref)))
    assert jnp.allclose(sldj_out, sldj_ref, atol=5e-2, rtol=1e-3), \
        float(jnp.max(jnp.abs(sldj_out - sldj_ref)))

    print("KERNEL_OK")
</pallas_src>

<mosaic_0001>
module attributes {stable_mosaic.version = 11 : i64} {
  func.func @kernel(%arg0: i32, %arg1: memref<2x4x256xf32, #tpu.memory_space<vmem>>, %arg2: memref<6x4xf32, #tpu.memory_space<vmem>>, %arg3: memref<40x1xf32, #tpu.memory_space<vmem>>, %arg4: memref<9x512xf32, #tpu.memory_space<vmem>>, %arg5: memref<8x18xbf16, #tpu.memory_space<vmem>>, %arg6: memref<8x8xbf16, #tpu.memory_space<vmem>>, %arg7: memref<4x72xf32, #tpu.memory_space<vmem>>, %arg8: memref<2x4x256xf32, #tpu.memory_space<vmem>>, %arg9: memref<1x2x128xf32, #tpu.memory_space<vmem>>) attributes {dimension_semantics = [#tpu.dimension_semantics<parallel>], iteration_bounds = array<i64: 2>, scalar_prefetch = 0 : i64, scratch_operands = 0 : i64, tpu.core_type = #tpu.core_type<tc>, window_params = [{transform_indices = @transform_0, window_bounds = array<i64: 2, 4, 256>}, {pipeline_mode = #tpu.pipeline_mode<synchronous>, transform_indices = @transform_1, window_bounds = array<i64: 6, 4>}, {pipeline_mode = #tpu.pipeline_mode<synchronous>, transform_indices = @transform_2, window_bounds = array<i64: 40, 1>}, {pipeline_mode = #tpu.pipeline_mode<synchronous>, transform_indices = @transform_3, window_bounds = array<i64: 9, 512>}, {pipeline_mode = #tpu.pipeline_mode<synchronous>, transform_indices = @transform_4, window_bounds = array<i64: 8, 18>}, {pipeline_mode = #tpu.pipeline_mode<synchronous>, transform_indices = @transform_5, window_bounds = array<i64: 8, 8>}, {pipeline_mode = #tpu.pipeline_mode<synchronous>, transform_indices = @transform_6, window_bounds = array<i64: 4, 72>}, {transform_indices = @transform_7, window_bounds = array<i64: 2, 4, 256>}, {transform_indices = @transform_8, window_bounds = array<i64: 1, 2, 128>}]} {
    %c0 = arith.constant 0 : index
    %c0_0 = arith.constant 0 : index
    %c0_1 = arith.constant 0 : index
    %0 = vector.load %arg1[%c0, %c0_0, %c0_1] : memref<2x4x256xf32, #tpu.memory_space<vmem>>, vector<1x4x256xf32>
    %1 = vector.shape_cast %0 : vector<1x4x256xf32> to vector<4x256xf32>
    %c1 = arith.constant 1 : index
    %c0_2 = arith.constant 0 : index
    %c0_3 = arith.constant 0 : index
    %2 = vector.load %arg1[%c1, %c0_2, %c0_3] : memref<2x4x256xf32, #tpu.memory_space<vmem>>, vector<1x4x256xf32>
    %3 = vector.shape_cast %2 : vector<1x4x256xf32> to vector<4x256xf32>
    %4 = tpu.concatenate %1, %3 in 1 : vector<4x256xf32>, vector<4x256xf32> -> vector<4x512xf32>
    %c0_4 = arith.constant 0 : index
    %c0_5 = arith.constant 0 : index
    %5 = vector.load %arg3[%c0_4, %c0_5] : memref<40x1xf32, #tpu.memory_space<vmem>>, vector<40x1xf32>
    %6 = vector.extract_strided_slice %5 {offsets = [0, 0], sizes = [6, 1], strides = [1, 1]} : vector<40x1xf32> to vector<6x1xf32>
    %7 = vector.extract_strided_slice %5 {offsets = [8, 0], sizes = [8, 1], strides = [1, 1]} : vector<40x1xf32> to vector<8x1xf32>
    %8 = vector.extract_strided_slice %5 {offsets = [16, 0], sizes = [8, 1], strides = [1, 1]} : vector<40x1xf32> to vector<8x1xf32>
    %9 = vector.extract_strided_slice %5 {offsets = [24, 0], sizes = [4, 1], strides = [1, 1]} : vector<40x1xf32> to vector<4x1xf32>
    %10 = vector.extract_strided_slice %5 {offsets = [32, 0], sizes = [2, 1], strides = [1, 1]} : vector<40x1xf32> to vector<2x1xf32>
    %c0_6 = arith.constant 0 : index
    %c0_7 = arith.constant 0 : index
    %11 = vector.load %arg4[%c0_6, %c0_7] : memref<9x512xf32, #tpu.memory_space<vmem>>, vector<9x512xf32>
    %c0_8 = arith.constant 0 : index
    %c0_9 = arith.constant 0 : index
    %12 = vector.load %arg2[%c0_8, %c0_9] : memref<6x4xf32, #tpu.memory_space<vmem>>, vector<6x4xf32>
    %cst = arith.constant dense<0.000000e+00> : vector<6x512xf32>
    %13 = tpu.matmul %12, %4, %cst {dimension_numbers = #tpu.dot_dimension_numbers<[1], [0], [0], [1], [0, 0, 1, 1], [], []>, precision = #tpu.contract_precision<fp32>} : vector<6x4xf32>, vector<4x512xf32>, vector<6x512xf32> -> vector<6x512xf32>
    %14 = vector.broadcast %6 : vector<6x1xf32> to vector<6x512xf32>
    %15 = arith.addf %13, %14 : vector<6x512xf32>
    %16 = vector.extract_strided_slice %15 {offsets = [0, 0], sizes = [2, 512], strides = [1, 1]} : vector<6x512xf32> to vector<2x512xf32>
    %17 = vector.extract_strided_slice %15 {offsets = [2, 0], sizes = [2, 512], strides = [1, 1]} : vector<6x512xf32> to vector<2x512xf32>
    %18 = vector.extract_strided_slice %15 {offsets = [4, 0], sizes = [2, 512], strides = [1, 1]} : vector<6x512xf32> to vector<2x512xf32>
    %cst_10 = arith.constant 0.000000e+00 : f32
    %19 = vector.broadcast %cst_10 : f32 to vector<2x512xf32>
    %20 = arith.maximumf %18, %19 : vector<2x512xf32>
    %c17_i32 = arith.constant 17 : i32
    %21 = tpu.dynamic_rotate %20 by %c17_i32 dim 1 : vector<2x512xf32>, i32 -> vector<2x512xf32>
    %22 = vector.extract_strided_slice %11 {offsets = [0, 0], sizes = [1, 512], strides = [1, 1]} : vector<9x512xf32> to vector<1x512xf32>
    %23 = vector.broadcast %22 : vector<1x512xf32> to vector<2x512xf32>
    %24 = arith.mulf %21, %23 : vector<2x512xf32>
    %c16_i32 = arith.constant 16 : i32
    %25 = tpu.dynamic_rotate %20 by %c16_i32 dim 1 : vector<2x512xf32>, i32 -> vector<2x512xf32>
    %26 = vector.extract_strided_slice %11 {offsets = [1, 0], sizes = [1, 512], strides = [1, 1]} : vector<9x512xf32> to vector<1x512xf32>
    %27 = vector.broadcast %26 : vector<1x512xf32> to vector<2x512xf32>
    %28 = arith.mulf %25, %27 : vector<2x512xf32>
    %c15_i32 = arith.constant 15 : i32
    %29 = tpu.dynamic_rotate %20 by %c15_i32 dim 1 : vector<2x512xf32>, i32 -> vector<2x512xf32>
    %30 = vector.extract_strided_slice %11 {offsets = [2, 0], sizes = [1, 512], strides = [1, 1]} : vector<9x512xf32> to vector<1x512xf32>
    %31 = vector.broadcast %30 : vector<1x512xf32> to vector<2x512xf32>
    %32 = arith.mulf %29, %31 : vector<2x512xf32>
    %c1_i32 = arith.constant 1 : i32
    %33 = tpu.dynamic_rotate %20 by %c1_i32 dim 1 : vector<2x512xf32>, i32 -> vector<2x512xf32>
    %34 = vector.extract_strided_slice %11 {offsets = [3, 0], sizes = [1, 512], strides = [1, 1]} : vector<9x512xf32> to vector<1x512xf32>
    %35 = vector.broadcast %34 : vector<1x512xf32> to vector<2x512xf32>
    %36 = arith.mulf %33, %35 : vector<2x512xf32>
    %c511_i32 = arith.constant 511 : i32
    %37 = tpu.dynamic_rotate %20 by %c511_i32 dim 1 : vector<2x512xf32>, i32 -> vector<2x512xf32>
    %38 = vector.extract_strided_slice %11 {offsets = [5, 0], sizes = [1, 512], strides = [1, 1]} : vector<9x512xf32> to vector<1x512xf32>
    %39 = vector.broadcast %38 : vector<1x512xf32> to vector<2x512xf32>
    %40 = arith.mulf %37, %39 : vector<2x512xf32>
    %c497_i32 = arith.constant 497 : i32
    %41 = tpu.dynamic_rotate %20 by %c497_i32 dim 1 : vector<2x512xf32>, i32 -> vector<2x512xf32>
    %42 = vector.extract_strided_slice %11 {offsets = [6, 0], sizes = [1, 512], strides = [1, 1]} : vector<9x512xf32> to vector<1x512xf32>
    %43 = vector.broadcast %42 : vector<1x512xf32> to vector<2x512xf32>
    %44 = arith.mulf %41, %43 : vector<2x512xf32>
    %c496_i32 = arith.constant 496 : i32
    %45 = tpu.dynamic_rotate %20 by %c496_i32 dim 1 : vector<2x512xf32>, i32 -> vector<2x512xf32>
    %46 = vector.extract_strided_slice %11 {offsets = [7, 0], sizes = [1, 512], strides = [1, 1]} : vector<9x512xf32> to vector<1x512xf32>
    %47 = vector.broadcast %46 : vector<1x512xf32> to vector<2x512xf32>
    %48 = arith.mulf %45, %47 : vector<2x512xf32>
    %c495_i32 = arith.constant 495 : i32
    %49 = tpu.dynamic_rotate %20 by %c495_i32 dim 1 : vector<2x512xf32>, i32 -> vector<2x512xf32>
    %50 = vector.extract_strided_slice %11 {offsets = [8, 0], sizes = [1, 512], strides = [1, 1]} : vector<9x512xf32> to vector<1x512xf32>
    %51 = vector.broadcast %50 : vector<1x512xf32> to vector<2x512xf32>
    %52 = arith.mulf %49, %51 : vector<2x512xf32>
    %53 = tpu.concatenate %24, %28, %32, %36, %20, %40, %44, %48, %52 in 0 : vector<2x512xf32>, vector<2x512xf32>, vector<2x512xf32>, vector<2x512xf32>, vector<2x512xf32>, vector<2x512xf32>, vector<2x512xf32>, vector<2x512xf32>, vector<2x512xf32> -> vector<18x512xf32>
    %54 = arith.truncf %53 : vector<18x512xf32> to vector<18x512xbf16>
    %c0_11 = arith.constant 0 : index
    %c0_12 = arith.constant 0 : index
    %55 = vector.load %arg5[%c0_11, %c0_12] : memref<8x18xbf16, #tpu.memory_space<vmem>>, vector<8x18xbf16>
    %cst_13 = arith.constant dense<0.000000e+00> : vector<8x512xf32>
    %56 = tpu.matmul %55, %54, %cst_13 {dimension_numbers = #tpu.dot_dimension_numbers<[1], [0], [0], [1], [0, 0, 1, 1], [], []>} : vector<8x18xbf16>, vector<18x512xbf16>, vector<8x512xf32> -> vector<8x512xf32>
    %57 = vector.broadcast %7 : vector<8x1xf32> to vector<8x512xf32>
    %58 = arith.addf %56, %57 : vector<8x512xf32>
    %cst_14 = arith.constant 0.000000e+00 : f32
    %59 = vector.broadcast %cst_14 : f32 to vector<8x512xf32>
    %60 = arith.maximumf %58, %59 : vector<8x512xf32>
    %c0_15 = arith.constant 0 : index
    %c0_16 = arith.constant 0 : index
    %61 = vector.load %arg6[%c0_15, %c0_16] : memref<8x8xbf16, #tpu.memory_space<vmem>>, vector<8x8xbf16>
    %62 = arith.truncf %60 : vector<8x512xf32> to vector<8x512xbf16>
    %cst_17 = arith.constant dense<0.000000e+00> : vector<8x512xf32>
    %63 = tpu.matmul %61, %62, %cst_17 {dimension_numbers = #tpu.dot_dimension_numbers<[1], [0], [0], [1], [0, 0, 1, 1], [], []>} : vector<8x8xbf16>, vector<8x512xbf16>, vector<8x512xf32> -> vector<8x512xf32>
    %64 = vector.broadcast %8 : vector<8x1xf32> to vector<8x512xf32>
    %65 = arith.addf %63, %64 : vector<8x512xf32>
    %cst_18 = arith.constant 0.000000e+00 : f32
    %66 = vector.broadcast %cst_18 : f32 to vector<8x512xf32>
    %67 = arith.maximumf %65, %66 : vector<8x512xf32>
    %c17_i32_19 = arith.constant 17 : i32
    %68 = tpu.dynamic_rotate %67 by %c17_i32_19 dim 1 : vector<8x512xf32>, i32 -> vector<8x512xf32>
    %69 = vector.extract_strided_slice %11 {offsets = [0, 0], sizes = [1, 512], strides = [1, 1]} : vector<9x512xf32> to vector<1x512xf32>
    %70 = vector.broadcast %69 : vector<1x512xf32> to vector<8x512xf32>
    %71 = arith.mulf %68, %70 : vector<8x512xf32>
    %c16_i32_20 = arith.constant 16 : i32
    %72 = tpu.dynamic_rotate %67 by %c16_i32_20 dim 1 : vector<8x512xf32>, i32 -> vector<8x512xf32>
    %73 = vector.extract_strided_slice %11 {offsets = [1, 0], sizes = [1, 512], strides = [1, 1]} : vector<9x512xf32> to vector<1x512xf32>
    %74 = vector.broadcast %73 : vector<1x512xf32> to vector<8x512xf32>
    %75 = arith.mulf %72, %74 : vector<8x512xf32>
    %c15_i32_21 = arith.constant 15 : i32
    %76 = tpu.dynamic_rotate %67 by %c15_i32_21 dim 1 : vector<8x512xf32>, i32 -> vector<8x512xf32>
    %77 = vector.extract_strided_slice %11 {offsets = [2, 0], sizes = [1, 512], strides = [1, 1]} : vector<9x512xf32> to vector<1x512xf32>
    %78 = vector.broadcast %77 : vector<1x512xf32> to vector<8x512xf32>
    %79 = arith.mulf %76, %78 : vector<8x512xf32>
    %c1_i32_22 = arith.constant 1 : i32
    %80 = tpu.dynamic_rotate %67 by %c1_i32_22 dim 1 : vector<8x512xf32>, i32 -> vector<8x512xf32>
    %81 = vector.extract_strided_slice %11 {offsets = [3, 0], sizes = [1, 512], strides = [1, 1]} : vector<9x512xf32> to vector<1x512xf32>
    %82 = vector.broadcast %81 : vector<1x512xf32> to vector<8x512xf32>
    %83 = arith.mulf %80, %82 : vector<8x512xf32>
    %c511_i32_23 = arith.constant 511 : i32
    %84 = tpu.dynamic_rotate %67 by %c511_i32_23 dim 1 : vector<8x512xf32>, i32 -> vector<8x512xf32>
    %85 = vector.extract_strided_slice %11 {offsets = [5, 0], sizes = [1, 512], strides = [1, 1]} : vector<9x512xf32> to vector<1x512xf32>
    %86 = vector.broadcast %85 : vector<1x512xf32> to vector<8x512xf32>
    %87 = arith.mulf %84, %86 : vector<8x512xf32>
    %c497_i32_24 = arith.constant 497 : i32
    %88 = tpu.dynamic_rotate %67 by %c497_i32_24 dim 1 : vector<8x512xf32>, i32 -> vector<8x512xf32>
    %89 = vector.extract_strided_slice %11 {offsets = [6, 0], sizes = [1, 512], strides = [1, 1]} : vector<9x512xf32> to vector<1x512xf32>
    %90 = vector.broadcast %89 : vector<1x512xf32> to vector<8x512xf32>
    %91 = arith.mulf %88, %90 : vector<8x512xf32>
    %c496_i32_25 = arith.constant 496 : i32
    %92 = tpu.dynamic_rotate %67 by %c496_i32_25 dim 1 : vector<8x512xf32>, i32 -> vector<8x512xf32>
    %93 = vector.extract_strided_slice %11 {offsets = [7, 0], sizes = [1, 512], strides = [1, 1]} : vector<9x512xf32> to vector<1x512xf32>
    %94 = vector.broadcast %93 : vector<1x512xf32> to vector<8x512xf32>
    %95 = arith.mulf %92, %94 : vector<8x512xf32>
    %c495_i32_26 = arith.constant 495 : i32
    %96 = tpu.dynamic_rotate %67 by %c495_i32_26 dim 1 : vector<8x512xf32>, i32 -> vector<8x512xf32>
    %97 = vector.extract_strided_slice %11 {offsets = [8, 0], sizes = [1, 512], strides = [1, 1]} : vector<9x512xf32> to vector<1x512xf32>
    %98 = vector.broadcast %97 : vector<1x512xf32> to vector<8x512xf32>
    %99 = arith.mulf %96, %98 : vector<8x512xf32>
    %100 = tpu.concatenate %71, %75, %79, %83, %67, %87, %91, %95, %99 in 0 : vector<8x512xf32>, vector<8x512xf32>, vector<8x512xf32>, vector<8x512xf32>, vector<8x512xf32>, vector<8x512xf32>, vector<8x512xf32>, vector<8x512xf32>, vector<8x512xf32> -> vector<72x512xf32>
    %c0_27 = arith.constant 0 : index
    %c0_28 = arith.constant 0 : index
    %101 = vector.load %arg7[%c0_27, %c0_28] : memref<4x72xf32, #tpu.memory_space<vmem>>, vector<4x72xf32>
    %cst_29 = arith.constant dense<0.000000e+00> : vector<4x512xf32>
    %102 = tpu.matmul %101, %100, %cst_29 {dimension_numbers = #tpu.dot_dimension_numbers<[1], [0], [0], [1], [0, 0, 1, 1], [], []>, precision = #tpu.contract_precision<fp32>} : vector<4x72xf32>, vector<72x512xf32>, vector<4x512xf32> -> vector<4x512xf32>
    %103 = vector.broadcast %9 : vector<4x1xf32> to vector<4x512xf32>
    %104 = arith.addf %102, %103 : vector<4x512xf32>
    %105 = vector.extract_strided_slice %104 {offsets = [0, 0], sizes = [2, 512], strides = [1, 1]} : vector<4x512xf32> to vector<2x512xf32>
    %106 = math.tanh %105 : vector<2x512xf32>
    %107 = vector.broadcast %10 : vector<2x1xf32> to vector<2x512xf32>
    %108 = arith.mulf %107, %106 : vector<2x512xf32>
    %109 = vector.extract_strided_slice %104 {offsets = [2, 0], sizes = [2, 512], strides = [1, 1]} : vector<4x512xf32> to vector<2x512xf32>
    %110 = arith.addf %16, %109 : vector<2x512xf32>
    %111 = math.exp %108 : vector<2x512xf32>
    %112 = arith.mulf %110, %111 : vector<2x512xf32>
    %113 = tpu.concatenate %112, %17 in 0 : vector<2x512xf32>, vector<2x512xf32> -> vector<4x512xf32>
    %114 = vector.extract_strided_slice %108 {offsets = [0, 0], sizes = [2, 256], strides = [1, 1]} : vector<2x512xf32> to vector<2x256xf32>
    %115 = vector.extract_strided_slice %113 {offsets = [0, 0], sizes = [4, 256], strides = [1, 1]} : vector<4x512xf32> to vector<4x256xf32>
    %c0_30 = arith.constant 0 : index
    %c0_31 = arith.constant 0 : index
    %c0_32 = arith.constant 0 : index
    %116 = vector.load %arg8[%c0_30, %c0_31, %c0_32] : memref<2x4x256xf32, #tpu.memory_space<vmem>>, vector<1x4x256xf32>
    %117 = vector.shape_cast %116 : vector<1x4x256xf32> to vector<4x256xf32>
    %118 = vector.shape_cast %115 : vector<4x256xf32> to vector<1x4x256xf32>
    tpu.vector_store %arg8[%c0_30, %c0_31, %c0_32], %118 {strides = array<i32>} : memref<2x4x256xf32, #tpu.memory_space<vmem>>, vector<1x4x256xf32>,
    %cst_33 = arith.constant dense<0.000000e+00> : vector<2xf32>
    %119 = vector.multi_reduction <add>, %114, %cst_33 [1] : vector<2x256xf32> to vector<2xf32>
    %120 = vector.shape_cast %119 : vector<2xf32> to vector<2x1xf32>
    %cst_34 = arith.constant dense<0.000000e+00> : vector<1xf32>
    %121 = vector.multi_reduction <add>, %120, %cst_34 [0] : vector<2x1xf32> to vector<1xf32>
    %122 = vector.shape_cast %121 : vector<1xf32> to vector<1x1xf32>
    %123 = vector.shape_cast %122 : vector<1x1xf32> to vector<1x1xf32>
    %124 = vector.broadcast %123 : vector<1x1xf32> to vector<1x128xf32>
    %125 = vector.extract_strided_slice %108 {offsets = [0, 256], sizes = [2, 256], strides = [1, 1]} : vector<2x512xf32> to vector<2x256xf32>
    %126 = vector.extract_strided_slice %113 {offsets = [0, 256], sizes = [4, 256], strides = [1, 1]} : vector<4x512xf32> to vector<4x256xf32>
    %c1_35 = arith.constant 1 : index
    %c0_36 = arith.constant 0 : index
    %c0_37 = arith.constant 0 : index
    %127 = vector.load %arg8[%c1_35, %c0_36, %c0_37] : memref<2x4x256xf32, #tpu.memory_space<vmem>>, vector<1x4x256xf32>
    %128 = vector.shape_cast %127 : vector<1x4x256xf32> to vector<4x256xf32>
    %129 = vector.shape_cast %126 : vector<4x256xf32> to vector<1x4x256xf32>
    tpu.vector_store %arg8[%c1_35, %c0_36, %c0_37], %129 {strides = array<i32>} : memref<2x4x256xf32, #tpu.memory_space<vmem>>, vector<1x4x256xf32>,
    %cst_38 = arith.constant dense<0.000000e+00> : vector<2xf32>
    %130 = vector.multi_reduction <add>, %125, %cst_38 [1] : vector<2x256xf32> to vector<2xf32>
    %131 = vector.shape_cast %130 : vector<2xf32> to vector<2x1xf32>
    %cst_39 = arith.constant dense<0.000000e+00> : vector<1xf32>
    %132 = vector.multi_reduction <add>, %131, %cst_39 [0] : vector<2x1xf32> to vector<1xf32>
    %133 = vector.shape_cast %132 : vector<1xf32> to vector<1x1xf32>
    %134 = vector.shape_cast %133 : vector<1x1xf32> to vector<1x1xf32>
    %135 = vector.broadcast %134 : vector<1x1xf32> to vector<1x128xf32>
    %136 = tpu.concatenate %124, %135 in 0 : vector<1x128xf32>, vector<1x128xf32> -> vector<2x128xf32>
    %c0_40 = arith.constant 0 : index
    %c0_41 = arith.constant 0 : index
    %c0_42 = arith.constant 0 : index
    %137 = vector.load %arg9[%c0_40, %c0_41, %c0_42] : memref<1x2x128xf32, #tpu.memory_space<vmem>>, vector<1x2x128xf32>
    %138 = vector.shape_cast %137 : vector<1x2x128xf32> to vector<2x128xf32>
    %139 = vector.shape_cast %136 : vector<2x128xf32> to vector<1x2x128xf32>
    tpu.vector_store %arg9[%c0_40, %c0_41, %c0_42], %139 {strides = array<i32>} : memref<1x2x128xf32, #tpu.memory_space<vmem>>, vector<1x2x128xf32>,
    return
  }
  func.func @transform_0(%arg0: i32) -> (i32, i32, i32) {
    %c0_i32 = arith.constant 0 : i32
    %c0_i32_0 = arith.constant 0 : i32
    %c0_i32_1 = arith.constant 0 : i32
    return %arg0, %c0_i32, %c0_i32_0 : i32, i32, i32
  }
  func.func @transform_1(%arg0: i32) -> (i32, i32) {
    %c0_i32 = arith.constant 0 : i32
    %c0_i32_0 = arith.constant 0 : i32
    %c0_i32_1 = arith.constant 0 : i32
    return %c0_i32, %c0_i32_0 : i32, i32
  }
  func.func @transform_2(%arg0: i32) -> (i32, i32) {
    %c0_i32 = arith.constant 0 : i32
    %c0_i32_0 = arith.constant 0 : i32
    %c0_i32_1 = arith.constant 0 : i32
    return %c0_i32, %c0_i32_0 : i32, i32
  }
  func.func @transform_3(%arg0: i32) -> (i32, i32) {
    %c0_i32 = arith.constant 0 : i32
    %c0_i32_0 = arith.constant 0 : i32
    %c0_i32_1 = arith.constant 0 : i32
    return %c0_i32, %c0_i32_0 : i32, i32
  }
  func.func @transform_4(%arg0: i32) -> (i32, i32) {
    %c0_i32 = arith.constant 0 : i32
    %c0_i32_0 = arith.constant 0 : i32
    %c0_i32_1 = arith.constant 0 : i32
    return %c0_i32, %c0_i32_0 : i32, i32
  }
  func.func @transform_5(%arg0: i32) -> (i32, i32) {
    %c0_i32 = arith.constant 0 : i32
    %c0_i32_0 = arith.constant 0 : i32
    %c0_i32_1 = arith.constant 0 : i32
    return %c0_i32, %c0_i32_0 : i32, i32
  }
  func.func @transform_6(%arg0: i32) -> (i32, i32) {
    %c0_i32 = arith.constant 0 : i32
    %c0_i32_0 = arith.constant 0 : i32
    %c0_i32_1 = arith.constant 0 : i32
    return %c0_i32, %c0_i32_0 : i32, i32
  }
  func.func @transform_7(%arg0: i32) -> (i32, i32, i32) {
    %c0_i32 = arith.constant 0 : i32
    %c0_i32_0 = arith.constant 0 : i32
    %c0_i32_1 = arith.constant 0 : i32
    return %arg0, %c0_i32, %c0_i32_0 : i32, i32, i32
  }
  func.func @transform_8(%arg0: i32) -> (i32, i32, i32) {
    %c0_i32 = arith.constant 0 : i32
    %c0_i32_0 = arith.constant 0 : i32
    %c0_i32_1 = arith.constant 0 : i32
    return %arg0, %c0_i32, %c0_i32_0 : i32, i32, i32
  }
}

</mosaic_0001>

<llo_original>
// kernel: custom-call.2
$region0: #{custom-call.2}
  %s0 = inlined_call_operand.vmem [shape: f32[4,4], index: 0, kind: input, shape index: {}]
  %s1 = inlined_call_operand.vmem [shape: f32[4,4], index: 1, kind: output, shape index: {0}]
  %s2 = inlined_call_operand.hbm [shape: s32[4], index: 2, kind: output, shape index: {1}]
  %s3 = inlined_call_operand.hbm [shape: s32[4], index: 3, kind: output, shape index: {2}]
  %4 = xla_tuple %s1, %s2, %s3
  $region1: #{custom-call.2} parent=0
    #allocation0 [shape = 'u8[4096]{0}', space=vmem, size = 0x1000, scoped, tag = 'operand span for operand 0']
    #allocation1 [shape = 'u8[2048]{0}', space=vmem, size = 0x800, scoped, tag = 'packed  for operand 0']
    #allocation2 [shape = 'u8[4096]{0}', space=vmem, size = 0x1000, scoped, tag = 'operand span for operand 1']
    #allocation3 [shape = 'u8[2048]{0}', space=vmem, size = 0x800, scoped, tag = 'packed  for operand 1']
    #allocation4 [shape = 'u8[4096]{0}', space=vmem, size = 0x1000, scoped, tag = 'operand span for operand 2']
    #allocation5 [shape = 'u8[512]{0}', space=vmem, size = 0x400, scoped, tag = 'packed  for operand 2']
    #allocation6 [shape = 's32[1]{0}', space=sflag, size = 0x4, scoped, tag = 'scoped memory for custom-call.2']
    #allocation7 [shape = 'u8[4096]{0}', space=vmem, size = 0x1000, scoped, tag = 'operand span for operand 3']
    #allocation8 [shape = 'u8[512]{0}', space=vmem, size = 0x400, scoped, tag = 'packed  for operand 3']
    #allocation9 [shape = 's32[1]{0}', space=sflag, size = 0x4, scoped, tag = 'scoped memory for custom-call.2']
    #allocation10 [shape = 's32[4,128]{1,0}', space=vmem, size = 0x1000, scoped, tag = 'scratch for permutations']
    %5 = vsyncpa [#allocation6], 0
    %6 = vsyncpa [#allocation9], 0
    %p8 = scmp.gt.s32.totalorder 4, 0
    // Predicated region
    $region2: #{custom-call.2} parent=1 // pred_check
      %p9 = pneg %p8
    $region3: #{custom-call.2} parent=1 // pred_check_branch
      %11 = sbr.rel (%p9) target = $region5
    $region4: #{custom-call.2} parent=1 // pred_region
      %s12 = sshra.s32 4, 3
      %p13 = scmp.gt.s32.totalorder %s12, 0
      // Predicated region
      $region6: #{custom-call.2} parent=4 // pred_check
        %p14 = pneg %p13
      $region7: #{custom-call.2} parent=4 // pred_check_branch
        %16 = sbr.rel (%p14) target = $region9
      $region8: #{custom-call.2} parent=4 // pred_region
        %s17 = ssub.s32 %s12, 1
        %s18 = smul.u32 %s17, 128
        %s19 = sshra.s32 %s18, 4
        %s20 = scalar_lea.vmem %s0, %s19
        %v21 = vld [vmem:[%s0] sm:$0xff]
        // While loop
        $region10: #{custom-call.2} parent=8 // loop_pre_header
          _
        $region11: #{custom-call.2} parent=8 // loop_header
          %s22 = sphi %s0, %s44
          %s23 = sphi [#allocation1], %s45
          %v24 = vphi %v21, %v46
          %s25 = ssub.s32 %s20, 64
          %p26 = scmp.gt.s32.totalorder %s22, %s25
        $region12: #{custom-call.2} parent=8 // loop_header_branch
          %28 = sbr.rel (%p26) target = $region16
        $region13: #{custom-call.2} parent=8 // loop_body
          %29 = vst [vmem:[%s23] sm:$0xff] %v24
          %v30 = vld [vmem:[%s22 + $0x8] sm:$0xff]
          %31 = vst [vmem:[%s23 + $0x8] sm:$0xff] %v30
          %v32 = vld [vmem:[%s22 + $0x10] sm:$0xff]
          %33 = vst [vmem:[%s23 + $0x10] sm:$0xff] %v32
          %v34 = vld [vmem:[%s22 + $0x18] sm:$0xff]
          %35 = vst [vmem:[%s23 + $0x18] sm:$0xff] %v34
          %v36 = vld [vmem:[%s22 + $0x20] sm:$0xff]
          %37 = vst [vmem:[%s23 + $0x20] sm:$0xff] %v36
          %v38 = vld [vmem:[%s22 + $0x28] sm:$0xff]
          %39 = vst [vmem:[%s23 + $0x28] sm:$0xff] %v38
          %v40 = vld [vmem:[%s22 + $0x30] sm:$0xff]
          %41 = vst [vmem:[%s23 + $0x30] sm:$0xff] %v40
          %v42 = vld [vmem:[%s22 + $0x38] sm:$0xff]
          %43 = vst [vmem:[%s23 + $0x38] sm:$0xff] %v42
        $region14: #{custom-call.2} parent=8 // loop_footer
          %s44 = scalar_lea.vmem %s22, 64
          %s45 = scalar_lea.vmem %s23, 64
          %v46 = vld [vmem:[%s22 + $0x40] sm:$0xff]
        $region15: #{custom-call.2} parent=8 // loop_footer_branch
          %47 = sbr.rel target = $region11
        $region16: #{custom-call.2} parent=8 // loop_exit
          _
        // While loop
        $region17: #{custom-call.2} parent=8 // loop_pre_header
          _
        $region18: #{custom-call.2} parent=8 // loop_header
          %s48 = sphi %s22, %s56
          %s49 = sphi %s23, %s57
          %v50 = vphi %v24, %v50
          %p51 = scmp.gt.s32.totalorder %s48, %s20
        $region19: #{custom-call.2} parent=8 // loop_header_branch
          %53 = sbr.rel (%p51) target = $region23
        $region20: #{custom-call.2} parent=8 // loop_body
          %v54 = vld [vmem:[%s48] sm:$0xff]
          %55 = vst [vmem:[%s49] sm:$0xff] %v54
        $region21: #{custom-call.2} parent=8 // loop_footer
          %s56 = scalar_lea.vmem %s48, 8
          %s57 = scalar_lea.vmem %s49, 8
        $region22: #{custom-call.2} parent=8 // loop_footer_branch
          %58 = sbr.rel target = $region18
        $region23: #{custom-call.2} parent=8 // loop_exit
          _
      $region9: #{custom-call.2} parent=4 // pred_fallthru
        _
      %s59 = sand.u32 4, 7
      %s60 = sshll.u32 1, %s59
      %s61 = ssub.s32 %s60, 1
      %s62 = smul.u32 %s12, 128
      %s63 = sshra.s32 %s62, 4
      %s64 = scalar_lea.vmem [#allocation1], %s63
      %s65 = smul.u32 %s12, 128
      %s66 = sshra.s32 %s65, 4
      %s67 = scalar_lea.vmem %s0, %s66
      %v68 = vld [vmem:[%s67] sm:%s61]
      %69 = vst [vmem:[%s64] sm:%s61] %v68
    $region5: #{custom-call.2} parent=1 // pred_fallthru
      _
    %s71 = sshll.u32 1, 4
    %s72 = ssub.s32 %s71, 1
    %v73 = vld [vmem:[#allocation1] sm:%s72]
    %74 = vst [vmem:[#allocation0] sm:%s72] %v73
    %v75 = vld [vmem:[#allocation0] sm:$0xff]
    %76 = vst [vmem:[#allocation2] sm:$0xff] %v75
    %77 = vst [vmem:[#allocation4] sm:$0x1] 0
    %v78 = vlaneseq
    %v79 = vshrl.u32 %v78, 7
    %v80 = vmov %v79
    %82 = vst [vmem:[#allocation10] sm:$0xff] %v80
    loop: start=0, step=1, limit=4
    $region25: #{custom-call.2} parent=1 // loop_pre_header
      _
    $region26: #{custom-call.2} parent=1 // loop_header
      %s84 = sphi 0, %s88
      %p85 = scmp.ge.s32.totalorder %s84, 4
    $region27: #{custom-call.2} parent=1 // loop_header_branch
      %87 = sbr.rel (%p85) target = $region31
    $region28: #{custom-call.2} parent=1 // loop_body
      %v89 = vstv %s84
      %v90 = vlaneseq
      %v91 = vshrl.u32 %v90, 7
      %v92 = vmov %v91
      %v93 = vld [vmem:[#allocation2] sm:$0xff]
      %v94 = vand.u32 2147483647, %v93
      %v96 = vstv %s84
      %vm97 = vcmp.ge.s32.totalorder %v92, %v96
      %vm98 = vcmp.lt.s32.totalorder %v92, 4
      %vm99 = vmand %vm97, %vm98
      %vm100 = vcmp.lt.f32.partialorder -inf, %v94
      %vm101 = vmand %vm99, %vm100
      %v102 = vsel %vm101, %v92, %v89
      %v103 = vsel %vm101, %v94, -inf
      %v104 = vrot.slane %v103, 1
      %v105 = vrot.slane %v102, 1
      %vm106 = vcmp.ge.f32.partialorder %v104, %v103
      %v107 = vsel %vm106, %v104, %v103
      %v108 = vsel %vm106, %v105, %v102
      %v109 = vrot.slane %v104, 1
      %v110 = vrot.slane %v105, 1
      %vm111 = vcmp.ge.f32.partialorder %v109, %v107
      %v112 = vsel %vm111, %v109, %v107
      %v113 = vsel %vm111, %v110, %v108
      %v114 = vrot.slane %v109, 1
      %v115 = vrot.slane %v110, 1
      %vm116 = vcmp.ge.f32.partialorder %v114, %v112
      %v117 = vsel %vm116, %v114, %v112
      %v118 = vsel %vm116, %v115, %v113
      %v119 = vrot.slane %v114, 1
      %v120 = vrot.slane %v115, 1
      %vm121 = vcmp.ge.f32.partialorder %v119, %v117
      %v122 = vsel %vm121, %v119, %v117
      %v123 = vsel %vm121, %v120, %v118
      %v124 = vrot.slane %v119, 1
      %v125 = vrot.slane %v120, 1
      %vm126 = vcmp.ge.f32.partialorder %v124, %v122
      %v127 = vsel %vm126, %v124, %v122
      %v128 = vsel %vm126, %v125, %v123
      %v129 = vrot.slane %v124, 1
      %v130 = vrot.slane %v125, 1
      %vm131 = vcmp.ge.f32.partialorder %v129, %v127
      %v132 = vsel %vm131, %v129, %v127
      %v133 = vsel %vm131, %v130, %v128
      %v134 = vrot.slane %v129, 1
      %v135 = vrot.slane %v130, 1
      %vm136 = vcmp.ge.f32.partialorder %v134, %v132
      %v137 = vsel %vm136, %v134, %v132
      %v138 = vsel %vm136, %v135, %v133
      %s139 = ssub.s32 128, %s84
      %140 = vrot.lane.b32.xlu0 %v138, %s139
      %v141 = vpop.permute.xlu0 %140
      %s142 = vtos %v141
      %v143 = vstv %s84
      %v144 = vlaneseq
      %v145 = vand.u32 %v144, 127
      %vm146 = vcmp.eq.s32.totalorder %v145, %v143
      %v147 = vstv %s142
      %v148 = vld [vmem:[#allocation4] ss:$0 sm:$0xff]
      %v149 = vsel %vm146, %v147, %v148
      %150 = vst [vmem:[#allocation4] sm:$0x1] %v149
      %s151 = scalar_lea.vmem [#allocation2], %s84
      %s152 = scalar_lea.vmem [#allocation2], %s142
      %v153 = vld [vmem:[%s151] ss:$0 sm:$0xff]
      %v154 = vld [vmem:[%s152] ss:$0 sm:$0xff]
      %155 = vst [vmem:[%s152] sm:$0x1] %v153
      %156 = vst [vmem:[%s151] sm:$0x1] %v154
      %s157 = scalar_lea.vmem [#allocation10], %s84
      %s158 = scalar_lea.vmem [#allocation10], %s142
      %v159 = vld [vmem:[%s157] ss:$0 sm:$0xff]
      %v160 = vld [vmem:[%s158] ss:$0 sm:$0xff]
      %161 = vst [vmem:[%s158] sm:$0x1] %v159
      %162 = vst [vmem:[%s157] sm:$0x1] %v160
      %vm163 = vcmp.ne.f32.partialorder %v154, 0.0
      %vm164 = vmand %vm146, %vm163
      %v165 = vsel %vm164, %v154, 1.0
      %v166 = vlaneseq
      %v167 = vand.u32 %v166, 127
      %v168 = vstv %s84
      %vm169 = vcmp.gt.s32.totalorder %v167, %v168
      %v170 = vsel %vm169, %v154, 0.0
      %v171 = vlaneseq
      %v172 = vshrl.u32 %v171, 7
      %v173 = vmov %v172
      %v174 = vld [vmem:[#allocation2] sm:$0xff]
      %v176 = vstv %s84
      %vm177 = vcmp.gt.s32.totalorder %v173, %v176
      %v178 = vsel %vm177, %v165, 1.0
      %v179 = vrcp.pop %v178
      %v180 = vmul.f32 %v174, %v179
      %vm181 = vmand %vm177, %vm146
      %v182 = vsel %vm181, %v180, 0.0
      %183 = vadd.xlane.f32.xlu0 %v182
      %v184 = vpop.xlane.xlu0 %183
      %v185 = vmul.f32 %v184, %v170
      %v186 = vsub.f32 %v180, %v185
      %187 = vst [vmem:[#allocation2] sm:$0xff] %v186
    $region29: #{custom-call.2} parent=1 // loop_footer
      %s88 = sadd.s32 1, %s84
    $region30: #{custom-call.2} parent=1 // loop_footer_branch
      %83 = sbr.rel target = $region26
    $region31: #{custom-call.2} parent=1 // loop_exit
      _
    %v188 = vld [vmem:[#allocation10] sm:$0xff]
    %s189 = scalar_lea.vmem [#allocation10], 8
    %s190 = scalar_lea.vmem [#allocation10], 16
    %s191 = scalar_lea.vmem [#allocation10], 24
    %s192 = scalar_lea.vmem [#allocation10], 32
    %s193 = scalar_lea.vmem [#allocation10], 40
    %s194 = scalar_lea.vmem [#allocation10], 48
    %s195 = scalar_lea.vmem [#allocation10], 56
    %s196 = scalar_lea.vmem [#allocation10], 64
    %s197 = scalar_lea.vmem [#allocation10], 72
    %s198 = scalar_lea.vmem [#allocation10], 80
    %s199 = scalar_lea.vmem [#allocation10], 88
    %s200 = scalar_lea.vmem [#allocation10], 96
    %s201 = scalar_lea.vmem [#allocation10], 104
    %s202 = scalar_lea.vmem [#allocation10], 112
    %s203 = scalar_lea.vmem [#allocation10], 120
    %204 = vxpose.xlu0.b32.start [1/16] %v188, 128
    %205 = vxpose.xlu0.b32.cont [2/16] 0, 128
    %206 = vxpose.xlu0.b32.cont [3/16] 0, 128
    %207 = vxpose.xlu0.b32.cont [4/16] 0, 128
    %208 = vxpose.xlu0.b32.cont [5/16] 0, 128
    %209 = vxpose.xlu0.b32.cont [6/16] 0, 128
    %210 = vxpose.xlu0.b32.cont [7/16] 0, 128
    %211 = vxpose.xlu0.b32.cont [8/16] 0, 128
    %212 = vxpose.xlu0.b32.cont [9/16] 0, 128
    %213 = vxpose.xlu0.b32.cont [10/16] 0, 128
    %214 = vxpose.xlu0.b32.cont [11/16] 0, 128
    %215 = vxpose.xlu0.b32.cont [12/16] 0, 128
    %216 = vxpose.xlu0.b32.cont [13/16] 0, 128
    %217 = vxpose.xlu0.b32.cont [14/16] 0, 128
    %218 = vxpose.xlu0.b32.cont [15/16] 0, 128
    %219 = vxpose.xlu0.b32.end [16/16] 0, 128
    %v220 = vpop.trf.xlu0
    %v221 = vpop.trf.xlu0
    %v222 = vpop.trf.xlu0
    %v223 = vpop.trf.xlu0
    %v224 = vpop.trf.xlu0
    %v225 = vpop.trf.xlu0
    %v226 = vpop.trf.xlu0
    %v227 = vpop.trf.xlu0
    %v228 = vpop.trf.xlu0
    %v229 = vpop.trf.xlu0
    %v230 = vpop.trf.xlu0
    %v231 = vpop.trf.xlu0
    %v232 = vpop.trf.xlu0
    %v233 = vpop.trf.xlu0
    %v234 = vpop.trf.xlu0
    %v235 = vpop.trf.xlu0
    %236 = vst [vmem:[#allocation7] sm:$0x1] %v220
    %s238 = sshll.u32 1, 4
    %s239 = ssub.s32 %s238, 1
    %v241 = vld [vmem:[#allocation2] sm:%s239]
    %s242 = sshll.u32 1, 4
    %s243 = ssub.s32 %s242, 1
    %244 = vst [vmem:[#allocation3] sm:%s243] %v241
    %s246 = sshll.u32 1, 1
    %s247 = ssub.s32 %s246, 1
    %v249 = vld [vmem:[#allocation4] sm:%s247]
    %s250 = sshll.u32 1, 1
    %s251 = ssub.s32 %s250, 1
    %252 = vst [vmem:[#allocation5] sm:%s251] %v249
    %s254 = sshll.u32 1, 1
    %s255 = ssub.s32 %s254, 1
    %v257 = vld [vmem:[#allocation7] sm:%s255]
    %s258 = sshll.u32 1, 1
    %s259 = ssub.s32 %s258, 1
    %260 = vst [vmem:[#allocation8] sm:%s259] %v257
    %p262 = scmp.gt.s32.totalorder 4, 0
    // Predicated region
    $region32: #{custom-call.2} parent=1 // pred_check
      %p263 = pneg %p262
    $region33: #{custom-call.2} parent=1 // pred_check_branch
      %265 = sbr.rel (%p263) target = $region35
    $region34: #{custom-call.2} parent=1 // pred_region
      %s266 = sshra.s32 4, 3
      %p267 = scmp.gt.s32.totalorder %s266, 0
      // Predicated region
      $region36: #{custom-call.2} parent=34 // pred_check
        %p268 = pneg %p267
      $region37: #{custom-call.2} parent=34 // pred_check_branch
        %270 = sbr.rel (%p268) target = $region39
      $region38: #{custom-call.2} parent=34 // pred_region
        %s271 = ssub.s32 %s266, 1
        %s272 = smul.u32 %s271, 128
        %s273 = sshra.s32 %s272, 4
        %s274 = scalar_lea.vmem [#allocation3], %s273
        %v275 = vld [vmem:[#allocation3] sm:$0xff]
        // While loop
        $region40: #{custom-call.2} parent=38 // loop_pre_header
          _
        $region41: #{custom-call.2} parent=38 // loop_header
          %s276 = sphi [#allocation3], %s298
          %s277 = sphi %s1, %s299
          %v278 = vphi %v275, %v300
          %s279 = ssub.s32 %s274, 64
          %p280 = scmp.gt.s32.totalorder %s276, %s279
        $region42: #{custom-call.2} parent=38 // loop_header_branch
          %282 = sbr.rel (%p280) target = $region46
        $region43: #{custom-call.2} parent=38 // loop_body
          %283 = vst [vmem:[%s277] sm:$0xff] %v278
          %v284 = vld [vmem:[%s276 + $0x8] sm:$0xff]
          %285 = vst [vmem:[%s277 + $0x8] sm:$0xff] %v284
          %v286 = vld [vmem:[%s276 + $0x10] sm:$0xff]
          %287 = vst [vmem:[%s277 + $0x10] sm:$0xff] %v286
          %v288 = vld [vmem:[%s276 + $0x18] sm:$0xff]
          %289 = vst [vmem:[%s277 + $0x18] sm:$0xff] %v288
          %v290 = vld [vmem:[%s276 + $0x20] sm:$0xff]
          %291 = vst [vmem:[%s277 + $0x20] sm:$0xff] %v290
          %v292 = vld [vmem:[%s276 + $0x28] sm:$0xff]
          %293 = vst [vmem:[%s277 + $0x28] sm:$0xff] %v292
          %v294 = vld [vmem:[%s276 + $0x30] sm:$0xff]
          %295 = vst [vmem:[%s277 + $0x30] sm:$0xff] %v294
          %v296 = vld [vmem:[%s276 + $0x38] sm:$0xff]
          %297 = vst [vmem:[%s277 + $0x38] sm:$0xff] %v296
        $region44: #{custom-call.2} parent=38 // loop_footer
          %s298 = scalar_lea.vmem %s276, 64
          %s299 = scalar_lea.vmem %s277, 64
          %v300 = vld [vmem:[%s276 + $0x40] sm:$0xff]
        $region45: #{custom-call.2} parent=38 // loop_footer_branch
          %301 = sbr.rel target = $region41
        $region46: #{custom-call.2} parent=38 // loop_exit
          _
        // While loop
        $region47: #{custom-call.2} parent=38 // loop_pre_header
          _
        $region48: #{custom-call.2} parent=38 // loop_header
          %s302 = sphi %s276, %s310
          %s303 = sphi %s277, %s311
          %v304 = vphi %v278, %v304
          %p305 = scmp.gt.s32.totalorder %s302, %s274
        $region49: #{custom-call.2} parent=38 // loop_header_branch
          %307 = sbr.rel (%p305) target = $region53
        $region50: #{custom-call.2} parent=38 // loop_body
          %v308 = vld [vmem:[%s302] sm:$0xff]
          %309 = vst [vmem:[%s303] sm:$0xff] %v308
        $region51: #{custom-call.2} parent=38 // loop_footer
          %s310 = scalar_lea.vmem %s302, 8
          %s311 = scalar_lea.vmem %s303, 8
        $region52: #{custom-call.2} parent=38 // loop_footer_branch
          %312 = sbr.rel target = $region48
        $region53: #{custom-call.2} parent=38 // loop_exit
          _
      $region39: #{custom-call.2} parent=34 // pred_fallthru
        _
      %s313 = sand.u32 4, 7
      %s314 = sshll.u32 1, %s313
      %s315 = ssub.s32 %s314, 1
      %s316 = smul.u32 %s266, 128
      %s317 = sshra.s32 %s316, 4
      %s318 = scalar_lea.vmem %s1, %s317
      %s319 = smul.u32 %s266, 128
      %s320 = sshra.s32 %s319, 4
      %s321 = scalar_lea.vmem [#allocation3], %s320
      %v322 = vld [vmem:[%s321] sm:%s315]
      %323 = vst [vmem:[%s318] sm:%s315] %v322
    $region35: #{custom-call.2} parent=1 // pred_fallthru
      _
    // Predicated region
    $region54: #{custom-call.2} parent=1 // pred_check
      _
    $region55: #{custom-call.2} parent=1 // pred_check_branch
      %325 = sbr.rel (0) target = $region57
    $region56: #{custom-call.2} parent=1 // pred_region
      %s327 = ssub.s32 16, 16
      %328 = vsyncadd [#allocation6], %s327
      %s329 = sshll.u32 [#allocation5], 4
      %s330 = int_to_ptr.vmem [resolvable:$true] %s329
      %332 = dma.vmem_to_hbm [thread:$0]  %s330, 16, %s2, [#allocation6]
    $region57: #{custom-call.2} parent=1 // pred_fallthru
      _
    // Predicated region
    $region58: #{custom-call.2} parent=1 // pred_check
      _
    $region59: #{custom-call.2} parent=1 // pred_check_branch
      %334 = sbr.rel (0) target = $region61
    $region60: #{custom-call.2} parent=1 // pred_region
      %s336 = ssub.s32 16, 16
      %337 = vsyncadd [#allocation9], %s336
      %s338 = sshll.u32 [#allocation8], 4
      %s339 = int_to_ptr.vmem [resolvable:$true] %s338
      %341 = dma.vmem_to_hbm [thread:$0]  %s339, 16, %s3, [#allocation9]
    $region61: #{custom-call.2} parent=1 // pred_fallthru
      _
    // Predicated region
    $region62: #{custom-call.2} parent=1 // pred_check
      _
    $region63: #{custom-call.2} parent=1 // pred_check_branch
      %343 = sbr.rel (0) target = $region65
    $region64: #{custom-call.2} parent=1 // pred_region
      %344 = dma.done [#allocation6], 16
    $region65: #{custom-call.2} parent=1 // pred_fallthru
      _
    // Predicated region
    $region66: #{custom-call.2} parent=1 // pred_check
      _
    $region67: #{custom-call.2} parent=1 // pred_check_branch
      %346 = sbr.rel (0) target = $region69
    $region68: #{custom-call.2} parent=1 // pred_region
      %347 = dma.done [#allocation9], 16
    $region69: #{custom-call.2} parent=1 // pred_fallthru
      _
    %348 = vsyncpa [#allocation6], 1
    %349 = vsyncpa [#allocation9], 1

// kernel: flow_step_forward.1
$region0: #{flow_step_forward.1}
  #allocation0 [shape = 'u32[]', space=smem, size = 0x4, offset = 0x4, fixed_abs, tag = 'smem constant byte address 0x4 - core index']
  #allocation1 [shape = 'u32[144,128]{1,0:T(1,128)}', space=vmem, size = 0x12000, scoped, tag = 'internal scratch']
  %s0 = inlined_call_operand.vmem [shape: f32[4,4,256], index: 0, kind: input, shape index: {}]
  %s1 = inlined_call_operand.vmem [shape: f32[6,4], index: 1, kind: input, shape index: {}]
  %s2 = inlined_call_operand.vmem [shape: f32[40,1], index: 2, kind: input, shape index: {}]
  %s3 = inlined_call_operand.vmem [shape: f32[9,512], index: 3, kind: input, shape index: {}]
  %s4 = inlined_call_operand.vmem [shape: bf16[8,18], index: 4, kind: input, shape index: {}]
  %s5 = inlined_call_operand.vmem [shape: bf16[8,8], index: 5, kind: input, shape index: {}]
  %s6 = inlined_call_operand.vmem [shape: f32[4,72], index: 6, kind: input, shape index: {}]
  %s7 = inlined_call_operand.vmem [shape: f32[4,4,256], index: 7, kind: output, shape index: {0}]
  %s8 = inlined_call_operand.vmem [shape: f32[2,2,128], index: 8, kind: output, shape index: {1}]
  %9 = xla_tuple %s7, %s8
  %s10 = sld [smem:[#allocation0]]
  $region69: #{flow_step_forward.1} parent=0
    _
  %s12 = ssub.s32 1, %s10
  %s13 = scalar_select 0, %s12, %s10
  loop: start=0, step=1, limit=4
  $region2: #{flow_step_forward.1} parent=0 // loop_pre_header
    _
  $region3: #{flow_step_forward.1} parent=0 // loop_header
    %s15 = sphi 0, %s19
    %p16 = scmp.ge.s32.totalorder %s15, 4
    %s25 = sphi 0, %s27
    %s28 = sphi 0, %s25
    %s29 = sphi 0, %s28
    %s45 = sphi 0, %s29
    %s49 = sphi 0, %s49
    %s51 = sphi 0, %s49
    %s52 = sphi 0, %s51
    %s66 = sphi 0, %s52
    %s70 = sphi 0, %s70
    %s72 = sphi 0, %s70
    %s73 = sphi 0, %s72
    %s87 = sphi 0, %s73
    %s91 = sphi 0, %s91
    %s93 = sphi 0, %s91
    %s94 = sphi 0, %s93
    %s108 = sphi 0, %s94
    %s112 = sphi 0, %s112
    %s114 = sphi 0, %s112
    %s115 = sphi 0, %s114
    %s129 = sphi 0, %s115
    %s133 = sphi 0, %s133
    %s135 = sphi 0, %s133
    %s136 = sphi 0, %s135
    %s150 = sphi 0, %s136
    %s154 = sphi 0, %s154
    %s156 = sphi 0, %s154
    %s157 = sphi 0, %s156
    %s171 = sphi 0, %s157
    %s177 = sphi 0, %s179
    %s180 = sphi 0, %s177
    %s181 = sphi 0, %s180
    %s197 = sphi 0, %s181
    %s203 = sphi 0, %s205
    %s206 = sphi 0, %s203
    %s207 = sphi 0, %s206
    %s223 = sphi 0, %s207
  $region4: #{flow_step_forward.1} parent=0 // loop_header_branch
    %18 = sbr.rel (%p16) target = $region8
  $region5: #{flow_step_forward.1} parent=0 // loop_body
    %s20 = ssub.s32 %s15, 1
    %s21 = ssub.s32 %s15, 2
    %s22 = sadd.s32 %s15, 1
    %s23 = ssub.s32 %s15, %s22
    %p24 = scmp.eq.s32.totalorder %s23, 0
    %s26 = sadd.s32 %s25, 1
    %s27 = scalar_select %p24, %s25, %s26
    %p30 = pneg %p24
    %p31 = scmp.eq.s32.totalorder %s15, 1
    %p32 = por %p30, %p31
    %p33 = scmp.ne.s32.totalorder %s25, %s28
    %p34 = scmp.eq.s32.totalorder %s15, 0
    %p35 = por %p33, %p34
    %p36 = scmp.ne.s32.totalorder %s25, %s28
    %p37 = scmp.eq.s32.totalorder %s20, 1
    %p38 = por %p36, %p37
    %p39 = scmp.ne.s32.totalorder %s28, %s29
    %p40 = scmp.eq.s32.totalorder %s20, 0
    %p41 = por %p39, %p40
    %p42 = scmp.ne.s32.totalorder %s28, %s29
    %p43 = scmp.eq.s32.totalorder %s21, 1
    %p44 = por %p42, %p43
    %p46 = scmp.ne.s32.totalorder %s29, %s45
    %p47 = scmp.eq.s32.totalorder %s21, 0
    %p48 = por %p46, %p47
    %s50 = sadd.s32 %s49, 1
    %p53 = scmp.eq.s32.totalorder %s15, 1
    %p54 = scmp.ne.s32.totalorder %s49, %s51
    %p55 = scmp.eq.s32.totalorder %s15, 0
    %p56 = por %p54, %p55
    %p57 = scmp.ne.s32.totalorder %s49, %s51
    %p58 = scmp.eq.s32.totalorder %s20, 1
    %p59 = por %p57, %p58
    %p60 = scmp.ne.s32.totalorder %s51, %s52
    %p61 = scmp.eq.s32.totalorder %s20, 0
    %p62 = por %p60, %p61
    %p63 = scmp.ne.s32.totalorder %s51, %s52
    %p64 = scmp.eq.s32.totalorder %s21, 1
    %p65 = por %p63, %p64
    %p67 = scmp.ne.s32.totalorder %s52, %s66
    %p68 = scmp.eq.s32.totalorder %s21, 0
    %p69 = por %p67, %p68
    %s71 = sadd.s32 %s70, 1
    %p74 = scmp.eq.s32.totalorder %s15, 1
    %p75 = scmp.ne.s32.totalorder %s70, %s72
    %p76 = scmp.eq.s32.totalorder %s15, 0
    %p77 = por %p75, %p76
    %p78 = scmp.ne.s32.totalorder %s70, %s72
    %p79 = scmp.eq.s32.totalorder %s20, 1
    %p80 = por %p78, %p79
    %p81 = scmp.ne.s32.totalorder %s72, %s73
    %p82 = scmp.eq.s32.totalorder %s20, 0
    %p83 = por %p81, %p82
    %p84 = scmp.ne.s32.totalorder %s72, %s73
    %p85 = scmp.eq.s32.totalorder %s21, 1
    %p86 = por %p84, %p85
    %p88 = scmp.ne.s32.totalorder %s73, %s87
    %p89 = scmp.eq.s32.totalorder %s21, 0
    %p90 = por %p88, %p89
    %s92 = sadd.s32 %s91, 1
    %p95 = scmp.eq.s32.totalorder %s15, 1
    %p96 = scmp.ne.s32.totalorder %s91, %s93
    %p97 = scmp.eq.s32.totalorder %s15, 0
    %p98 = por %p96, %p97
    %p99 = scmp.ne.s32.totalorder %s91, %s93
    %p100 = scmp.eq.s32.totalorder %s20, 1
    %p101 = por %p99, %p100
    %p102 = scmp.ne.s32.totalorder %s93, %s94
    %p103 = scmp.eq.s32.totalorder %s20, 0
    %p104 = por %p102, %p103
    %p105 = scmp.ne.s32.totalorder %s93, %s94
    %p106 = scmp.eq.s32.totalorder %s21, 1
    %p107 = por %p105, %p106
    %p109 = scmp.ne.s32.totalorder %s94, %s108
    %p110 = scmp.eq.s32.totalorder %s21, 0
    %p111 = por %p109, %p110
    %s113 = sadd.s32 %s112, 1
    %p116 = scmp.eq.s32.totalorder %s15, 1
    %p117 = scmp.ne.s32.totalorder %s112, %s114
    %p118 = scmp.eq.s32.totalorder %s15, 0
    %p119 = por %p117, %p118
    %p120 = scmp.ne.s32.totalorder %s112, %s114
    %p121 = scmp.eq.s32.totalorder %s20, 1
    %p122 = por %p120, %p121
    %p123 = scmp.ne.s32.totalorder %s114, %s115
    %p124 = scmp.eq.s32.totalorder %s20, 0
    %p125 = por %p123, %p124
    %p126 = scmp.ne.s32.totalorder %s114, %s115
    %p127 = scmp.eq.s32.totalorder %s21, 1
    %p128 = por %p126, %p127
    %p130 = scmp.ne.s32.totalorder %s115, %s129
    %p131 = scmp.eq.s32.totalorder %s21, 0
    %p132 = por %p130, %p131
    %s134 = sadd.s32 %s133, 1
    %p137 = scmp.eq.s32.totalorder %s15, 1
    %p138 = scmp.ne.s32.totalorder %s133, %s135
    %p139 = scmp.eq.s32.totalorder %s15, 0
    %p140 = por %p138, %p139
    %p141 = scmp.ne.s32.totalorder %s133, %s135
    %p142 = scmp.eq.s32.totalorder %s20, 1
    %p143 = por %p141, %p142
    %p144 = scmp.ne.s32.totalorder %s135, %s136
    %p145 = scmp.eq.s32.totalorder %s20, 0
    %p146 = por %p144, %p145
    %p147 = scmp.ne.s32.totalorder %s135, %s136
    %p148 = scmp.eq.s32.totalorder %s21, 1
    %p149 = por %p147, %p148
    %p151 = scmp.ne.s32.totalorder %s136, %s150
    %p152 = scmp.eq.s32.totalorder %s21, 0
    %p153 = por %p151, %p152
    %s155 = sadd.s32 %s154, 1
    %p158 = scmp.eq.s32.totalorder %s15, 1
    %p159 = scmp.ne.s32.totalorder %s154, %s156
    %p160 = scmp.eq.s32.totalorder %s15, 0
    %p161 = por %p159, %p160
    %p162 = scmp.ne.s32.totalorder %s154, %s156
    %p163 = scmp.eq.s32.totalorder %s20, 1
    %p164 = por %p162, %p163
    %p165 = scmp.ne.s32.totalorder %s156, %s157
    %p166 = scmp.eq.s32.totalorder %s20, 0
    %p167 = por %p165, %p166
    %p168 = scmp.ne.s32.totalorder %s156, %s157
    %p169 = scmp.eq.s32.totalorder %s21, 1
    %p170 = por %p168, %p169
    %p172 = scmp.ne.s32.totalorder %s157, %s171
    %p173 = scmp.eq.s32.totalorder %s21, 0
    %p174 = por %p172, %p173
    %s175 = ssub.s32 %s15, %s22
    %p176 = scmp.eq.s32.totalorder %s175, 0
    %s178 = sadd.s32 %s177, 1
    %s179 = scalar_select %p176, %s177, %s178
    %p182 = pneg %p176
    %p183 = scmp.eq.s32.totalorder %s15, 1
    %p184 = por %p182, %p183
    %p185 = scmp.ne.s32.totalorder %s177, %s180
    %p186 = scmp.eq.s32.totalorder %s15, 0
    %p187 = por %p185, %p186
    %p188 = scmp.ne.s32.totalorder %s177, %s180
    %p189 = scmp.eq.s32.totalorder %s20, 1
    %p190 = por %p188, %p189
    %p191 = scmp.ne.s32.totalorder %s180, %s181
    %p192 = scmp.eq.s32.totalorder %s20, 0
    %p193 = por %p191, %p192
    %p194 = scmp.ne.s32.totalorder %s180, %s181
    %p195 = scmp.eq.s32.totalorder %s21, 1
    %p196 = por %p194, %p195
    %p198 = scmp.ne.s32.totalorder %s181, %s197
    %p199 = scmp.eq.s32.totalorder %s21, 0
    %p200 = por %p198, %p199
    %s201 = ssub.s32 %s15, %s22
    %p202 = scmp.eq.s32.totalorder %s201, 0
    %s204 = sadd.s32 %s203, 1
    %s205 = scalar_select %p202, %s203, %s204
    %p208 = pneg %p202
    %p209 = scmp.eq.s32.totalorder %s15, 1
    %p210 = por %p208, %p209
    %p211 = scmp.ne.s32.totalorder %s203, %s206
    %p212 = scmp.eq.s32.totalorder %s15, 0
    %p213 = por %p211, %p212
    %p214 = scmp.ne.s32.totalorder %s203, %s206
    %p215 = scmp.eq.s32.totalorder %s20, 1
    %p216 = por %p214, %p215
    %p217 = scmp.ne.s32.totalorder %s206, %s207
    %p218 = scmp.eq.s32.totalorder %s20, 0
    %p219 = por %p217, %p218
    %p220 = scmp.ne.s32.totalorder %s206, %s207
    %p221 = scmp.eq.s32.totalorder %s21, 1
    %p222 = por %p220, %p221
    %p224 = scmp.ne.s32.totalorder %s207, %s223
    %p225 = scmp.eq.s32.totalorder %s21, 0
    %p226 = por %p224, %p225
    %p227 = scmp.le.s32.totalorder 1, %s15
    %p228 = scmp.lt.s32.totalorder %s15, 3
    %p229 = pnand %p227, %p228
    %p230 = pneg %p229
    // Predicated region
    $region9: #{flow_step_forward.1} parent=5 // pred_check
      _
    $region10: #{flow_step_forward.1} parent=5 // pred_check_branch
      %232 = sbr.rel (%p229) target = $region12
    $region11: #{flow_step_forward.1} parent=5 // pred_region
      %s233 = ssub.s32 %s15, 1
      // Predicated region
      $region13: #{flow_step_forward.1} parent=11 // pred_check
        %p234 = pneg %p62
      $region14: #{flow_step_forward.1} parent=11 // pred_check_branch
        %236 = sbr.rel (%p234) target = $region16
      $region15: #{flow_step_forward.1} parent=11 // pred_region
        _
      $region16: #{flow_step_forward.1} parent=11 // pred_fallthru
        _
      // Predicated region
      $region17: #{flow_step_forward.1} parent=11 // pred_check
        %p237 = pneg %p83
      $region18: #{flow_step_forward.1} parent=11 // pred_check_branch
        %239 = sbr.rel (%p237) target = $region20
      $region19: #{flow_step_forward.1} parent=11 // pred_region
        _
      $region20: #{flow_step_forward.1} parent=11 // pred_fallthru
        _
      // Predicated region
      $region21: #{flow_step_forward.1} parent=11 // pred_check
        %p240 = pneg %p104
      $region22: #{flow_step_forward.1} parent=11 // pred_check_branch
        %242 = sbr.rel (%p240) target = $region24
      $region23: #{flow_step_forward.1} parent=11 // pred_region
        _
      $region24: #{flow_step_forward.1} parent=11 // pred_fallthru
        _
      // Predicated region
      $region25: #{flow_step_forward.1} parent=11 // pred_check
        %p243 = pneg %p125
      $region26: #{flow_step_forward.1} parent=11 // pred_check_branch
        %245 = sbr.rel (%p243) target = $region28
      $region27: #{flow_step_forward.1} parent=11 // pred_region
        _
      $region28: #{flow_step_forward.1} parent=11 // pred_fallthru
        _
      // Predicated region
      $region29: #{flow_step_forward.1} parent=11 // pred_check
        %p246 = pneg %p146
      $region30: #{flow_step_forward.1} parent=11 // pred_check_branch
        %248 = sbr.rel (%p246) target = $region32
      $region31: #{flow_step_forward.1} parent=11 // pred_region
        _
      $region32: #{flow_step_forward.1} parent=11 // pred_fallthru
        _
      // Predicated region
      $region33: #{flow_step_forward.1} parent=11 // pred_check
        %p249 = pneg %p167
      $region34: #{flow_step_forward.1} parent=11 // pred_check_branch
        %251 = sbr.rel (%p249) target = $region36
      $region35: #{flow_step_forward.1} parent=11 // pred_region
        _
      $region36: #{flow_step_forward.1} parent=11 // pred_fallthru
        _
    $region12: #{flow_step_forward.1} parent=5 // pred_fallthru
      _
    %p252 = scmp.lt.s32.totalorder %s15, 2
    // Predicated region
    $region37: #{flow_step_forward.1} parent=5 // pred_check
      %p253 = pneg %p252
    $region38: #{flow_step_forward.1} parent=5 // pred_check_branch
      %255 = sbr.rel (%p253) target = $region40
    $region39: #{flow_step_forward.1} parent=5 // pred_region
      // Predicated region
      $region41: #{flow_step_forward.1} parent=39 // pred_check
        %p256 = pneg %p35
      $region42: #{flow_step_forward.1} parent=39 // pred_check_branch
        %258 = sbr.rel (%p256) target = $region44
      $region43: #{flow_step_forward.1} parent=39 // pred_region
        %s259 = smul.u32 2, %s15
        %p260 = scmp.lt.s32.totalorder %s259, 3
        %s261 = scalar_select %p260, %s259, 3
        %s262 = smul.addr %s261, 2
        %s263 = smul.addr %s262, 4
        %s264 = scalar_lea.vmem %s0, %s263
        %s265 = smul.u32 2, %s15
      $region44: #{flow_step_forward.1} parent=39 // pred_fallthru
        _
    $region40: #{flow_step_forward.1} parent=5 // pred_fallthru
      _
    %p266 = scmp.le.s32.totalorder 1, %s15
    %p267 = scmp.lt.s32.totalorder %s15, 3
    %p268 = pnand %p266, %p267
    %p269 = pneg %p268
    // Predicated region
    $region45: #{flow_step_forward.1} parent=5 // pred_check
      _
    $region46: #{flow_step_forward.1} parent=5 // pred_check_branch
      %271 = sbr.rel (%p268) target = $region48
    $region47: #{flow_step_forward.1} parent=5 // pred_region
      %s272 = ssub.s32 %s15, 1
      %s273 = smul.u32 2, %s20
      %p274 = scmp.lt.s32.totalorder %s273, 3
      %s275 = scalar_select %p274, %s273, 3
      %s276 = smul.addr %s275, 2
      %s277 = smul.addr %s276, 4
      %s278 = scalar_lea.vmem %s0, %s277
      %p279 = pneg %p41
      %p280 = pneg %p38
      %p281 = pneg %p62
      %p282 = pneg %p59
      %p283 = pneg %p83
      %p284 = pneg %p80
      %p285 = pneg %p104
      %p286 = pneg %p101
      %p287 = pneg %p125
      %p288 = pneg %p122
      %p289 = pneg %p146
      %p290 = pneg %p143
      %p291 = pneg %p167
      %p292 = pneg %p164
      %p293 = pneg %p193
      %p294 = pneg %p190
      %s295 = smul.u32 2, %s20
      %p296 = scmp.lt.s32.totalorder %s295, 3
      %s297 = scalar_select %p296, %s295, 3
      %s298 = smul.addr %s297, 2
      %s299 = smul.addr %s298, 4
      %s300 = scalar_lea.vmem %s7, %s299
      %p301 = pneg %p219
      %p302 = pneg %p216
      %p303 = scmp.lt.s32.totalorder %s20, 1
      %s304 = scalar_select %p303, %s20, 1
      %s305 = smul.addr %s304, 2
      %s306 = scalar_lea.vmem %s8, %s305
      %s307 = smul.u32 2, %s20
      %p308 = scmp.lt.s32.totalorder %s307, 3
      %s309 = scalar_select %p308, %s307, 3
      %s310 = smul.addr %s309, 2
      %s311 = smul.addr %s310, 4
      %s312 = scalar_lea.vmem %s0, %s311
      %s313 = smul.u32 2, %s20
      %s314 = smul.u32 2, %s20
      %p315 = scmp.lt.s32.totalorder %s314, 3
      %s316 = scalar_select %p315, %s314, 3
      %s317 = smul.addr %s316, 2
      %s318 = smul.addr %s317, 4
      %s319 = scalar_lea.vmem %s7, %s318
      %s320 = smul.u32 2, %s20
      %p321 = scmp.lt.s32.totalorder %s20, 1
      %s322 = scalar_select %p321, %s20, 1
      %s323 = smul.addr %s322, 2
      %s324 = scalar_lea.vmem %s8, %s323
      %v326 = vld [vmem:[%s312] sm:$0xff]
      %s327 = scalar_lea.vmem %s312, 8
      %v328 = vld [vmem:[%s327] sm:$0xff]
      %v330 = vcombine.high %v326, %v326
      %v332 = vcombine.high %v328, %v328
      %v333 = vld [vmem:[%s2] sm:$0xff]
      %v334 = vld [vmem:[%s2 + $0x8] sm:$0xff]
      %v335 = vld [vmem:[%s2 + $0x10] sm:$0xff]
      %v336 = vld [vmem:[%s2 + $0x18] sm:$0xff]
      %v337 = vld [vmem:[%s2 + $0x20] sm:$0xff]
      %v338 = vld [vmem:[%s3] sm:$0xff]
      %v339 = vld [vmem:[%s3 + $0x8] sm:$0xff]
      %v340 = vld [vmem:[%s3 + $0x10] sm:$0xff]
      %v341 = vld [vmem:[%s3 + $0x18] sm:$0xff]
      %v342 = vld [vmem:[%s3 + $0x20] sm:$0x1]
      %v343 = vld [vmem:[%s3 + $0x28] sm:$0x1]
      %v344 = vld [vmem:[%s3 + $0x30] sm:$0x1]
      %v345 = vld [vmem:[%s3 + $0x38] sm:$0x1]
      %v346 = vld [vmem:[%s1] sm:$0x3f]
      %348 = vset.pattern.permute.xlu0 0
      %349 = vperm.xlu0 %348, %v333
      %v350 = vpop.permute.xlu0 %349
      %vm352 = vcmask 31744
      %v354 = vsel %vm352, %v346, 0
      %vm356 = vcmask 1043456
      %v357 = vsel %vm356, %v326, 0
      %v359 = vsel %vm356, %v330, 0
      %v361 = vsel %vm356, %v328, 0
      %v363 = vsel %vm356, %v332, 0
      %365 = vmatprep.subr.mxu0 0.0
      %366 = vmatpush1.msra.mxu0 0.0
      %367 = vmatprep.subr.mxu0 0.0
      %368 = vmatpush1.msra.mxu0 0.0
      %369 = vmatprep.subr.mxu0 0.0
      %370 = vmatpush1.msra.mxu0 0.0
      %371 = vmatprep.subr.mxu0 0.0
      %372 = vmatpush1.msra.mxu0 0.0
      %373 = vmatprep.subr.mxu0 0.0
      %374 = vmatpush1.msra.mxu0 0.0
      %375 = vmatprep.subr.mxu0 0.0
      %376 = vmatpush1.msra.mxu0 0.0
      %377 = vmatprep.subr.mxu0 0.0
      %378 = vmatpush1.msra.mxu0 0.0
      %379 = vmatprep.subr.mxu0 0.0
      %380 = vmatpush1.msra.mxu0 0.0
      %381 = vmatprep.subr.mxu0 0.0
      %382 = vmatpush1.msra.mxu0 0.0
      %383 = vmatprep.subr.mxu0 0.0
      %384 = vmatpush1.msra.mxu0 0.0
      %385 = vmatprep.subr.mxu0 0.0
      %386 = vmatpush1.msra.mxu0 0.0
      %387 = vmatprep.subr.mxu0 0.0
      %388 = vmatpush1.msra.mxu0 0.0
      %389 = vmatprep.subr.mxu0 0.0
      %390 = vmatpush1.msra.mxu0 0.0
      %391 = vmatprep.subr.mxu0 0.0
      %392 = vmatpush1.msra.mxu0 0.0
      %393 = vmatprep.subr.mxu0 0.0
      %394 = vmatpush1.msra.mxu0 0.0
      %v395 = vand.u32 %v359, 4294901760
      %396 = vmatprep.subr.mxu0 %v395
      %v397 = vand.u32 %v357, 4294901760
      %398 = vmatpush1.msra.mxu0 %v397
      %399 = vmatprep.subr.mxu0 0.0
      %400 = vmatpush2.msra.mxu0 0.0
      %401 = vmatprep.subr.mxu0 0.0
      %402 = vmatpush2.msra.mxu0 0.0
      %403 = vmatprep.subr.mxu0 0.0
      %404 = vmatpush2.msra.mxu0 0.0
      %405 = vmatprep.subr.mxu0 0.0
      %406 = vmatpush2.msra.mxu0 0.0
      %407 = vmatprep.subr.mxu0 0.0
      %408 = vmatpush2.msra.mxu0 0.0
      %409 = vmatprep.subr.mxu0 0.0
      %410 = vmatpush2.msra.mxu0 0.0
      %411 = vmatprep.subr.mxu0 0.0
      %412 = vmatpush2.msra.mxu0 0.0
      %413 = vmatprep.subr.mxu0 0.0
      %414 = vmatpush2.msra.mxu0 0.0
      %415 = vmatprep.subr.mxu0 0.0
      %416 = vmatpush2.msra.mxu0 0.0
      %417 = vmatprep.subr.mxu0 0.0
      %418 = vmatpush2.msra.mxu0 0.0
      %419 = vmatprep.subr.mxu0 0.0
      %420 = vmatpush2.msra.mxu0 0.0
      %421 = vmatprep.subr.mxu0 0.0
      %422 = vmatpush2.msra.mxu0 0.0
      %423 = vmatprep.subr.mxu0 0.0
      %424 = vmatpush2.msra.mxu0 0.0
      %425 = vmatprep.subr.mxu0 0.0
      %426 = vmatpush2.msra.mxu0 0.0
      %427 = vmatprep.subr.mxu0 0.0
      %428 = vmatpush2.msra.mxu0 0.0
      %429 = vmatprep.subr.mxu0 0.0
      %430 = vmatpush2.msra.mxu0 0.0
      %431 = vmatprep.mubr.f32.mxu0 0.0
      %v432 = vand.u32 %v354, 4294901760
      %v433 = vsub.f32 %v354, %v432
      %v434 = vand.u32 %v433, 4294901760
      %v435 = vsub.f32 %v433, %v434
      %v436 = vand.u32 %v435, 4294901760
      %437 = vmatmul.mubr.f32.gmra.mxu0 %v436
      %v438 = vpop.f32.mrf.mxu0
      %v439 = vadd.f32 %v350, %v438
      %v440 = vpop.f32.mrf.mxu0
      %v441 = vadd.f32 %v350, %v440
      %442 = vdwg.mxu0
      %443 = vmatprep.subr.mxu0 0.0
      %444 = vmatpush1.msra.mxu0 0.0
      %445 = vmatprep.subr.mxu0 0.0
      %446 = vmatpush1.msra.mxu0 0.0
      %447 = vmatprep.subr.mxu0 0.0
      %448 = vmatpush1.msra.mxu0 0.0
      %449 = vmatprep.subr.mxu0 0.0
      %450 = vmatpush1.msra.mxu0 0.0
      %451 = vmatprep.subr.mxu0 0.0
      %452 = vmatpush1.msra.mxu0 0.0
      %453 = vmatprep.subr.mxu0 0.0
      %454 = vmatpush1.msra.mxu0 0.0
      %455 = vmatprep.subr.mxu0 0.0
      %456 = vmatpush1.msra.mxu0 0.0
      %457 = vmatprep.subr.mxu0 0.0
      %458 = vmatpush1.msra.mxu0 0.0
      %459 = vmatprep.subr.mxu0 0.0
      %460 = vmatpush1.msra.mxu0 0.0
      %461 = vmatprep.subr.mxu0 0.0
      %462 = vmatpush1.msra.mxu0 0.0
      %463 = vmatprep.subr.mxu0 0.0
      %464 = vmatpush1.msra.mxu0 0.0
      %465 = vmatprep.subr.mxu0 0.0
      %466 = vmatpush1.msra.mxu0 0.0
      %467 = vmatprep.subr.mxu0 0.0
      %468 = vmatpush1.msra.mxu0 0.0
      %469 = vmatprep.subr.mxu0 0.0
      %470 = vmatpush1.msra.mxu0 0.0
      %471 = vmatprep.subr.mxu0 0.0
      %472 = vmatpush1.msra.mxu0 0.0
      %v473 = vand.u32 %v359, 4294901760
      %v474 = vsub.f32 %v359, %v473
      %v475 = vand.u32 %v474, 4294901760
      %v476 = vsub.f32 %v474, %v475
      %v477 = vand.u32 %v476, 4294901760
      %478 = vmatprep.subr.mxu0 %v477
      %v479 = vand.u32 %v357, 4294901760
      %v480 = vsub.f32 %v357, %v479
      %v481 = vand.u32 %v480, 4294901760
      %v482 = vsub.f32 %v480, %v481
      %v483 = vand.u32 %v482, 4294901760
      %484 = vmatpush1.msra.mxu0 %v483
      %485 = vmatprep.subr.mxu0 0.0
      %486 = vmatpush2.msra.mxu0 0.0
      %487 = vmatprep.subr.mxu0 0.0
      %488 = vmatpush2.msra.mxu0 0.0
      %489 = vmatprep.subr.mxu0 0.0
      %490 = vmatpush2.msra.mxu0 0.0
      %491 = vmatprep.subr.mxu0 0.0
      %492 = vmatpush2.msra.mxu0 0.0
      %493 = vmatprep.subr.mxu0 0.0
      %494 = vmatpush2.msra.mxu0 0.0
      %495 = vmatprep.subr.mxu0 0.0
      %496 = vmatpush2.msra.mxu0 0.0
      %497 = vmatprep.subr.mxu0 0.0
      %498 = vmatpush2.msra.mxu0 0.0
      %499 = vmatprep.subr.mxu0 0.0
      %500 = vmatpush2.msra.mxu0 0.0
      %501 = vmatprep.subr.mxu0 0.0
      %502 = vmatpush2.msra.mxu0 0.0
      %503 = vmatprep.subr.mxu0 0.0
      %504 = vmatpush2.msra.mxu0 0.0
      %505 = vmatprep.subr.mxu0 0.0
      %506 = vmatpush2.msra.mxu0 0.0
      %507 = vmatprep.subr.mxu0 0.0
      %508 = vmatpush2.msra.mxu0 0.0
      %509 = vmatprep.subr.mxu0 0.0
      %510 = vmatpush2.msra.mxu0 0.0
      %511 = vmatprep.subr.mxu0 0.0
      %512 = vmatpush2.msra.mxu0 0.0
      %513 = vmatprep.subr.mxu0 0.0
      %514 = vmatpush2.msra.mxu0 0.0
      %515 = vmatprep.subr.mxu0 0.0
      %516 = vmatpush2.msra.mxu0 0.0
      %517 = vmatprep.mubr.f32.mxu0 0.0
      %v518 = vand.u32 %v354, 4294901760
      %519 = vmatmul.mubr.f32.gmra.mxu0 %v518
      %v520 = vpop.f32.mrf.mxu0
      %v521 = vadd.f32 %v439, %v520
      %v522 = vpop.f32.mrf.mxu0
      %v523 = vadd.f32 %v441, %v522
      %524 = vdwg.mxu0
      %525 = vmatprep.subr.mxu0 0.0
      %526 = vmatpush1.msra.mxu0 0.0
      %527 = vmatprep.subr.mxu0 0.0
      %528 = vmatpush1.msra.mxu0 0.0
      %529 = vmatprep.subr.mxu0 0.0
      %530 = vmatpush1.msra.mxu0 0.0
      %531 = vmatprep.subr.mxu0 0.0
      %532 = vmatpush1.msra.mxu0 0.0
      %533 = vmatprep.subr.mxu0 0.0
      %534 = vmatpush1.msra.mxu0 0.0
      %535 = vmatprep.subr.mxu0 0.0
      %536 = vmatpush1.msra.mxu0 0.0
      %537 = vmatprep.subr.mxu0 0.0
      %538 = vmatpush1.msra.mxu0 0.0
      %539 = vmatprep.subr.mxu0 0.0
      %540 = vmatpush1.msra.mxu0 0.0
      %541 = vmatprep.subr.mxu0 0.0
      %542 = vmatpush1.msra.mxu0 0.0
      %543 = vmatprep.subr.mxu0 0.0
      %544 = vmatpush1.msra.mxu0 0.0
      %545 = vmatprep.subr.mxu0 0.0
      %546 = vmatpush1.msra.mxu0 0.0
      %547 = vmatprep.subr.mxu0 0.0
      %548 = vmatpush1.msra.mxu0 0.0
      %549 = vmatprep.subr.mxu0 0.0
      %550 = vmatpush1.msra.mxu0 0.0
      %551 = vmatprep.subr.mxu0 0.0
      %552 = vmatpush1.msra.mxu0 0.0
      %553 = vmatprep.subr.mxu0 0.0
      %554 = vmatpush1.msra.mxu0 0.0
      %v555 = vand.u32 %v359, 4294901760
      %v556 = vsub.f32 %v359, %v555
      %557 = vmatprep.subr.mxu0 %v556
      %v558 = vand.u32 %v357, 4294901760
      %v559 = vsub.f32 %v357, %v558
      %560 = vmatpush1.msra.mxu0 %v559
      %561 = vmatprep.subr.mxu0 0.0
      %562 = vmatpush2.msra.mxu0 0.0
      %563 = vmatprep.subr.mxu0 0.0
      %564 = vmatpush2.msra.mxu0 0.0
      %565 = vmatprep.subr.mxu0 0.0
      %566 = vmatpush2.msra.mxu0 0.0
      %567 = vmatprep.subr.mxu0 0.0
      %568 = vmatpush2.msra.mxu0 0.0
      %569 = vmatprep.subr.mxu0 0.0
      %570 = vmatpush2.msra.mxu0 0.0
      %571 = vmatprep.subr.mxu0 0.0
      %572 = vmatpush2.msra.mxu0 0.0
      %573 = vmatprep.subr.mxu0 0.0
      %574 = vmatpush2.msra.mxu0 0.0
      %575 = vmatprep.subr.mxu0 0.0
      %576 = vmatpush2.msra.mxu0 0.0
      %577 = vmatprep.subr.mxu0 0.0
      %578 = vmatpush2.msra.mxu0 0.0
      %579 = vmatprep.subr.mxu0 0.0
      %580 = vmatpush2.msra.mxu0 0.0
      %581 = vmatprep.subr.mxu0 0.0
      %582 = vmatpush2.msra.mxu0 0.0
      %583 = vmatprep.subr.mxu0 0.0
      %584 = vmatpush2.msra.mxu0 0.0
      %585 = vmatprep.subr.mxu0 0.0
      %586 = vmatpush2.msra.mxu0 0.0
      %587 = vmatprep.subr.mxu0 0.0
      %588 = vmatpush2.msra.mxu0 0.0
      %589 = vmatprep.subr.mxu0 0.0
      %590 = vmatpush2.msra.mxu0 0.0
      %591 = vmatprep.subr.mxu0 0.0
      %592 = vmatpush2.msra.mxu0 0.0
      %593 = vmatprep.mubr.f32.mxu0 0.0
      %v594 = vand.u32 %v354, 4294901760
      %v595 = vsub.f32 %v354, %v594
      %596 = vmatmul.mubr.f32.gmra.mxu0 %v595
      %v597 = vpop.f32.mrf.mxu0
      %v598 = vadd.f32 %v521, %v597
      %v599 = vpop.f32.mrf.mxu0
      %v600 = vadd.f32 %v523, %v599
      %601 = vdwg.mxu0
      %602 = vmatprep.subr.mxu0 0.0
      %603 = vmatpush1.msra.mxu0 0.0
      %604 = vmatprep.subr.mxu0 0.0
      %605 = vmatpush1.msra.mxu0 0.0
      %606 = vmatprep.subr.mxu0 0.0
      %607 = vmatpush1.msra.mxu0 0.0
      %608 = vmatprep.subr.mxu0 0.0
      %609 = vmatpush1.msra.mxu0 0.0
      %610 = vmatprep.subr.mxu0 0.0
      %611 = vmatpush1.msra.mxu0 0.0
      %612 = vmatprep.subr.mxu0 0.0
      %613 = vmatpush1.msra.mxu0 0.0
      %614 = vmatprep.subr.mxu0 0.0
      %615 = vmatpush1.msra.mxu0 0.0
      %616 = vmatprep.subr.mxu0 0.0
      %617 = vmatpush1.msra.mxu0 0.0
      %618 = vmatprep.subr.mxu0 0.0
      %619 = vmatpush1.msra.mxu0 0.0
      %620 = vmatprep.subr.mxu0 0.0
      %621 = vmatpush1.msra.mxu0 0.0
      %622 = vmatprep.subr.mxu0 0.0
      %623 = vmatpush1.msra.mxu0 0.0
      %624 = vmatprep.subr.mxu0 0.0
      %625 = vmatpush1.msra.mxu0 0.0
      %626 = vmatprep.subr.mxu0 0.0
      %627 = vmatpush1.msra.mxu0 0.0
      %628 = vmatprep.subr.mxu0 0.0
      %629 = vmatpush1.msra.mxu0 0.0
      %630 = vmatprep.subr.mxu0 0.0
      %631 = vmatpush1.msra.mxu0 0.0
      %v632 = vand.u32 %v359, 4294901760
      %633 = vmatprep.subr.mxu0 %v632
      %v634 = vand.u32 %v357, 4294901760
      %635 = vmatpush1.msra.mxu0 %v634
      %636 = vmatprep.subr.mxu0 0.0
      %637 = vmatpush2.msra.mxu0 0.0
      %638 = vmatprep.subr.mxu0 0.0
      %639 = vmatpush2.msra.mxu0 0.0
      %640 = vmatprep.subr.mxu0 0.0
      %641 = vmatpush2.msra.mxu0 0.0
      %642 = vmatprep.subr.mxu0 0.0
      %643 = vmatpush2.msra.mxu0 0.0
      %644 = vmatprep.subr.mxu0 0.0
      %645 = vmatpush2.msra.mxu0 0.0
      %646 = vmatprep.subr.mxu0 0.0
      %647 = vmatpush2.msra.mxu0 0.0
      %648 = vmatprep.subr.mxu0 0.0
      %649 = vmatpush2.msra.mxu0 0.0
      %650 = vmatprep.subr.mxu0 0.0
      %651 = vmatpush2.msra.mxu0 0.0
      %652 = vmatprep.subr.mxu0 0.0
      %653 = vmatpush2.msra.mxu0 0.0
      %654 = vmatprep.subr.mxu0 0.0
      %655 = vmatpush2.msra.mxu0 0.0
      %656 = vmatprep.subr.mxu0 0.0
      %657 = vmatpush2.msra.mxu0 0.0
      %658 = vmatprep.subr.mxu0 0.0
      %659 = vmatpush2.msra.mxu0 0.0
      %660 = vmatprep.subr.mxu0 0.0
      %661 = vmatpush2.msra.mxu0 0.0
      %662 = vmatprep.subr.mxu0 0.0
      %663 = vmatpush2.msra.mxu0 0.0
      %664 = vmatprep.subr.mxu0 0.0
      %665 = vmatpush2.msra.mxu0 0.0
      %666 = vmatprep.subr.mxu0 0.0
      %667 = vmatpush2.msra.mxu0 0.0
      %668 = vmatprep.mubr.f32.mxu0 0.0
      %v669 = vand.u32 %v354, 4294901760
      %v670 = vsub.f32 %v354, %v669
      %v671 = vand.u32 %v670, 4294901760
      %672 = vmatmul.mubr.f32.gmra.mxu0 %v671
      %v673 = vpop.f32.mrf.mxu0
      %v674 = vadd.f32 %v598, %v673
      %v675 = vpop.f32.mrf.mxu0
      %v676 = vadd.f32 %v600, %v675
      %677 = vdwg.mxu0
      %678 = vmatprep.subr.mxu0 0.0
      %679 = vmatpush1.msra.mxu0 0.0
      %680 = vmatprep.subr.mxu0 0.0
      %681 = vmatpush1.msra.mxu0 0.0
      %682 = vmatprep.subr.mxu0 0.0
      %683 = vmatpush1.msra.mxu0 0.0
      %684 = vmatprep.subr.mxu0 0.0
      %685 = vmatpush1.msra.mxu0 0.0
      %686 = vmatprep.subr.mxu0 0.0
      %687 = vmatpush1.msra.mxu0 0.0
      %688 = vmatprep.subr.mxu0 0.0
      %689 = vmatpush1.msra.mxu0 0.0
      %690 = vmatprep.subr.mxu0 0.0
      %691 = vmatpush1.msra.mxu0 0.0
      %692 = vmatprep.subr.mxu0 0.0
      %693 = vmatpush1.msra.mxu0 0.0
      %694 = vmatprep.subr.mxu0 0.0
      %695 = vmatpush1.msra.mxu0 0.0
      %696 = vmatprep.subr.mxu0 0.0
      %697 = vmatpush1.msra.mxu0 0.0
      %698 = vmatprep.subr.mxu0 0.0
      %699 = vmatpush1.msra.mxu0 0.0
      %700 = vmatprep.subr.mxu0 0.0
      %701 = vmatpush1.msra.mxu0 0.0
      %702 = vmatprep.subr.mxu0 0.0
      %703 = vmatpush1.msra.mxu0 0.0
      %704 = vmatprep.subr.mxu0 0.0
      %705 = vmatpush1.msra.mxu0 0.0
      %706 = vmatprep.subr.mxu0 0.0
      %707 = vmatpush1.msra.mxu0 0.0
      %v708 = vand.u32 %v359, 4294901760
      %v709 = vsub.f32 %v359, %v708
      %v710 = vand.u32 %v709, 4294901760
      %711 = vmatprep.subr.mxu0 %v710
      %v712 = vand.u32 %v357, 4294901760
      %v713 = vsub.f32 %v357, %v712
      %v714 = vand.u32 %v713, 4294901760
      %715 = vmatpush1.msra.mxu0 %v714
      %716 = vmatprep.subr.mxu0 0.0
      %717 = vmatpush2.msra.mxu0 0.0
      %718 = vmatprep.subr.mxu0 0.0
      %719 = vmatpush2.msra.mxu0 0.0
      %720 = vmatprep.subr.mxu0 0.0
      %721 = vmatpush2.msra.mxu0 0.0
      %722 = vmatprep.subr.mxu0 0.0
      %723 = vmatpush2.msra.mxu0 0.0
      %724 = vmatprep.subr.mxu0 0.0
      %725 = vmatpush2.msra.mxu0 0.0
      %726 = vmatprep.subr.mxu0 0.0
      %727 = vmatpush2.msra.mxu0 0.0
      %728 = vmatprep.subr.mxu0 0.0
      %729 = vmatpush2.msra.mxu0 0.0
      %730 = vmatprep.subr.mxu0 0.0
      %731 = vmatpush2.msra.mxu0 0.0
      %732 = vmatprep.subr.mxu0 0.0
      %733 = vmatpush2.msra.mxu0 0.0
      %734 = vmatprep.subr.mxu0 0.0
      %735 = vmatpush2.msra.mxu0 0.0
      %736 = vmatprep.subr.mxu0 0.0
      %737 = vmatpush2.msra.mxu0 0.0
      %738 = vmatprep.subr.mxu0 0.0
      %739 = vmatpush2.msra.mxu0 0.0
      %740 = vmatprep.subr.mxu0 0.0
      %741 = vmatpush2.msra.mxu0 0.0
      %742 = vmatprep.subr.mxu0 0.0
      %743 = vmatpush2.msra.mxu0 0.0
      %744 = vmatprep.subr.mxu0 0.0
      %745 = vmatpush2.msra.mxu0 0.0
      %746 = vmatprep.subr.mxu0 0.0
      %747 = vmatpush2.msra.mxu0 0.0
      %748 = vmatprep.mubr.f32.mxu0 0.0
      %v749 = vand.u32 %v354, 4294901760
      %750 = vmatmul.mubr.f32.gmra.mxu0 %v749
      %v751 = vpop.f32.mrf.mxu0
      %v752 = vadd.f32 %v674, %v751
      %v753 = vpop.f32.mrf.mxu0
      %v754 = vadd.f32 %v676, %v753
      %755 = vdwg.mxu0
      %756 = vmatprep.subr.mxu0 0.0
      %757 = vmatpush1.msra.mxu0 0.0
      %758 = vmatprep.subr.mxu0 0.0
      %759 = vmatpush1.msra.mxu0 0.0
      %760 = vmatprep.subr.mxu0 0.0
      %761 = vmatpush1.msra.mxu0 0.0
      %762 = vmatprep.subr.mxu0 0.0
      %763 = vmatpush1.msra.mxu0 0.0
      %764 = vmatprep.subr.mxu0 0.0
      %765 = vmatpush1.msra.mxu0 0.0
      %766 = vmatprep.subr.mxu0 0.0
      %767 = vmatpush1.msra.mxu0 0.0
      %768 = vmatprep.subr.mxu0 0.0
      %769 = vmatpush1.msra.mxu0 0.0
      %770 = vmatprep.subr.mxu0 0.0
      %771 = vmatpush1.msra.mxu0 0.0
      %772 = vmatprep.subr.mxu0 0.0
      %773 = vmatpush1.msra.mxu0 0.0
      %774 = vmatprep.subr.mxu0 0.0
      %775 = vmatpush1.msra.mxu0 0.0
      %776 = vmatprep.subr.mxu0 0.0
      %777 = vmatpush1.msra.mxu0 0.0
      %778 = vmatprep.subr.mxu0 0.0
      %779 = vmatpush1.msra.mxu0 0.0
      %780 = vmatprep.subr.mxu0 0.0
      %781 = vmatpush1.msra.mxu0 0.0
      %782 = vmatprep.subr.mxu0 0.0
      %783 = vmatpush1.msra.mxu0 0.0
      %784 = vmatprep.subr.mxu0 0.0
      %785 = vmatpush1.msra.mxu0 0.0
      %v786 = vand.u32 %v359, 4294901760
      %787 = vmatprep.subr.mxu0 %v786
      %v788 = vand.u32 %v357, 4294901760
      %789 = vmatpush1.msra.mxu0 %v788
      %790 = vmatprep.subr.mxu0 0.0
      %791 = vmatpush2.msra.mxu0 0.0
      %792 = vmatprep.subr.mxu0 0.0
      %793 = vmatpush2.msra.mxu0 0.0
      %794 = vmatprep.subr.mxu0 0.0
      %795 = vmatpush2.msra.mxu0 0.0
      %796 = vmatprep.subr.mxu0 0.0
      %797 = vmatpush2.msra.mxu0 0.0
      %798 = vmatprep.subr.mxu0 0.0
      %799 = vmatpush2.msra.mxu0 0.0
      %800 = vmatprep.subr.mxu0 0.0
      %801 = vmatpush2.msra.mxu0 0.0
      %802 = vmatprep.subr.mxu0 0.0
      %803 = vmatpush2.msra.mxu0 0.0
      %804 = vmatprep.subr.mxu0 0.0
      %805 = vmatpush2.msra.mxu0 0.0
      %806 = vmatprep.subr.mxu0 0.0
      %807 = vmatpush2.msra.mxu0 0.0
      %808 = vmatprep.subr.mxu0 0.0
      %809 = vmatpush2.msra.mxu0 0.0
      %810 = vmatprep.subr.mxu0 0.0
      %811 = vmatpush2.msra.mxu0 0.0
      %812 = vmatprep.subr.mxu0 0.0
      %813 = vmatpush2.msra.mxu0 0.0
      %814 = vmatprep.subr.mxu0 0.0
      %815 = vmatpush2.msra.mxu0 0.0
      %816 = vmatprep.subr.mxu0 0.0
      %817 = vmatpush2.msra.mxu0 0.0
      %818 = vmatprep.subr.mxu0 0.0
      %819 = vmatpush2.msra.mxu0 0.0
      %820 = vmatprep.subr.mxu0 0.0
      %821 = vmatpush2.msra.mxu0 0.0
      %822 = vmatprep.mubr.f32.mxu0 0.0
      %v823 = vand.u32 %v354, 4294901760
      %824 = vmatmul.mubr.f32.gmra.mxu0 %v823
      %v825 = vpop.f32.mrf.mxu0
      %v826 = vadd.f32 %v752, %v825
      %v827 = vpop.f32.mrf.mxu0
      %v828 = vadd.f32 %v754, %v827
      %829 = vdwg.mxu0
      %830 = vmatprep.subr.mxu0 0.0
      %831 = vmatpush1.msra.mxu0 0.0
      %832 = vmatprep.subr.mxu0 0.0
      %833 = vmatpush1.msra.mxu0 0.0
      %834 = vmatprep.subr.mxu0 0.0
      %835 = vmatpush1.msra.mxu0 0.0
      %836 = vmatprep.subr.mxu0 0.0
      %837 = vmatpush1.msra.mxu0 0.0
      %838 = vmatprep.subr.mxu0 0.0
      %839 = vmatpush1.msra.mxu0 0.0
      %840 = vmatprep.subr.mxu0 0.0
      %841 = vmatpush1.msra.mxu0 0.0
      %842 = vmatprep.subr.mxu0 0.0
      %843 = vmatpush1.msra.mxu0 0.0
      %844 = vmatprep.subr.mxu0 0.0
      %845 = vmatpush1.msra.mxu0 0.0
      %846 = vmatprep.subr.mxu0 0.0
      %847 = vmatpush1.msra.mxu0 0.0
      %848 = vmatprep.subr.mxu0 0.0
      %849 = vmatpush1.msra.mxu0 0.0
      %850 = vmatprep.subr.mxu0 0.0
      %851 = vmatpush1.msra.mxu0 0.0
      %852 = vmatprep.subr.mxu0 0.0
      %853 = vmatpush1.msra.mxu0 0.0
      %854 = vmatprep.subr.mxu0 0.0
      %855 = vmatpush1.msra.mxu0 0.0
      %856 = vmatprep.subr.mxu0 0.0
      %857 = vmatpush1.msra.mxu0 0.0
      %858 = vmatprep.subr.mxu0 0.0
      %859 = vmatpush1.msra.mxu0 0.0
      %v860 = vand.u32 %v363, 4294901760
      %861 = vmatprep.subr.mxu0 %v860
      %v862 = vand.u32 %v361, 4294901760
      %863 = vmatpush1.msra.mxu0 %v862
      %864 = vmatprep.subr.mxu0 0.0
      %865 = vmatpush2.msra.mxu0 0.0
      %866 = vmatprep.subr.mxu0 0.0
      %867 = vmatpush2.msra.mxu0 0.0
      %868 = vmatprep.subr.mxu0 0.0
      %869 = vmatpush2.msra.mxu0 0.0
      %870 = vmatprep.subr.mxu0 0.0
      %871 = vmatpush2.msra.mxu0 0.0
      %872 = vmatprep.subr.mxu0 0.0
      %873 = vmatpush2.msra.mxu0 0.0
      %874 = vmatprep.subr.mxu0 0.0
      %875 = vmatpush2.msra.mxu0 0.0
      %876 = vmatprep.subr.mxu0 0.0
      %877 = vmatpush2.msra.mxu0 0.0
      %878 = vmatprep.subr.mxu0 0.0
      %879 = vmatpush2.msra.mxu0 0.0
      %880 = vmatprep.subr.mxu0 0.0
      %881 = vmatpush2.msra.mxu0 0.0
      %882 = vmatprep.subr.mxu0 0.0
      %883 = vmatpush2.msra.mxu0 0.0
      %884 = vmatprep.subr.mxu0 0.0
      %885 = vmatpush2.msra.mxu0 0.0
      %886 = vmatprep.subr.mxu0 0.0
      %887 = vmatpush2.msra.mxu0 0.0
      %888 = vmatprep.subr.mxu0 0.0
      %889 = vmatpush2.msra.mxu0 0.0
      %890 = vmatprep.subr.mxu0 0.0
      %891 = vmatpush2.msra.mxu0 0.0
      %892 = vmatprep.subr.mxu0 0.0
      %893 = vmatpush2.msra.mxu0 0.0
      %894 = vmatprep.subr.mxu0 0.0
      %895 = vmatpush2.msra.mxu0 0.0
      %896 = vmatprep.mubr.f32.mxu0 0.0
      %v897 = vand.u32 %v354, 4294901760
      %v898 = vsub.f32 %v354, %v897
      %v899 = vand.u32 %v898, 4294901760
      %v900 = vsub.f32 %v898, %v899
      %v901 = vand.u32 %v900, 4294901760
      %902 = vmatmul.mubr.f32.gmra.mxu0 %v901
      %v903 = vpop.f32.mrf.mxu0
      %v904 = vadd.f32 %v350, %v903
      %v905 = vpop.f32.mrf.mxu0
      %v906 = vadd.f32 %v350, %v905
      %907 = vdwg.mxu0
      %908 = vmatprep.subr.mxu0 0.0
      %909 = vmatpush1.msra.mxu0 0.0
      %910 = vmatprep.subr.mxu0 0.0
      %911 = vmatpush1.msra.mxu0 0.0
      %912 = vmatprep.subr.mxu0 0.0
      %913 = vmatpush1.msra.mxu0 0.0
      %914 = vmatprep.subr.mxu0 0.0
      %915 = vmatpush1.msra.mxu0 0.0
      %916 = vmatprep.subr.mxu0 0.0
      %917 = vmatpush1.msra.mxu0 0.0
      %918 = vmatprep.subr.mxu0 0.0
      %919 = vmatpush1.msra.mxu0 0.0
      %920 = vmatprep.subr.mxu0 0.0
      %921 = vmatpush1.msra.mxu0 0.0
      %922 = vmatprep.subr.mxu0 0.0
      %923 = vmatpush1.msra.mxu0 0.0
      %924 = vmatprep.subr.mxu0 0.0
      %925 = vmatpush1.msra.mxu0 0.0
      %926 = vmatprep.subr.mxu0 0.0
      %927 = vmatpush1.msra.mxu0 0.0
      %928 = vmatprep.subr.mxu0 0.0
      %929 = vmatpush1.msra.mxu0 0.0
      %930 = vmatprep.subr.mxu0 0.0
      %931 = vmatpush1.msra.mxu0 0.0
      %932 = vmatprep.subr.mxu0 0.0
      %933 = vmatpush1.msra.mxu0 0.0
      %934 = vmatprep.subr.mxu0 0.0
      %935 = vmatpush1.msra.mxu0 0.0
      %936 = vmatprep.subr.mxu0 0.0
      %937 = vmatpush1.msra.mxu0 0.0
      %v938 = vand.u32 %v363, 4294901760
      %v939 = vsub.f32 %v363, %v938
      %v940 = vand.u32 %v939, 4294901760
      %v941 = vsub.f32 %v939, %v940
      %v942 = vand.u32 %v941, 4294901760
      %943 = vmatprep.subr.mxu0 %v942
      %v944 = vand.u32 %v361, 4294901760
      %v945 = vsub.f32 %v361, %v944
      %v946 = vand.u32 %v945, 4294901760
      %v947 = vsub.f32 %v945, %v946
      %v948 = vand.u32 %v947, 4294901760
      %949 = vmatpush1.msra.mxu0 %v948
      %950 = vmatprep.subr.mxu0 0.0
      %951 = vmatpush2.msra.mxu0 0.0
      %952 = vmatprep.subr.mxu0 0.0
      %953 = vmatpush2.msra.mxu0 0.0
      %954 = vmatprep.subr.mxu0 0.0
      %955 = vmatpush2.msra.mxu0 0.0
      %956 = vmatprep.subr.mxu0 0.0
      %957 = vmatpush2.msra.mxu0 0.0
      %958 = vmatprep.subr.mxu0 0.0
      %959 = vmatpush2.msra.mxu0 0.0
      %960 = vmatprep.subr.mxu0 0.0
      %961 = vmatpush2.msra.mxu0 0.0
      %962 = vmatprep.subr.mxu0 0.0
      %963 = vmatpush2.msra.mxu0 0.0
      %964 = vmatprep.subr.mxu0 0.0
      %965 = vmatpush2.msra.mxu0 0.0
      %966 = vmatprep.subr.mxu0 0.0
      %967 = vmatpush2.msra.mxu0 0.0
      %968 = vmatprep.subr.mxu0 0.0
      %969 = vmatpush2.msra.mxu0 0.0
      %970 = vmatprep.subr.mxu0 0.0
      %971 = vmatpush2.msra.mxu0 0.0
      %972 = vmatprep.subr.mxu0 0.0
      %973 = vmatpush2.msra.mxu0 0.0
      %974 = vmatprep.subr.mxu0 0.0
      %975 = vmatpush2.msra.mxu0 0.0
      %976 = vmatprep.subr.mxu0 0.0
      %977 = vmatpush2.msra.mxu0 0.0
      %978 = vmatprep.subr.mxu0 0.0
      %979 = vmatpush2.msra.mxu0 0.0
      %980 = vmatprep.subr.mxu0 0.0
      %981 = vmatpush2.msra.mxu0 0.0
      %982 = vmatprep.mubr.f32.mxu0 0.0
      %v983 = vand.u32 %v354, 4294901760
      %984 = vmatmul.mubr.f32.gmra.mxu0 %v983
      %v985 = vpop.f32.mrf.mxu0
      %v986 = vadd.f32 %v904, %v985
      %v987 = vpop.f32.mrf.mxu0
      %v988 = vadd.f32 %v906, %v987
      %989 = vdwg.mxu0
      %990 = vmatprep.subr.mxu0 0.0
      %991 = vmatpush1.msra.mxu0 0.0
      %992 = vmatprep.subr.mxu0 0.0
      %993 = vmatpush1.msra.mxu0 0.0
      %994 = vmatprep.subr.mxu0 0.0
      %995 = vmatpush1.msra.mxu0 0.0
      %996 = vmatprep.subr.mxu0 0.0
      %997 = vmatpush1.msra.mxu0 0.0
      %998 = vmatprep.subr.mxu0 0.0
      %999 = vmatpush1.msra.mxu0 0.0
      %1000 = vmatprep.subr.mxu0 0.0
      %1001 = vmatpush1.msra.mxu0 0.0
      %1002 = vmatprep.subr.mxu0 0.0
      %1003 = vmatpush1.msra.mxu0 0.0
      %1004 = vmatprep.subr.mxu0 0.0
      %1005 = vmatpush1.msra.mxu0 0.0
      %1006 = vmatprep.subr.mxu0 0.0
      %1007 = vmatpush1.msra.mxu0 0.0
      %1008 = vmatprep.subr.mxu0 0.0
      %1009 = vmatpush1.msra.mxu0 0.0
      %1010 = vmatprep.subr.mxu0 0.0
      %1011 = vmatpush1.msra.mxu0 0.0
      %1012 = vmatprep.subr.mxu0 0.0
      %1013 = vmatpush1.msra.mxu0 0.0
      %1014 = vmatprep.subr.mxu0 0.0
      %1015 = vmatpush1.msra.mxu0 0.0
      %1016 = vmatprep.subr.mxu0 0.0
      %1017 = vmatpush1.msra.mxu0 0.0
      %1018 = vmatprep.subr.mxu0 0.0
      %1019 = vmatpush1.msra.mxu0 0.0
      %v1020 = vand.u32 %v363, 4294901760
      %v1021 = vsub.f32 %v363, %v1020
      %1022 = vmatprep.subr.mxu0 %v1021
      %v1023 = vand.u32 %v361, 4294901760
      %v1024 = vsub.f32 %v361, %v1023
      %1025 = vmatpush1.msra.mxu0 %v1024
      %1026 = vmatprep.subr.mxu0 0.0
      %1027 = vmatpush2.msra.mxu0 0.0
      %1028 = vmatprep.subr.mxu0 0.0
      %1029 = vmatpush2.msra.mxu0 0.0
      %1030 = vmatprep.subr.mxu0 0.0
      %1031 = vmatpush2.msra.mxu0 0.0
      %1032 = vmatprep.subr.mxu0 0.0
      %1033 = vmatpush2.msra.mxu0 0.0
      %1034 = vmatprep.subr.mxu0 0.0
      %1035 = vmatpush2.msra.mxu0 0.0
      %1036 = vmatprep.subr.mxu0 0.0
      %1037 = vmatpush2.msra.mxu0 0.0
      %1038 = vmatprep.subr.mxu0 0.0
      %1039 = vmatpush2.msra.mxu0 0.0
      %1040 = vmatprep.subr.mxu0 0.0
      %1041 = vmatpush2.msra.mxu0 0.0
      %1042 = vmatprep.subr.mxu0 0.0
      %1043 = vmatpush2.msra.mxu0 0.0
      %1044 = vmatprep.subr.mxu0 0.0
      %1045 = vmatpush2.msra.mxu0 0.0
      %1046 = vmatprep.subr.mxu0 0.0
      %1047 = vmatpush2.msra.mxu0 0.0
      %1048 = vmatprep.subr.mxu0 0.0
      %1049 = vmatpush2.msra.mxu0 0.0
      %1050 = vmatprep.subr.mxu0 0.0
      %1051 = vmatpush2.msra.mxu0 0.0
      %1052 = vmatprep.subr.mxu0 0.0
      %1053 = vmatpush2.msra.mxu0 0.0
      %1054 = vmatprep.subr.mxu0 0.0
      %1055 = vmatpush2.msra.mxu0 0.0
      %1056 = vmatprep.subr.mxu0 0.0
      %1057 = vmatpush2.msra.mxu0 0.0
      %1058 = vmatprep.mubr.f32.mxu0 0.0
      %v1059 = vand.u32 %v354, 4294901760
      %v1060 = vsub.f32 %v354, %v1059
      %1061 = vmatmul.mubr.f32.gmra.mxu0 %v1060
      %v1062 = vpop.f32.mrf.mxu0
      %v1063 = vadd.f32 %v986, %v1062
      %v1064 = vpop.f32.mrf.mxu0
      %v1065 = vadd.f32 %v988, %v1064
      %1066 = vdwg.mxu0
      %1067 = vmatprep.subr.mxu0 0.0
      %1068 = vmatpush1.msra.mxu0 0.0
      %1069 = vmatprep.subr.mxu0 0.0
      %1070 = vmatpush1.msra.mxu0 0.0
      %1071 = vmatprep.subr.mxu0 0.0
      %1072 = vmatpush1.msra.mxu0 0.0
      %1073 = vmatprep.subr.mxu0 0.0
      %1074 = vmatpush1.msra.mxu0 0.0
      %1075 = vmatprep.subr.mxu0 0.0
      %1076 = vmatpush1.msra.mxu0 0.0
      %1077 = vmatprep.subr.mxu0 0.0
      %1078 = vmatpush1.msra.mxu0 0.0
      %1079 = vmatprep.subr.mxu0 0.0
      %1080 = vmatpush1.msra.mxu0 0.0
      %1081 = vmatprep.subr.mxu0 0.0
      %1082 = vmatpush1.msra.mxu0 0.0
      %1083 = vmatprep.subr.mxu0 0.0
      %1084 = vmatpush1.msra.mxu0 0.0
      %1085 = vmatprep.subr.mxu0 0.0
      %1086 = vmatpush1.msra.mxu0 0.0
      %1087 = vmatprep.subr.mxu0 0.0
      %1088 = vmatpush1.msra.mxu0 0.0
      %1089 = vmatprep.subr.mxu0 0.0
      %1090 = vmatpush1.msra.mxu0 0.0
      %1091 = vmatprep.subr.mxu0 0.0
      %1092 = vmatpush1.msra.mxu0 0.0
      %1093 = vmatprep.subr.mxu0 0.0
      %1094 = vmatpush1.msra.mxu0 0.0
      %1095 = vmatprep.subr.mxu0 0.0
      %1096 = vmatpush1.msra.mxu0 0.0
      %v1097 = vand.u32 %v363, 4294901760
      %1098 = vmatprep.subr.mxu0 %v1097
      %v1099 = vand.u32 %v361, 4294901760
      %1100 = vmatpush1.msra.mxu0 %v1099
      %1101 = vmatprep.subr.mxu0 0.0
      %1102 = vmatpush2.msra.mxu0 0.0
      %1103 = vmatprep.subr.mxu0 0.0
      %1104 = vmatpush2.msra.mxu0 0.0
      %1105 = vmatprep.subr.mxu0 0.0
      %1106 = vmatpush2.msra.mxu0 0.0
      %1107 = vmatprep.subr.mxu0 0.0
      %1108 = vmatpush2.msra.mxu0 0.0
      %1109 = vmatprep.subr.mxu0 0.0
      %1110 = vmatpush2.msra.mxu0 0.0
      %1111 = vmatprep.subr.mxu0 0.0
      %1112 = vmatpush2.msra.mxu0 0.0
      %1113 = vmatprep.subr.mxu0 0.0
      %1114 = vmatpush2.msra.mxu0 0.0
      %1115 = vmatprep.subr.mxu0 0.0
      %1116 = vmatpush2.msra.mxu0 0.0
      %1117 = vmatprep.subr.mxu0 0.0
      %1118 = vmatpush2.msra.mxu0 0.0
      %1119 = vmatprep.subr.mxu0 0.0
      %1120 = vmatpush2.msra.mxu0 0.0
      %1121 = vmatprep.subr.mxu0 0.0
      %1122 = vmatpush2.msra.mxu0 0.0
      %1123 = vmatprep.subr.mxu0 0.0
      %1124 = vmatpush2.msra.mxu0 0.0
      %1125 = vmatprep.subr.mxu0 0.0
      %1126 = vmatpush2.msra.mxu0 0.0
      %1127 = vmatprep.subr.mxu0 0.0
      %1128 = vmatpush2.msra.mxu0 0.0
      %1129 = vmatprep.subr.mxu0 0.0
      %1130 = vmatpush2.msra.mxu0 0.0
      %1131 = vmatprep.subr.mxu0 0.0
      %1132 = vmatpush2.msra.mxu0 0.0
      %1133 = vmatprep.mubr.f32.mxu0 0.0
      %v1134 = vand.u32 %v354, 4294901760
      %v1135 = vsub.f32 %v354, %v1134
      %v1136 = vand.u32 %v1135, 4294901760
      %1137 = vmatmul.mubr.f32.gmra.mxu0 %v1136
      %v1138 = vpop.f32.mrf.mxu0
      %v1139 = vadd.f32 %v1063, %v1138
      %v1140 = vpop.f32.mrf.mxu0
      %v1141 = vadd.f32 %v1065, %v1140
      %1142 = vdwg.mxu0
      %1143 = vmatprep.subr.mxu0 0.0
      %1144 = vmatpush1.msra.mxu0 0.0
      %1145 = vmatprep.subr.mxu0 0.0
      %1146 = vmatpush1.msra.mxu0 0.0
      %1147 = vmatprep.subr.mxu0 0.0
      %1148 = vmatpush1.msra.mxu0 0.0
      %1149 = vmatprep.subr.mxu0 0.0
      %1150 = vmatpush1.msra.mxu0 0.0
      %1151 = vmatprep.subr.mxu0 0.0
      %1152 = vmatpush1.msra.mxu0 0.0
      %1153 = vmatprep.subr.mxu0 0.0
      %1154 = vmatpush1.msra.mxu0 0.0
      %1155 = vmatprep.subr.mxu0 0.0
      %1156 = vmatpush1.msra.mxu0 0.0
      %1157 = vmatprep.subr.mxu0 0.0
      %1158 = vmatpush1.msra.mxu0 0.0
      %1159 = vmatprep.subr.mxu0 0.0
      %1160 = vmatpush1.msra.mxu0 0.0
      %1161 = vmatprep.subr.mxu0 0.0
      %1162 = vmatpush1.msra.mxu0 0.0
      %1163 = vmatprep.subr.mxu0 0.0
      %1164 = vmatpush1.msra.mxu0 0.0
      %1165 = vmatprep.subr.mxu0 0.0
      %1166 = vmatpush1.msra.mxu0 0.0
      %1167 = vmatprep.subr.mxu0 0.0
      %1168 = vmatpush1.msra.mxu0 0.0
      %1169 = vmatprep.subr.mxu0 0.0
      %1170 = vmatpush1.msra.mxu0 0.0
      %1171 = vmatprep.subr.mxu0 0.0
      %1172 = vmatpush1.msra.mxu0 0.0
      %v1173 = vand.u32 %v363, 4294901760
      %v1174 = vsub.f32 %v363, %v1173
      %v1175 = vand.u32 %v1174, 4294901760
      %1176 = vmatprep.subr.mxu0 %v1175
      %v1177 = vand.u32 %v361, 4294901760
      %v1178 = vsub.f32 %v361, %v1177
      %v1179 = vand.u32 %v1178, 4294901760
      %1180 = vmatpush1.msra.mxu0 %v1179
      %1181 = vmatprep.subr.mxu0 0.0
      %1182 = vmatpush2.msra.mxu0 0.0
      %1183 = vmatprep.subr.mxu0 0.0
      %1184 = vmatpush2.msra.mxu0 0.0
      %1185 = vmatprep.subr.mxu0 0.0
      %1186 = vmatpush2.msra.mxu0 0.0
      %1187 = vmatprep.subr.mxu0 0.0
      %1188 = vmatpush2.msra.mxu0 0.0
      %1189 = vmatprep.subr.mxu0 0.0
      %1190 = vmatpush2.msra.mxu0 0.0
      %1191 = vmatprep.subr.mxu0 0.0
      %1192 = vmatpush2.msra.mxu0 0.0
      %1193 = vmatprep.subr.mxu0 0.0
      %1194 = vmatpush2.msra.mxu0 0.0
      %1195 = vmatprep.subr.mxu0 0.0
      %1196 = vmatpush2.msra.mxu0 0.0
      %1197 = vmatprep.subr.mxu0 0.0
      %1198 = vmatpush2.msra.mxu0 0.0
      %1199 = vmatprep.subr.mxu0 0.0
      %1200 = vmatpush2.msra.mxu0 0.0
      %1201 = vmatprep.subr.mxu0 0.0
      %1202 = vmatpush2.msra.mxu0 0.0
      %1203 = vmatprep.subr.mxu0 0.0
      %1204 = vmatpush2.msra.mxu0 0.0
      %1205 = vmatprep.subr.mxu0 0.0
      %1206 = vmatpush2.msra.mxu0 0.0
      %1207 = vmatprep.subr.mxu0 0.0
      %1208 = vmatpush2.msra.mxu0 0.0
      %1209 = vmatprep.subr.mxu0 0.0
      %1210 = vmatpush2.msra.mxu0 0.0
      %1211 = vmatprep.subr.mxu0 0.0
      %1212 = vmatpush2.msra.mxu0 0.0
      %1213 = vmatprep.mubr.f32.mxu0 0.0
      %v1214 = vand.u32 %v354, 4294901760
      %1215 = vmatmul.mubr.f32.gmra.mxu0 %v1214
      %v1216 = vpop.f32.mrf.mxu0
      %v1217 = vadd.f32 %v1139, %v1216
      %v1218 = vpop.f32.mrf.mxu0
      %v1219 = vadd.f32 %v1141, %v1218
      %1220 = vdwg.mxu0
      %1221 = vmatprep.subr.mxu0 0.0
      %1222 = vmatpush1.msra.mxu0 0.0
      %1223 = vmatprep.subr.mxu0 0.0
      %1224 = vmatpush1.msra.mxu0 0.0
      %1225 = vmatprep.subr.mxu0 0.0
      %1226 = vmatpush1.msra.mxu0 0.0
      %1227 = vmatprep.subr.mxu0 0.0
      %1228 = vmatpush1.msra.mxu0 0.0
      %1229 = vmatprep.subr.mxu0 0.0
      %1230 = vmatpush1.msra.mxu0 0.0
      %1231 = vmatprep.subr.mxu0 0.0
      %1232 = vmatpush1.msra.mxu0 0.0
      %1233 = vmatprep.subr.mxu0 0.0
      %1234 = vmatpush1.msra.mxu0 0.0
      %1235 = vmatprep.subr.mxu0 0.0
      %1236 = vmatpush1.msra.mxu0 0.0
      %1237 = vmatprep.subr.mxu0 0.0
      %1238 = vmatpush1.msra.mxu0 0.0
      %1239 = vmatprep.subr.mxu0 0.0
      %1240 = vmatpush1.msra.mxu0 0.0
      %1241 = vmatprep.subr.mxu0 0.0
      %1242 = vmatpush1.msra.mxu0 0.0
      %1243 = vmatprep.subr.mxu0 0.0
      %1244 = vmatpush1.msra.mxu0 0.0
      %1245 = vmatprep.subr.mxu0 0.0
      %1246 = vmatpush1.msra.mxu0 0.0
      %1247 = vmatprep.subr.mxu0 0.0
      %1248 = vmatpush1.msra.mxu0 0.0
      %1249 = vmatprep.subr.mxu0 0.0
      %1250 = vmatpush1.msra.mxu0 0.0
      %v1251 = vand.u32 %v363, 4294901760
      %1252 = vmatprep.subr.mxu0 %v1251
      %v1253 = vand.u32 %v361, 4294901760
      %1254 = vmatpush1.msra.mxu0 %v1253
      %1255 = vmatprep.subr.mxu0 0.0
      %1256 = vmatpush2.msra.mxu0 0.0
      %1257 = vmatprep.subr.mxu0 0.0
      %1258 = vmatpush2.msra.mxu0 0.0
      %1259 = vmatprep.subr.mxu0 0.0
      %1260 = vmatpush2.msra.mxu0 0.0
      %1261 = vmatprep.subr.mxu0 0.0
      %1262 = vmatpush2.msra.mxu0 0.0
      %1263 = vmatprep.subr.mxu0 0.0
      %1264 = vmatpush2.msra.mxu0 0.0
      %1265 = vmatprep.subr.mxu0 0.0
      %1266 = vmatpush2.msra.mxu0 0.0
      %1267 = vmatprep.subr.mxu0 0.0
      %1268 = vmatpush2.msra.mxu0 0.0
      %1269 = vmatprep.subr.mxu0 0.0
      %1270 = vmatpush2.msra.mxu0 0.0
      %1271 = vmatprep.subr.mxu0 0.0
      %1272 = vmatpush2.msra.mxu0 0.0
      %1273 = vmatprep.subr.mxu0 0.0
      %1274 = vmatpush2.msra.mxu0 0.0
      %1275 = vmatprep.subr.mxu0 0.0
      %1276 = vmatpush2.msra.mxu0 0.0
      %1277 = vmatprep.subr.mxu0 0.0
      %1278 = vmatpush2.msra.mxu0 0.0
      %1279 = vmatprep.subr.mxu0 0.0
      %1280 = vmatpush2.msra.mxu0 0.0
      %1281 = vmatprep.subr.mxu0 0.0
      %1282 = vmatpush2.msra.mxu0 0.0
      %1283 = vmatprep.subr.mxu0 0.0
      %1284 = vmatpush2.msra.mxu0 0.0
      %1285 = vmatprep.subr.mxu0 0.0
      %1286 = vmatpush2.msra.mxu0 0.0
      %1287 = vmatprep.mubr.f32.mxu0 0.0
      %v1288 = vand.u32 %v354, 4294901760
      %1289 = vmatmul.mubr.f32.gmra.mxu0 %v1288
      %v1290 = vpop.f32.mrf.mxu0
      %v1291 = vadd.f32 %v1217, %v1290
      %v1292 = vpop.f32.mrf.mxu0
      %v1293 = vadd.f32 %v1219, %v1292
      %1294 = vdwg.mxu0
      %v1295 = vmax.f32 %v826, 0.0
      %v1296 = vmax.f32 %v828, 0.0
      %v1297 = vmax.f32 %v1291, 0.0
      %v1298 = vmax.f32 %v1293, 0.0
      %v1303 = vrot.slane %v1295, 4
      %v1304 = vrot.slane %v1296, 4
      %v1305 = vrot.slane %v1297, 4
      %v1306 = vrot.slane %v1298, 4
      %1311 = vrot.lane.b32.xlu0 %v1303, 17
      %v1312 = vpop.permute.xlu0 %1311
      %1313 = vrot.lane.b32.xlu0 %v1304, 17
      %v1314 = vpop.permute.xlu0 %1313
      %1315 = vrot.lane.b32.xlu0 %v1305, 17
      %v1316 = vpop.permute.xlu0 %1315
      %1317 = vrot.lane.b32.xlu0 %v1306, 17
      %v1318 = vpop.permute.xlu0 %1317
      %v1319 = vlaneseq
      %v1320 = vand.u32 %v1319, 127
      %vm1321 = vcmp.lt.s32.totalorder %v1320, 17
      %v1322 = vsel %vm1321, %v1316, %v1318
      %v1323 = vsel %vm1321, %v1314, %v1316
      %v1324 = vsel %vm1321, %v1312, %v1314
      %v1325 = vsel %vm1321, %v1318, %v1312
      %v1326 = vlaneseq
      %v1327 = vshrl.u32 %v1326, 7
      %v1328 = vsub.s32 0, %v1327
      %v1329 = vrot.slane %v338, %v1328
      %v1330 = vlaneseq
      %v1331 = vshrl.u32 %v1330, 7
      %v1332 = vsub.s32 0, %v1331
      %v1333 = vrot.slane %v339, %v1332
      %v1334 = vlaneseq
      %v1335 = vshrl.u32 %v1334, 7
      %v1336 = vsub.s32 0, %v1335
      %v1337 = vrot.slane %v340, %v1336
      %v1338 = vlaneseq
      %v1339 = vshrl.u32 %v1338, 7
      %v1340 = vsub.s32 0, %v1339
      %v1341 = vrot.slane %v341, %v1340
      %v1342 = vmul.f32 %v1325, %v1329
      %v1343 = vmul.f32 %v1324, %v1333
      %v1344 = vmul.f32 %v1323, %v1337
      %v1345 = vmul.f32 %v1322, %v1341
      %1346 = vrot.lane.b32.xlu0 %v1303, 16
      %v1347 = vpop.permute.xlu0 %1346
      %1348 = vrot.lane.b32.xlu0 %v1304, 16
      %v1349 = vpop.permute.xlu0 %1348
      %1350 = vrot.lane.b32.xlu0 %v1305, 16
      %v1351 = vpop.permute.xlu0 %1350
      %1352 = vrot.lane.b32.xlu0 %v1306, 16
      %v1353 = vpop.permute.xlu0 %1352
      %vm1354 = vcmp.lt.s32.totalorder %v1320, 16
      %v1355 = vsel %vm1354, %v1351, %v1353
      %v1356 = vsel %vm1354, %v1349, %v1351
      %v1357 = vsel %vm1354, %v1347, %v1349
      %v1358 = vsel %vm1354, %v1353, %v1347
      %v1359 = vlaneseq
      %v1360 = vshrl.u32 %v1359, 7
      %v1361 = vsub.s32 1, %v1360
      %v1362 = vrot.slane %v338, %v1361
      %v1363 = vlaneseq
      %v1364 = vshrl.u32 %v1363, 7
      %v1365 = vsub.s32 1, %v1364
      %v1366 = vrot.slane %v339, %v1365
      %v1367 = vlaneseq
      %v1368 = vshrl.u32 %v1367, 7
      %v1369 = vsub.s32 1, %v1368
      %v1370 = vrot.slane %v340, %v1369
      %v1371 = vlaneseq
      %v1372 = vshrl.u32 %v1371, 7
      %v1373 = vsub.s32 1, %v1372
      %v1374 = vrot.slane %v341, %v1373
      %v1375 = vmul.f32 %v1358, %v1362
      %v1376 = vmul.f32 %v1357, %v1366
      %v1377 = vmul.f32 %v1356, %v1370
      %v1378 = vmul.f32 %v1355, %v1374
      %1379 = vrot.lane.b32.xlu0 %v1303, 15
      %v1380 = vpop.permute.xlu0 %1379
      %1381 = vrot.lane.b32.xlu0 %v1304, 15
      %v1382 = vpop.permute.xlu0 %1381
      %1383 = vrot.lane.b32.xlu0 %v1305, 15
      %v1384 = vpop.permute.xlu0 %1383
      %1385 = vrot.lane.b32.xlu0 %v1306, 15
      %v1386 = vpop.permute.xlu0 %1385
      %vm1387 = vcmp.lt.s32.totalorder %v1320, 15
      %v1388 = vsel %vm1387, %v1384, %v1386
      %v1389 = vsel %vm1387, %v1382, %v1384
      %v1390 = vsel %vm1387, %v1380, %v1382
      %v1391 = vsel %vm1387, %v1386, %v1380
      %v1392 = vlaneseq
      %v1393 = vshrl.u32 %v1392, 7
      %v1394 = vsub.s32 2, %v1393
      %v1395 = vrot.slane %v338, %v1394
      %v1396 = vlaneseq
      %v1397 = vshrl.u32 %v1396, 7
      %v1398 = vsub.s32 2, %v1397
      %v1399 = vrot.slane %v339, %v1398
      %v1400 = vlaneseq
      %v1401 = vshrl.u32 %v1400, 7
      %v1402 = vsub.s32 2, %v1401
      %v1403 = vrot.slane %v340, %v1402
      %v1404 = vlaneseq
      %v1405 = vshrl.u32 %v1404, 7
      %v1406 = vsub.s32 2, %v1405
      %v1407 = vrot.slane %v341, %v1406
      %v1408 = vmul.f32 %v1391, %v1395
      %v1409 = vmul.f32 %v1390, %v1399
      %v1410 = vmul.f32 %v1389, %v1403
      %v1411 = vmul.f32 %v1388, %v1407
      %1412 = vrot.lane.b32.xlu0 %v1303, 1
      %v1413 = vpop.permute.xlu0 %1412
      %1414 = vrot.lane.b32.xlu0 %v1304, 1
      %v1415 = vpop.permute.xlu0 %1414
      %1416 = vrot.lane.b32.xlu0 %v1305, 1
      %v1417 = vpop.permute.xlu0 %1416
      %1418 = vrot.lane.b32.xlu0 %v1306, 1
      %v1419 = vpop.permute.xlu0 %1418
      %vm1420 = vcmp.lt.s32.totalorder %v1320, 1
      %v1421 = vsel %vm1420, %v1417, %v1419
      %v1422 = vsel %vm1420, %v1415, %v1417
      %v1423 = vsel %vm1420, %v1413, %v1415
      %v1424 = vsel %vm1420, %v1419, %v1413
      %v1425 = vlaneseq
      %v1426 = vshrl.u32 %v1425, 7
      %v1427 = vsub.s32 3, %v1426
      %v1428 = vrot.slane %v338, %v1427
      %v1429 = vlaneseq
      %v1430 = vshrl.u32 %v1429, 7
      %v1431 = vsub.s32 3, %v1430
      %v1432 = vrot.slane %v339, %v1431
      %v1433 = vlaneseq
      %v1434 = vshrl.u32 %v1433, 7
      %v1435 = vsub.s32 3, %v1434
      %v1436 = vrot.slane %v340, %v1435
      %v1437 = vlaneseq
      %v1438 = vshrl.u32 %v1437, 7
      %v1439 = vsub.s32 3, %v1438
      %v1440 = vrot.slane %v341, %v1439
      %v1441 = vmul.f32 %v1424, %v1428
      %v1442 = vmul.f32 %v1423, %v1432
      %v1443 = vmul.f32 %v1422, %v1436
      %v1444 = vmul.f32 %v1421, %v1440
      %1445 = vrot.lane.b32.xlu0 %v1303, 127
      %v1446 = vpop.permute.xlu0 %1445
      %1447 = vrot.lane.b32.xlu0 %v1304, 127
      %v1448 = vpop.permute.xlu0 %1447
      %1449 = vrot.lane.b32.xlu0 %v1305, 127
      %v1450 = vpop.permute.xlu0 %1449
      %1451 = vrot.lane.b32.xlu0 %v1306, 127
      %v1452 = vpop.permute.xlu0 %1451
      %vm1453 = vcmp.lt.s32.totalorder %v1320, 127
      %v1454 = vsel %vm1453, %v1450, %v1452
      %v1455 = vsel %vm1453, %v1448, %v1450
      %v1456 = vsel %vm1453, %v1446, %v1448
      %v1457 = vsel %vm1453, %v1452, %v1446
      %v1458 = vlaneseq
      %v1459 = vshrl.u32 %v1458, 7
      %v1460 = vsub.s32 5, %v1459
      %v1461 = vrot.slane %v338, %v1460
      %v1462 = vlaneseq
      %v1463 = vshrl.u32 %v1462, 7
      %v1464 = vsub.s32 5, %v1463
      %v1465 = vrot.slane %v339, %v1464
      %v1466 = vlaneseq
      %v1467 = vshrl.u32 %v1466, 7
      %v1468 = vsub.s32 5, %v1467
      %v1469 = vrot.slane %v340, %v1468
      %v1470 = vlaneseq
      %v1471 = vshrl.u32 %v1470, 7
      %v1472 = vsub.s32 5, %v1471
      %v1473 = vrot.slane %v341, %v1472
      %v1474 = vmul.f32 %v1456, %v1461
      %v1475 = vmul.f32 %v1455, %v1465
      %v1476 = vmul.f32 %v1454, %v1469
      %v1477 = vmul.f32 %v1457, %v1473
      %1478 = vrot.lane.b32.xlu0 %v1303, 113
      %v1479 = vpop.permute.xlu0 %1478
      %1480 = vrot.lane.b32.xlu0 %v1304, 113
      %v1481 = vpop.permute.xlu0 %1480
      %1482 = vrot.lane.b32.xlu0 %v1305, 113
      %v1483 = vpop.permute.xlu0 %1482
      %1484 = vrot.lane.b32.xlu0 %v1306, 113
      %v1485 = vpop.permute.xlu0 %1484
      %vm1486 = vcmp.lt.s32.totalorder %v1320, 113
      %v1487 = vsel %vm1486, %v1483, %v1485
      %v1488 = vsel %vm1486, %v1481, %v1483
      %v1489 = vsel %vm1486, %v1479, %v1481
      %v1490 = vsel %vm1486, %v1485, %v1479
      %v1491 = vlaneseq
      %v1492 = vshrl.u32 %v1491, 7
      %v1493 = vsub.s32 6, %v1492
      %v1494 = vrot.slane %v338, %v1493
      %v1495 = vlaneseq
      %v1496 = vshrl.u32 %v1495, 7
      %v1497 = vsub.s32 6, %v1496
      %v1498 = vrot.slane %v339, %v1497
      %v1499 = vlaneseq
      %v1500 = vshrl.u32 %v1499, 7
      %v1501 = vsub.s32 6, %v1500
      %v1502 = vrot.slane %v340, %v1501
      %v1503 = vlaneseq
      %v1504 = vshrl.u32 %v1503, 7
      %v1505 = vsub.s32 6, %v1504
      %v1506 = vrot.slane %v341, %v1505
      %v1507 = vmul.f32 %v1489, %v1494
      %v1508 = vmul.f32 %v1488, %v1498
      %v1509 = vmul.f32 %v1487, %v1502
      %v1510 = vmul.f32 %v1490, %v1506
      %1511 = vrot.lane.b32.xlu0 %v1303, 112
      %v1512 = vpop.permute.xlu0 %1511
      %1513 = vrot.lane.b32.xlu0 %v1304, 112
      %v1514 = vpop.permute.xlu0 %1513
      %1515 = vrot.lane.b32.xlu0 %v1305, 112
      %v1516 = vpop.permute.xlu0 %1515
      %1517 = vrot.lane.b32.xlu0 %v1306, 112
      %v1518 = vpop.permute.xlu0 %1517
      %vm1519 = vcmp.lt.s32.totalorder %v1320, 112
      %v1520 = vsel %vm1519, %v1516, %v1518
      %v1521 = vsel %vm1519, %v1514, %v1516
      %v1522 = vsel %vm1519, %v1512, %v1514
      %v1523 = vsel %vm1519, %v1518, %v1512
      %v1524 = vlaneseq
      %v1525 = vshrl.u32 %v1524, 7
      %v1526 = vsub.s32 7, %v1525
      %v1527 = vrot.slane %v338, %v1526
      %v1528 = vlaneseq
      %v1529 = vshrl.u32 %v1528, 7
      %v1530 = vsub.s32 7, %v1529
      %v1531 = vrot.slane %v339, %v1530
      %v1532 = vlaneseq
      %v1533 = vshrl.u32 %v1532, 7
      %v1534 = vsub.s32 7, %v1533
      %v1535 = vrot.slane %v340, %v1534
      %v1536 = vlaneseq
      %v1537 = vshrl.u32 %v1536, 7
      %v1538 = vsub.s32 7, %v1537
      %v1539 = vrot.slane %v341, %v1538
      %v1540 = vmul.f32 %v1522, %v1527
      %v1541 = vmul.f32 %v1521, %v1531
      %v1542 = vmul.f32 %v1520, %v1535
      %v1543 = vmul.f32 %v1523, %v1539
      %1544 = vrot.lane.b32.xlu0 %v1303, 111
      %v1545 = vpop.permute.xlu0 %1544
      %1546 = vrot.lane.b32.xlu0 %v1304, 111
      %v1547 = vpop.permute.xlu0 %1546
      %1548 = vrot.lane.b32.xlu0 %v1305, 111
      %v1549 = vpop.permute.xlu0 %1548
      %1550 = vrot.lane.b32.xlu0 %v1306, 111
      %v1551 = vpop.permute.xlu0 %1550
      %vm1552 = vcmp.lt.s32.totalorder %v1320, 111
      %v1553 = vsel %vm1552, %v1549, %v1551
      %v1554 = vsel %vm1552, %v1547, %v1549
      %v1555 = vsel %vm1552, %v1545, %v1547
      %v1556 = vsel %vm1552, %v1551, %v1545
      %v1557 = vlaneseq
      %v1558 = vshrl.u32 %v1557, 7
      %v1559 = vsub.s32 0, %v1558
      %v1560 = vrot.slane %v342, %v1559
      %v1561 = vlaneseq
      %v1562 = vshrl.u32 %v1561, 7
      %v1563 = vsub.s32 0, %v1562
      %v1564 = vrot.slane %v343, %v1563
      %v1565 = vlaneseq
      %v1566 = vshrl.u32 %v1565, 7
      %v1567 = vsub.s32 0, %v1566
      %v1568 = vrot.slane %v344, %v1567
      %v1569 = vlaneseq
      %v1570 = vshrl.u32 %v1569, 7
      %v1571 = vsub.s32 0, %v1570
      %v1572 = vrot.slane %v345, %v1571
      %v1573 = vmul.f32 %v1555, %v1560
      %v1574 = vmul.f32 %v1554, %v1564
      %v1575 = vmul.f32 %v1553, %v1568
      %v1576 = vmul.f32 %v1556, %v1572
      %v1581 = vrot.slane %v1375, 6
      %v1582 = vrot.slane %v1376, 6
      %v1583 = vrot.slane %v1377, 6
      %v1584 = vrot.slane %v1378, 6
      %v1593 = vrot.slane %v1408, 4
      %v1594 = vrot.slane %v1409, 4
      %v1595 = vrot.slane %v1410, 4
      %v1596 = vrot.slane %v1411, 4
      %v1605 = vrot.slane %v1441, 2
      %v1606 = vrot.slane %v1442, 2
      %v1607 = vrot.slane %v1443, 2
      %v1608 = vrot.slane %v1444, 2
      %v1617 = vrot.slane %v1474, 6
      %v1618 = vrot.slane %v1475, 6
      %v1619 = vrot.slane %v1476, 6
      %v1620 = vrot.slane %v1477, 6
      %v1629 = vrot.slane %v1507, 4
      %v1630 = vrot.slane %v1508, 4
      %v1631 = vrot.slane %v1509, 4
      %v1632 = vrot.slane %v1510, 4
      %v1641 = vrot.slane %v1540, 2
      %v1642 = vrot.slane %v1541, 2
      %v1643 = vrot.slane %v1542, 2
      %v1644 = vrot.slane %v1543, 2
      %vm1649 = vcmask 1041408
      %v1650 = vsel %vm1649, %v1342, %v1581
      %v1651 = vsel %vm1649, %v1343, %v1582
      %v1652 = vsel %vm1649, %v1344, %v1583
      %v1653 = vsel %vm1649, %v1345, %v1584
      %v1654 = vsel %vm356, %v1650, %v1593
      %v1655 = vsel %vm356, %v1651, %v1594
      %v1656 = vsel %vm356, %v1652, %v1595
      %v1657 = vsel %vm356, %v1653, %v1596
      %vm1658 = vcmask 1045504
      %v1659 = vsel %vm1658, %v1654, %v1605
      %v1660 = vsel %vm1658, %v1655, %v1606
      %v1661 = vsel %vm1658, %v1656, %v1607
      %v1662 = vsel %vm1658, %v1657, %v1608
      %v1663 = vsel %vm1649, %v1303, %v1617
      %v1664 = vsel %vm1649, %v1304, %v1618
      %v1665 = vsel %vm1649, %v1305, %v1619
      %v1666 = vsel %vm1649, %v1306, %v1620
      %v1667 = vsel %vm356, %v1663, %v1629
      %v1668 = vsel %vm356, %v1664, %v1630
      %v1669 = vsel %vm356, %v1665, %v1631
      %v1670 = vsel %vm356, %v1666, %v1632
      %v1671 = vsel %vm1658, %v1667, %v1641
      %v1672 = vsel %vm1658, %v1668, %v1642
      %v1673 = vsel %vm1658, %v1669, %v1643
      %v1674 = vsel %vm1658, %v1670, %v1644
      %v1675 = vpack.c.bf16 %v1671, %v1659
      %v1676 = vpack.c.bf16 %v1672, %v1660
      %v1677 = vpack.c.bf16 %v1673, %v1661
      %v1678 = vpack.c.bf16 %v1674, %v1662
      %v1679 = vpack.c.bf16 %v1573, %v1573
      %v1680 = vpack.c.bf16 %v1574, %v1574
      %v1681 = vpack.c.bf16 %v1575, %v1575
      %v1682 = vpack.c.bf16 %v1576, %v1576
      %v1683 = vld [vmem:[%s4] sm:$0xf]
      %1685 = vset.pattern.permute.xlu0 0
      %1686 = vperm.xlu0 %1685, %v334
      %v1687 = vpop.permute.xlu0 %1686
      %vm1689 = vcmask 146432
      %v1691 = vsel %vm1689, %v1683, 0
      %vm1693 = vcmask 1040384
      %v1695 = vsel %vm1693, %v1679, 0
      %v1698 = vsel %vm1693, %v1680, 0
      %v1701 = vsel %vm1693, %v1681, 0
      %v1704 = vsel %vm1693, %v1682, 0
      %1706 = vmatprep.subr.bf16.mxu0 0
      %1707 = vmatpush1.bf16.msra.mxu0 0
      %1708 = vmatprep.subr.bf16.mxu0 0
      %1709 = vmatpush1.bf16.msra.mxu0 0
      %1710 = vmatprep.subr.bf16.mxu0 0
      %1711 = vmatpush1.bf16.msra.mxu0 0
      %1712 = vmatprep.subr.bf16.mxu0 0
      %1713 = vmatpush1.bf16.msra.mxu0 0
      %1714 = vmatprep.subr.bf16.mxu0 0
      %1715 = vmatpush1.bf16.msra.mxu0 0
      %1716 = vmatprep.subr.bf16.mxu0 0
      %1717 = vmatpush1.bf16.msra.mxu0 0
      %1718 = vmatprep.subr.bf16.mxu0 %v1698
      %1719 = vmatpush1.bf16.msra.mxu0 %v1695
      %1720 = vmatprep.subr.bf16.mxu0 %v1676
      %1721 = vmatpush1.bf16.msra.mxu0 %v1675
      %1722 = vmatprep.subr.bf16.mxu0 0
      %1723 = vmatpush2.bf16.msra.mxu0 0
      %1724 = vmatprep.subr.bf16.mxu0 0
      %1725 = vmatpush2.bf16.msra.mxu0 0
      %1726 = vmatprep.subr.bf16.mxu0 0
      %1727 = vmatpush2.bf16.msra.mxu0 0
      %1728 = vmatprep.subr.bf16.mxu0 0
      %1729 = vmatpush2.bf16.msra.mxu0 0
      %1730 = vmatprep.subr.bf16.mxu0 0
      %1731 = vmatpush2.bf16.msra.mxu0 0
      %1732 = vmatprep.subr.bf16.mxu0 0
      %1733 = vmatpush2.bf16.msra.mxu0 0
      %1734 = vmatprep.subr.bf16.mxu0 0
      %1735 = vmatpush2.bf16.msra.mxu0 0
      %1736 = vmatprep.subr.bf16.mxu0 0
      %1737 = vmatpush2.bf16.msra.mxu0 0
      %1738 = vmatprep.mubr.bf16.mxu0 0
      %1739 = vmatmul.mubr.bf16.gmra.mxu0 %v1691
      %v1740 = vpop.f32.mrf.mxu0
      %v1741 = vadd.f32 %v1687, %v1740
      %v1742 = vpop.f32.mrf.mxu0
      %v1743 = vadd.f32 %v1687, %v1742
      %v1744 = vpop.f32.mrf.mxu0
      %v1745 = vpop.f32.mrf.mxu0
      %1746 = vdwg.mxu0
      %1747 = vmatprep.subr.bf16.mxu0 0
      %1748 = vmatpush1.bf16.msra.mxu0 0
      %1749 = vmatprep.subr.bf16.mxu0 0
      %1750 = vmatpush1.bf16.msra.mxu0 0
      %1751 = vmatprep.subr.bf16.mxu0 0
      %1752 = vmatpush1.bf16.msra.mxu0 0
      %1753 = vmatprep.subr.bf16.mxu0 0
      %1754 = vmatpush1.bf16.msra.mxu0 0
      %1755 = vmatprep.subr.bf16.mxu0 0
      %1756 = vmatpush1.bf16.msra.mxu0 0
      %1757 = vmatprep.subr.bf16.mxu0 0
      %1758 = vmatpush1.bf16.msra.mxu0 0
      %1759 = vmatprep.subr.bf16.mxu0 %v1704
      %1760 = vmatpush1.bf16.msra.mxu0 %v1701
      %1761 = vmatprep.subr.bf16.mxu0 %v1678
      %1762 = vmatpush1.bf16.msra.mxu0 %v1677
      %1763 = vmatprep.subr.bf16.mxu0 0
      %1764 = vmatpush2.bf16.msra.mxu0 0
      %1765 = vmatprep.subr.bf16.mxu0 0
      %1766 = vmatpush2.bf16.msra.mxu0 0
      %1767 = vmatprep.subr.bf16.mxu0 0
      %1768 = vmatpush2.bf16.msra.mxu0 0
      %1769 = vmatprep.subr.bf16.mxu0 0
      %1770 = vmatpush2.bf16.msra.mxu0 0
      %1771 = vmatprep.subr.bf16.mxu0 0
      %1772 = vmatpush2.bf16.msra.mxu0 0
      %1773 = vmatprep.subr.bf16.mxu0 0
      %1774 = vmatpush2.bf16.msra.mxu0 0
      %1775 = vmatprep.subr.bf16.mxu0 0
      %1776 = vmatpush2.bf16.msra.mxu0 0
      %1777 = vmatprep.subr.bf16.mxu0 0
      %1778 = vmatpush2.bf16.msra.mxu0 0
      %1779 = vmatprep.mubr.bf16.mxu0 0
      %1780 = vmatmul.mubr.bf16.gmra.mxu0 %v1691
      %v1781 = vpop.f32.mrf.mxu0
      %v1782 = vadd.f32 %v1687, %v1781
      %v1783 = vpop.f32.mrf.mxu0
      %v1784 = vadd.f32 %v1687, %v1783
      %v1785 = vpop.f32.mrf.mxu0
      %v1786 = vpop.f32.mrf.mxu0
      %1787 = vdwg.mxu0
      %v1788 = vmax.f32 %v1741, 0.0
      %v1789 = vmax.f32 %v1743, 0.0
      %v1790 = vmax.f32 %v1782, 0.0
      %v1791 = vmax.f32 %v1784, 0.0
      %v1792 = vld [vmem:[%s5] sm:$0xf]
      %v1793 = vpack.c.bf16 %v1788, %v1788
      %v1794 = vpack.c.bf16 %v1789, %v1789
      %v1795 = vpack.c.bf16 %v1790, %v1790
      %v1796 = vpack.c.bf16 %v1791, %v1791
      %1798 = vset.pattern.permute.xlu0 0
      %1799 = vperm.xlu0 %1798, %v335
      %v1800 = vpop.permute.xlu0 %1799
      %vm1802 = vcmask 64512
      %v1804 = vsel %vm1802, %v1792, 0
      %v1807 = vsel %vm356, %v1793, 0
      %v1810 = vsel %vm356, %v1794, 0
      %v1813 = vsel %vm356, %v1795, 0
      %v1816 = vsel %vm356, %v1796, 0
      %1818 = vmatprep.subr.bf16.mxu0 0
      %1819 = vmatpush1.bf16.msra.mxu0 0
      %1820 = vmatprep.subr.bf16.mxu0 0
      %1821 = vmatpush1.bf16.msra.mxu0 0
      %1822 = vmatprep.subr.bf16.mxu0 0
      %1823 = vmatpush1.bf16.msra.mxu0 0
      %1824 = vmatprep.subr.bf16.mxu0 0
      %1825 = vmatpush1.bf16.msra.mxu0 0
      %1826 = vmatprep.subr.bf16.mxu0 0
      %1827 = vmatpush1.bf16.msra.mxu0 0
      %1828 = vmatprep.subr.bf16.mxu0 0
      %1829 = vmatpush1.bf16.msra.mxu0 0
      %1830 = vmatprep.subr.bf16.mxu0 0
      %1831 = vmatpush1.bf16.msra.mxu0 0
      %1832 = vmatprep.subr.bf16.mxu0 %v1810
      %1833 = vmatpush1.bf16.msra.mxu0 %v1807
      %1834 = vmatprep.subr.bf16.mxu0 0
      %1835 = vmatpush2.bf16.msra.mxu0 0
      %1836 = vmatprep.subr.bf16.mxu0 0
      %1837 = vmatpush2.bf16.msra.mxu0 0
      %1838 = vmatprep.subr.bf16.mxu0 0
      %1839 = vmatpush2.bf16.msra.mxu0 0
      %1840 = vmatprep.subr.bf16.mxu0 0
      %1841 = vmatpush2.bf16.msra.mxu0 0
      %1842 = vmatprep.subr.bf16.mxu0 0
      %1843 = vmatpush2.bf16.msra.mxu0 0
      %1844 = vmatprep.subr.bf16.mxu0 0
      %1845 = vmatpush2.bf16.msra.mxu0 0
      %1846 = vmatprep.subr.bf16.mxu0 0
      %1847 = vmatpush2.bf16.msra.mxu0 0
      %1848 = vmatprep.subr.bf16.mxu0 0
      %1849 = vmatpush2.bf16.msra.mxu0 0
      %1850 = vmatprep.mubr.bf16.mxu0 0
      %1851 = vmatmul.mubr.bf16.gmra.mxu0 %v1804
      %v1852 = vpop.f32.mrf.mxu0
      %v1853 = vadd.f32 %v1800, %v1852
      %v1854 = vpop.f32.mrf.mxu0
      %v1855 = vadd.f32 %v1800, %v1854
      %v1856 = vpop.f32.mrf.mxu0
      %v1857 = vpop.f32.mrf.mxu0
      %1858 = vdwg.mxu0
      %1859 = vmatprep.subr.bf16.mxu0 0
      %1860 = vmatpush1.bf16.msra.mxu0 0
      %1861 = vmatprep.subr.bf16.mxu0 0
      %1862 = vmatpush1.bf16.msra.mxu0 0
      %1863 = vmatprep.subr.bf16.mxu0 0
      %1864 = vmatpush1.bf16.msra.mxu0 0
      %1865 = vmatprep.subr.bf16.mxu0 0
      %1866 = vmatpush1.bf16.msra.mxu0 0
      %1867 = vmatprep.subr.bf16.mxu0 0
      %1868 = vmatpush1.bf16.msra.mxu0 0
      %1869 = vmatprep.subr.bf16.mxu0 0
      %1870 = vmatpush1.bf16.msra.mxu0 0
      %1871 = vmatprep.subr.bf16.mxu0 0
      %1872 = vmatpush1.bf16.msra.mxu0 0
      %1873 = vmatprep.subr.bf16.mxu0 %v1816
      %1874 = vmatpush1.bf16.msra.mxu0 %v1813
      %1875 = vmatprep.subr.bf16.mxu0 0
      %1876 = vmatpush2.bf16.msra.mxu0 0
      %1877 = vmatprep.subr.bf16.mxu0 0
      %1878 = vmatpush2.bf16.msra.mxu0 0
      %1879 = vmatprep.subr.bf16.mxu0 0
      %1880 = vmatpush2.bf16.msra.mxu0 0
      %1881 = vmatprep.subr.bf16.mxu0 0
      %1882 = vmatpush2.bf16.msra.mxu0 0
      %1883 = vmatprep.subr.bf16.mxu0 0
      %1884 = vmatpush2.bf16.msra.mxu0 0
      %1885 = vmatprep.subr.bf16.mxu0 0
      %1886 = vmatpush2.bf16.msra.mxu0 0
      %1887 = vmatprep.subr.bf16.mxu0 0
      %1888 = vmatpush2.bf16.msra.mxu0 0
      %1889 = vmatprep.subr.bf16.mxu0 0
      %1890 = vmatpush2.bf16.msra.mxu0 0
      %1891 = vmatprep.mubr.bf16.mxu0 0
      %1892 = vmatmul.mubr.bf16.gmra.mxu0 %v1804
      %v1893 = vpop.f32.mrf.mxu0
      %v1894 = vadd.f32 %v1800, %v1893
      %v1895 = vpop.f32.mrf.mxu0
      %v1896 = vadd.f32 %v1800, %v1895
      %v1897 = vpop.f32.mrf.mxu0
      %v1898 = vpop.f32.mrf.mxu0
      %1899 = vdwg.mxu0
      %v1900 = vmax.f32 %v1853, 0.0
      %v1901 = vmax.f32 %v1855, 0.0
      %v1902 = vmax.f32 %v1894, 0.0
      %v1903 = vmax.f32 %v1896, 0.0
      %1904 = vrot.lane.b32.xlu0 %v1900, 17
      %v1905 = vpop.permute.xlu0 %1904
      %1906 = vrot.lane.b32.xlu0 %v1901, 17
      %v1907 = vpop.permute.xlu0 %1906
      %1908 = vrot.lane.b32.xlu0 %v1902, 17
      %v1909 = vpop.permute.xlu0 %1908
      %1910 = vrot.lane.b32.xlu0 %v1903, 17
      %v1911 = vpop.permute.xlu0 %1910
      %v1912 = vsel %vm1321, %v1909, %v1911
      %v1913 = vsel %vm1321, %v1907, %v1909
      %v1914 = vsel %vm1321, %v1905, %v1907
      %v1915 = vsel %vm1321, %v1911, %v1905
      %v1916 = vmul.f32 %v1915, %v1329
      %v1917 = vmul.f32 %v1914, %v1333
      %v1918 = vmul.f32 %v1913, %v1337
      %v1919 = vmul.f32 %v1912, %v1341
      %1920 = vrot.lane.b32.xlu0 %v1900, 16
      %v1921 = vpop.permute.xlu0 %1920
      %1922 = vrot.lane.b32.xlu0 %v1901, 16
      %v1923 = vpop.permute.xlu0 %1922
      %1924 = vrot.lane.b32.xlu0 %v1902, 16
      %v1925 = vpop.permute.xlu0 %1924
      %1926 = vrot.lane.b32.xlu0 %v1903, 16
      %v1927 = vpop.permute.xlu0 %1926
      %v1928 = vsel %vm1354, %v1925, %v1927
      %v1929 = vsel %vm1354, %v1923, %v1925
      %v1930 = vsel %vm1354, %v1921, %v1923
      %v1931 = vsel %vm1354, %v1927, %v1921
      %v1932 = vmul.f32 %v1931, %v1362
      %v1933 = vmul.f32 %v1930, %v1366
      %v1934 = vmul.f32 %v1929, %v1370
      %v1935 = vmul.f32 %v1928, %v1374
      %1936 = vrot.lane.b32.xlu0 %v1900, 15
      %v1937 = vpop.permute.xlu0 %1936
      %1938 = vrot.lane.b32.xlu0 %v1901, 15
      %v1939 = vpop.permute.xlu0 %1938
      %1940 = vrot.lane.b32.xlu0 %v1902, 15
      %v1941 = vpop.permute.xlu0 %1940
      %1942 = vrot.lane.b32.xlu0 %v1903, 15
      %v1943 = vpop.permute.xlu0 %1942
      %v1944 = vsel %vm1387, %v1941, %v1943
      %v1945 = vsel %vm1387, %v1939, %v1941
      %v1946 = vsel %vm1387, %v1937, %v1939
      %v1947 = vsel %vm1387, %v1943, %v1937
      %v1948 = vmul.f32 %v1947, %v1395
      %v1949 = vmul.f32 %v1946, %v1399
      %v1950 = vmul.f32 %v1945, %v1403
      %v1951 = vmul.f32 %v1944, %v1407
      %1952 = vrot.lane.b32.xlu0 %v1900, 1
      %v1953 = vpop.permute.xlu0 %1952
      %1954 = vrot.lane.b32.xlu0 %v1901, 1
      %v1955 = vpop.permute.xlu0 %1954
      %1956 = vrot.lane.b32.xlu0 %v1902, 1
      %v1957 = vpop.permute.xlu0 %1956
      %1958 = vrot.lane.b32.xlu0 %v1903, 1
      %v1959 = vpop.permute.xlu0 %1958
      %v1960 = vsel %vm1420, %v1957, %v1959
      %v1961 = vsel %vm1420, %v1955, %v1957
      %v1962 = vsel %vm1420, %v1953, %v1955
      %v1963 = vsel %vm1420, %v1959, %v1953
      %v1964 = vmul.f32 %v1963, %v1428
      %v1965 = vmul.f32 %v1962, %v1432
      %v1966 = vmul.f32 %v1961, %v1436
      %v1967 = vmul.f32 %v1960, %v1440
      %1968 = vrot.lane.b32.xlu0 %v1900, 127
      %v1969 = vpop.permute.xlu0 %1968
      %1970 = vrot.lane.b32.xlu0 %v1901, 127
      %v1971 = vpop.permute.xlu0 %1970
      %1972 = vrot.lane.b32.xlu0 %v1902, 127
      %v1973 = vpop.permute.xlu0 %1972
      %1974 = vrot.lane.b32.xlu0 %v1903, 127
      %v1975 = vpop.permute.xlu0 %1974
      %v1976 = vsel %vm1453, %v1973, %v1975
      %v1977 = vsel %vm1453, %v1971, %v1973
      %v1978 = vsel %vm1453, %v1969, %v1971
      %v1979 = vsel %vm1453, %v1975, %v1969
      %v1980 = vmul.f32 %v1978, %v1461
      %v1981 = vmul.f32 %v1977, %v1465
      %v1982 = vmul.f32 %v1976, %v1469
      %v1983 = vmul.f32 %v1979, %v1473
      %1984 = vrot.lane.b32.xlu0 %v1900, 113
      %v1985 = vpop.permute.xlu0 %1984
      %1986 = vrot.lane.b32.xlu0 %v1901, 113
      %v1987 = vpop.permute.xlu0 %1986
      %1988 = vrot.lane.b32.xlu0 %v1902, 113
      %v1989 = vpop.permute.xlu0 %1988
      %1990 = vrot.lane.b32.xlu0 %v1903, 113
      %v1991 = vpop.permute.xlu0 %1990
      %v1992 = vsel %vm1486, %v1989, %v1991
      %v1993 = vsel %vm1486, %v1987, %v1989
      %v1994 = vsel %vm1486, %v1985, %v1987
      %v1995 = vsel %vm1486, %v1991, %v1985
      %v1996 = vmul.f32 %v1994, %v1494
      %v1997 = vmul.f32 %v1993, %v1498
      %v1998 = vmul.f32 %v1992, %v1502
      %v1999 = vmul.f32 %v1995, %v1506
      %2000 = vrot.lane.b32.xlu0 %v1900, 112
      %v2001 = vpop.permute.xlu0 %2000
      %2002 = vrot.lane.b32.xlu0 %v1901, 112
      %v2003 = vpop.permute.xlu0 %2002
      %2004 = vrot.lane.b32.xlu0 %v1902, 112
      %v2005 = vpop.permute.xlu0 %2004
      %2006 = vrot.lane.b32.xlu0 %v1903, 112
      %v2007 = vpop.permute.xlu0 %2006
      %v2008 = vsel %vm1519, %v2005, %v2007
      %v2009 = vsel %vm1519, %v2003, %v2005
      %v2010 = vsel %vm1519, %v2001, %v2003
      %v2011 = vsel %vm1519, %v2007, %v2001
      %v2012 = vmul.f32 %v2010, %v1527
      %v2013 = vmul.f32 %v2009, %v1531
      %v2014 = vmul.f32 %v2008, %v1535
      %v2015 = vmul.f32 %v2011, %v1539
      %2016 = vrot.lane.b32.xlu0 %v1900, 111
      %v2017 = vpop.permute.xlu0 %2016
      %2018 = vrot.lane.b32.xlu0 %v1901, 111
      %v2019 = vpop.permute.xlu0 %2018
      %2020 = vrot.lane.b32.xlu0 %v1902, 111
      %v2021 = vpop.permute.xlu0 %2020
      %2022 = vrot.lane.b32.xlu0 %v1903, 111
      %v2023 = vpop.permute.xlu0 %2022
      %v2024 = vsel %vm1552, %v2021, %v2023
      %v2025 = vsel %vm1552, %v2019, %v2021
      %v2026 = vsel %vm1552, %v2017, %v2019
      %v2027 = vsel %vm1552, %v2023, %v2017
      %v2028 = vmul.f32 %v2026, %v1560
      %v2029 = vmul.f32 %v2025, %v1564
      %v2030 = vmul.f32 %v2024, %v1568
      %v2031 = vmul.f32 %v2027, %v1572
      %v2032 = vld [vmem:[%s6] sm:$0xf]
      %2034 = vset.pattern.permute.xlu0 0
      %2035 = vperm.xlu0 %2034, %v336
      %v2036 = vpop.permute.xlu0 %2035
      %vm2038 = vcmask 588800
      %v2040 = vsel %vm2038, %v2032, 0
      %2042 = vmatprep.subr.mxu0 0.0
      %2043 = vmatpush1.msra.mxu0 0.0
      %2044 = vmatprep.subr.mxu0 0.0
      %2045 = vmatpush1.msra.mxu0 0.0
      %2046 = vmatprep.subr.mxu0 0.0
      %2047 = vmatpush1.msra.mxu0 0.0
      %2048 = vmatprep.subr.mxu0 0.0
      %2049 = vmatpush1.msra.mxu0 0.0
      %2050 = vmatprep.subr.mxu0 0.0
      %2051 = vmatpush1.msra.mxu0 0.0
      %2052 = vmatprep.subr.mxu0 0.0
      %2053 = vmatpush1.msra.mxu0 0.0
      %2054 = vmatprep.subr.mxu0 0.0
      %2055 = vmatpush1.msra.mxu0 0.0
      %v2056 = vand.u32 %v2029, 4294901760
      %2057 = vmatprep.subr.mxu0 %v2056
      %v2058 = vand.u32 %v2028, 4294901760
      %2059 = vmatpush1.msra.mxu0 %v2058
      %v2060 = vand.u32 %v2013, 4294901760
      %2061 = vmatprep.subr.mxu0 %v2060
      %v2062 = vand.u32 %v2012, 4294901760
      %2063 = vmatpush1.msra.mxu0 %v2062
      %v2064 = vand.u32 %v1997, 4294901760
      %2065 = vmatprep.subr.mxu0 %v2064
      %v2066 = vand.u32 %v1996, 4294901760
      %2067 = vmatpush1.msra.mxu0 %v2066
      %v2068 = vand.u32 %v1981, 4294901760
      %2069 = vmatprep.subr.mxu0 %v2068
      %v2070 = vand.u32 %v1980, 4294901760
      %2071 = vmatpush1.msra.mxu0 %v2070
      %v2072 = vand.u32 %v1901, 4294901760
      %2073 = vmatprep.subr.mxu0 %v2072
      %v2074 = vand.u32 %v1900, 4294901760
      %2075 = vmatpush1.msra.mxu0 %v2074
      %v2076 = vand.u32 %v1965, 4294901760
      %2077 = vmatprep.subr.mxu0 %v2076
      %v2078 = vand.u32 %v1964, 4294901760
      %2079 = vmatpush1.msra.mxu0 %v2078
      %v2080 = vand.u32 %v1949, 4294901760
      %2081 = vmatprep.subr.mxu0 %v2080
      %v2082 = vand.u32 %v1948, 4294901760
      %2083 = vmatpush1.msra.mxu0 %v2082
      %v2084 = vand.u32 %v1933, 4294901760
      %2085 = vmatprep.subr.mxu0 %v2084
      %v2086 = vand.u32 %v1932, 4294901760
      %2087 = vmatpush1.msra.mxu0 %v2086
      %v2088 = vand.u32 %v1917, 4294901760
      %2089 = vmatprep.subr.mxu0 %v2088
      %v2090 = vand.u32 %v1916, 4294901760
      %2091 = vmatpush1.msra.mxu0 %v2090
      %2092 = vmatprep.subr.mxu0 0.0
      %2093 = vmatpush2.msra.mxu0 0.0
      %2094 = vmatprep.subr.mxu0 0.0
      %2095 = vmatpush2.msra.mxu0 0.0
      %2096 = vmatprep.subr.mxu0 0.0
      %2097 = vmatpush2.msra.mxu0 0.0
      %2098 = vmatprep.subr.mxu0 0.0
      %2099 = vmatpush2.msra.mxu0 0.0
      %2100 = vmatprep.subr.mxu0 0.0
      %2101 = vmatpush2.msra.mxu0 0.0
      %2102 = vmatprep.subr.mxu0 0.0
      %2103 = vmatpush2.msra.mxu0 0.0
      %2104 = vmatprep.subr.mxu0 0.0
      %2105 = vmatpush2.msra.mxu0 0.0
      %2106 = vmatprep.subr.mxu0 0.0
      %2107 = vmatpush2.msra.mxu0 0.0
      %2108 = vmatprep.subr.mxu0 0.0
      %2109 = vmatpush2.msra.mxu0 0.0
      %2110 = vmatprep.subr.mxu0 0.0
      %2111 = vmatpush2.msra.mxu0 0.0
      %2112 = vmatprep.subr.mxu0 0.0
      %2113 = vmatpush2.msra.mxu0 0.0
      %2114 = vmatprep.subr.mxu0 0.0
      %2115 = vmatpush2.msra.mxu0 0.0
      %2116 = vmatprep.subr.mxu0 0.0
      %2117 = vmatpush2.msra.mxu0 0.0
      %2118 = vmatprep.subr.mxu0 0.0
      %2119 = vmatpush2.msra.mxu0 0.0
      %2120 = vmatprep.subr.mxu0 0.0
      %2121 = vmatpush2.msra.mxu0 0.0
      %2122 = vmatprep.subr.mxu0 0.0
      %2123 = vmatpush2.msra.mxu0 0.0
      %2124 = vmatprep.mubr.f32.mxu0 0.0
      %v2125 = vand.u32 %v2040, 4294901760
      %v2126 = vsub.f32 %v2040, %v2125
      %v2127 = vand.u32 %v2126, 4294901760
      %v2128 = vsub.f32 %v2126, %v2127
      %v2129 = vand.u32 %v2128, 4294901760
      %2130 = vmatmul.mubr.f32.gmra.mxu0 %v2129
      %v2131 = vpop.f32.mrf.mxu0
      %v2132 = vadd.f32 %v2036, %v2131
      %v2133 = vpop.f32.mrf.mxu0
      %v2134 = vadd.f32 %v2036, %v2133
      %2135 = vdwg.mxu0
      %2136 = vmatprep.subr.mxu0 0.0
      %2137 = vmatpush1.msra.mxu0 0.0
      %2138 = vmatprep.subr.mxu0 0.0
      %2139 = vmatpush1.msra.mxu0 0.0
      %2140 = vmatprep.subr.mxu0 0.0
      %2141 = vmatpush1.msra.mxu0 0.0
      %2142 = vmatprep.subr.mxu0 0.0
      %2143 = vmatpush1.msra.mxu0 0.0
      %2144 = vmatprep.subr.mxu0 0.0
      %2145 = vmatpush1.msra.mxu0 0.0
      %2146 = vmatprep.subr.mxu0 0.0
      %2147 = vmatpush1.msra.mxu0 0.0
      %2148 = vmatprep.subr.mxu0 0.0
      %2149 = vmatpush1.msra.mxu0 0.0
      %v2150 = vand.u32 %v2029, 4294901760
      %v2151 = vsub.f32 %v2029, %v2150
      %v2152 = vand.u32 %v2151, 4294901760
      %v2153 = vsub.f32 %v2151, %v2152
      %v2154 = vand.u32 %v2153, 4294901760
      %2155 = vmatprep.subr.mxu0 %v2154
      %v2156 = vand.u32 %v2028, 4294901760
      %v2157 = vsub.f32 %v2028, %v2156
      %v2158 = vand.u32 %v2157, 4294901760
      %v2159 = vsub.f32 %v2157, %v2158
      %v2160 = vand.u32 %v2159, 4294901760
      %2161 = vmatpush1.msra.mxu0 %v2160
      %v2162 = vand.u32 %v2013, 4294901760
      %v2163 = vsub.f32 %v2013, %v2162
      %v2164 = vand.u32 %v2163, 4294901760
      %v2165 = vsub.f32 %v2163, %v2164
      %v2166 = vand.u32 %v2165, 4294901760
      %2167 = vmatprep.subr.mxu0 %v2166
      %v2168 = vand.u32 %v2012, 4294901760
      %v2169 = vsub.f32 %v2012, %v2168
      %v2170 = vand.u32 %v2169, 4294901760
      %v2171 = vsub.f32 %v2169, %v2170
      %v2172 = vand.u32 %v2171, 4294901760
      %2173 = vmatpush1.msra.mxu0 %v2172
      %v2174 = vand.u32 %v1997, 4294901760
      %v2175 = vsub.f32 %v1997, %v2174
      %v2176 = vand.u32 %v2175, 4294901760
      %v2177 = vsub.f32 %v2175, %v2176
      %v2178 = vand.u32 %v2177, 4294901760
      %2179 = vmatprep.subr.mxu0 %v2178
      %v2180 = vand.u32 %v1996, 4294901760
      %v2181 = vsub.f32 %v1996, %v2180
      %v2182 = vand.u32 %v2181, 4294901760
      %v2183 = vsub.f32 %v2181, %v2182
      %v2184 = vand.u32 %v2183, 4294901760
      %2185 = vmatpush1.msra.mxu0 %v2184
      %v2186 = vand.u32 %v1981, 4294901760
      %v2187 = vsub.f32 %v1981, %v2186
      %v2188 = vand.u32 %v2187, 4294901760
      %v2189 = vsub.f32 %v2187, %v2188
      %v2190 = vand.u32 %v2189, 4294901760
      %2191 = vmatprep.subr.mxu0 %v2190
      %v2192 = vand.u32 %v1980, 4294901760
      %v2193 = vsub.f32 %v1980, %v2192
      %v2194 = vand.u32 %v2193, 4294901760
      %v2195 = vsub.f32 %v2193, %v2194
      %v2196 = vand.u32 %v2195, 4294901760
      %2197 = vmatpush1.msra.mxu0 %v2196
      %v2198 = vand.u32 %v1901, 4294901760
      %v2199 = vsub.f32 %v1901, %v2198
      %v2200 = vand.u32 %v2199, 4294901760
      %v2201 = vsub.f32 %v2199, %v2200
      %v2202 = vand.u32 %v2201, 4294901760
      %2203 = vmatprep.subr.mxu0 %v2202
      %v2204 = vand.u32 %v1900, 4294901760
      %v2205 = vsub.f32 %v1900, %v2204
      %v2206 = vand.u32 %v2205, 4294901760
      %v2207 = vsub.f32 %v2205, %v2206
      %v2208 = vand.u32 %v2207, 4294901760
      %2209 = vmatpush1.msra.mxu0 %v2208
      %v2210 = vand.u32 %v1965, 4294901760
      %v2211 = vsub.f32 %v1965, %v2210
      %v2212 = vand.u32 %v2211, 4294901760
      %v2213 = vsub.f32 %v2211, %v2212
      %v2214 = vand.u32 %v2213, 4294901760
      %2215 = vmatprep.subr.mxu0 %v2214
      %v2216 = vand.u32 %v1964, 4294901760
      %v2217 = vsub.f32 %v1964, %v2216
      %v2218 = vand.u32 %v2217, 4294901760
      %v2219 = vsub.f32 %v2217, %v2218
      %v2220 = vand.u32 %v2219, 4294901760
      %2221 = vmatpush1.msra.mxu0 %v2220
      %v2222 = vand.u32 %v1949, 4294901760
      %v2223 = vsub.f32 %v1949, %v2222
      %v2224 = vand.u32 %v2223, 4294901760
      %v2225 = vsub.f32 %v2223, %v2224
      %v2226 = vand.u32 %v2225, 4294901760
      %2227 = vmatprep.subr.mxu0 %v2226
      %v2228 = vand.u32 %v1948, 4294901760
      %v2229 = vsub.f32 %v1948, %v2228
      %v2230 = vand.u32 %v2229, 4294901760
      %v2231 = vsub.f32 %v2229, %v2230
      %v2232 = vand.u32 %v2231, 4294901760
      %2233 = vmatpush1.msra.mxu0 %v2232
      %v2234 = vand.u32 %v1933, 4294901760
      %v2235 = vsub.f32 %v1933, %v2234
      %v2236 = vand.u32 %v2235, 4294901760
      %v2237 = vsub.f32 %v2235, %v2236
      %v2238 = vand.u32 %v2237, 4294901760
      %2239 = vmatprep.subr.mxu0 %v2238
      %v2240 = vand.u32 %v1932, 4294901760
      %v2241 = vsub.f32 %v1932, %v2240
      %v2242 = vand.u32 %v2241, 4294901760
      %v2243 = vsub.f32 %v2241, %v2242
      %v2244 = vand.u32 %v2243, 4294901760
      %2245 = vmatpush1.msra.mxu0 %v2244
      %v2246 = vand.u32 %v1917, 4294901760
      %v2247 = vsub.f32 %v1917, %v2246
      %v2248 = vand.u32 %v2247, 4294901760
      %v2249 = vsub.f32 %v2247, %v2248
      %v2250 = vand.u32 %v2249, 4294901760
      %2251 = vmatprep.subr.mxu0 %v2250
      %v2252 = vand.u32 %v1916, 4294901760
      %v2253 = vsub.f32 %v1916, %v2252
      %v2254 = vand.u32 %v2253, 4294901760
      %v2255 = vsub.f32 %v2253, %v2254
      %v2256 = vand.u32 %v2255, 4294901760
      %2257 = vmatpush1.msra.mxu0 %v2256
      %2258 = vmatprep.subr.mxu0 0.0
      %2259 = vmatpush2.msra.mxu0 0.0
      %2260 = vmatprep.subr.mxu0 0.0
      %2261 = vmatpush2.msra.mxu0 0.0
      %2262 = vmatprep.subr.mxu0 0.0
      %2263 = vmatpush2.msra.mxu0 0.0
      %2264 = vmatprep.subr.mxu0 0.0
      %2265 = vmatpush2.msra.mxu0 0.0
      %2266 = vmatprep.subr.mxu0 0.0
      %2267 = vmatpush2.msra.mxu0 0.0
      %2268 = vmatprep.subr.mxu0 0.0
      %2269 = vmatpush2.msra.mxu0 0.0
      %2270 = vmatprep.subr.mxu0 0.0
      %2271 = vmatpush2.msra.mxu0 0.0
      %2272 = vmatprep.subr.mxu0 0.0
      %2273 = vmatpush2.msra.mxu0 0.0
      %2274 = vmatprep.subr.mxu0 0.0
      %2275 = vmatpush2.msra.mxu0 0.0
      %2276 = vmatprep.subr.mxu0 0.0
      %2277 = vmatpush2.msra.mxu0 0.0
      %2278 = vmatprep.subr.mxu0 0.0
      %2279 = vmatpush2.msra.mxu0 0.0
      %2280 = vmatprep.subr.mxu0 0.0
      %2281 = vmatpush2.msra.mxu0 0.0
      %2282 = vmatprep.subr.mxu0 0.0
      %2283 = vmatpush2.msra.mxu0 0.0
      %2284 = vmatprep.subr.mxu0 0.0
      %2285 = vmatpush2.msra.mxu0 0.0
      %2286 = vmatprep.subr.mxu0 0.0
      %2287 = vmatpush2.msra.mxu0 0.0
      %2288 = vmatprep.subr.mxu0 0.0
      %2289 = vmatpush2.msra.mxu0 0.0
      %2290 = vmatprep.mubr.f32.mxu0 0.0
      %v2291 = vand.u32 %v2040, 4294901760
      %2292 = vmatmul.mubr.f32.gmra.mxu0 %v2291
      %v2293 = vpop.f32.mrf.mxu0
      %v2294 = vadd.f32 %v2132, %v2293
      %v2295 = vpop.f32.mrf.mxu0
      %v2296 = vadd.f32 %v2134, %v2295
      %2297 = vdwg.mxu0
      %2298 = vmatprep.subr.mxu0 0.0
      %2299 = vmatpush1.msra.mxu0 0.0
      %2300 = vmatprep.subr.mxu0 0.0
      %2301 = vmatpush1.msra.mxu0 0.0
      %2302 = vmatprep.subr.mxu0 0.0
      %2303 = vmatpush1.msra.mxu0 0.0
      %2304 = vmatprep.subr.mxu0 0.0
      %2305 = vmatpush1.msra.mxu0 0.0
      %2306 = vmatprep.subr.mxu0 0.0
      %2307 = vmatpush1.msra.mxu0 0.0
      %2308 = vmatprep.subr.mxu0 0.0
      %2309 = vmatpush1.msra.mxu0 0.0
      %2310 = vmatprep.subr.mxu0 0.0
      %2311 = vmatpush1.msra.mxu0 0.0
      %v2312 = vand.u32 %v2029, 4294901760
      %v2313 = vsub.f32 %v2029, %v2312
      %2314 = vmatprep.subr.mxu0 %v2313
      %v2315 = vand.u32 %v2028, 4294901760
      %v2316 = vsub.f32 %v2028, %v2315
      %2317 = vmatpush1.msra.mxu0 %v2316
      %v2318 = vand.u32 %v2013, 4294901760
      %v2319 = vsub.f32 %v2013, %v2318
      %2320 = vmatprep.subr.mxu0 %v2319
      %v2321 = vand.u32 %v2012, 4294901760
      %v2322 = vsub.f32 %v2012, %v2321
      %2323 = vmatpush1.msra.mxu0 %v2322
      %v2324 = vand.u32 %v1997, 4294901760
      %v2325 = vsub.f32 %v1997, %v2324
      %2326 = vmatprep.subr.mxu0 %v2325
      %v2327 = vand.u32 %v1996, 4294901760
      %v2328 = vsub.f32 %v1996, %v2327
      %2329 = vmatpush1.msra.mxu0 %v2328
      %v2330 = vand.u32 %v1981, 4294901760
      %v2331 = vsub.f32 %v1981, %v2330
      %2332 = vmatprep.subr.mxu0 %v2331
      %v2333 = vand.u32 %v1980, 4294901760
      %v2334 = vsub.f32 %v1980, %v2333
      %2335 = vmatpush1.msra.mxu0 %v2334
      %v2336 = vand.u32 %v1901, 4294901760
      %v2337 = vsub.f32 %v1901, %v2336
      %2338 = vmatprep.subr.mxu0 %v2337
      %v2339 = vand.u32 %v1900, 4294901760
      %v2340 = vsub.f32 %v1900, %v2339
      %2341 = vmatpush1.msra.mxu0 %v2340
      %v2342 = vand.u32 %v1965, 4294901760
      %v2343 = vsub.f32 %v1965, %v2342
      %2344 = vmatprep.subr.mxu0 %v2343
      %v2345 = vand.u32 %v1964, 4294901760
      %v2346 = vsub.f32 %v1964, %v2345
      %2347 = vmatpush1.msra.mxu0 %v2346
      %v2348 = vand.u32 %v1949, 4294901760
      %v2349 = vsub.f32 %v1949, %v2348
      %2350 = vmatprep.subr.mxu0 %v2349
      %v2351 = vand.u32 %v1948, 4294901760
      %v2352 = vsub.f32 %v1948, %v2351
      %2353 = vmatpush1.msra.mxu0 %v2352
      %v2354 = vand.u32 %v1933, 4294901760
      %v2355 = vsub.f32 %v1933, %v2354
      %2356 = vmatprep.subr.mxu0 %v2355
      %v2357 = vand.u32 %v1932, 4294901760
      %v2358 = vsub.f32 %v1932, %v2357
      %2359 = vmatpush1.msra.mxu0 %v2358
      %v2360 = vand.u32 %v1917, 4294901760
      %v2361 = vsub.f32 %v1917, %v2360
      %2362 = vmatprep.subr.mxu0 %v2361
      %v2363 = vand.u32 %v1916, 4294901760
      %v2364 = vsub.f32 %v1916, %v2363
      %2365 = vmatpush1.msra.mxu0 %v2364
      %2366 = vmatprep.subr.mxu0 0.0
      %2367 = vmatpush2.msra.mxu0 0.0
      %2368 = vmatprep.subr.mxu0 0.0
      %2369 = vmatpush2.msra.mxu0 0.0
      %2370 = vmatprep.subr.mxu0 0.0
      %2371 = vmatpush2.msra.mxu0 0.0
      %2372 = vmatprep.subr.mxu0 0.0
      %2373 = vmatpush2.msra.mxu0 0.0
      %2374 = vmatprep.subr.mxu0 0.0
      %2375 = vmatpush2.msra.mxu0 0.0
      %2376 = vmatprep.subr.mxu0 0.0
      %2377 = vmatpush2.msra.mxu0 0.0
      %2378 = vmatprep.subr.mxu0 0.0
      %2379 = vmatpush2.msra.mxu0 0.0
      %2380 = vmatprep.subr.mxu0 0.0
      %2381 = vmatpush2.msra.mxu0 0.0
      %2382 = vmatprep.subr.mxu0 0.0
      %2383 = vmatpush2.msra.mxu0 0.0
      %2384 = vmatprep.subr.mxu0 0.0
      %2385 = vmatpush2.msra.mxu0 0.0
      %2386 = vmatprep.subr.mxu0 0.0
      %2387 = vmatpush2.msra.mxu0 0.0
      %2388 = vmatprep.subr.mxu0 0.0
      %2389 = vmatpush2.msra.mxu0 0.0
      %2390 = vmatprep.subr.mxu0 0.0
      %2391 = vmatpush2.msra.mxu0 0.0
      %2392 = vmatprep.subr.mxu0 0.0
      %2393 = vmatpush2.msra.mxu0 0.0
      %2394 = vmatprep.subr.mxu0 0.0
      %2395 = vmatpush2.msra.mxu0 0.0
      %2396 = vmatprep.subr.mxu0 0.0
      %2397 = vmatpush2.msra.mxu0 0.0
      %2398 = vmatprep.mubr.f32.mxu0 0.0
      %v2399 = vand.u32 %v2040, 4294901760
      %v2400 = vsub.f32 %v2040, %v2399
      %2401 = vmatmul.mubr.f32.gmra.mxu0 %v2400
      %v2402 = vpop.f32.mrf.mxu0
      %v2403 = vadd.f32 %v2294, %v2402
      %v2404 = vpop.f32.mrf.mxu0
      %v2405 = vadd.f32 %v2296, %v2404
      %2406 = vdwg.mxu0
      %2407 = vmatprep.subr.mxu0 0.0
      %2408 = vmatpush1.msra.mxu0 0.0
      %2409 = vmatprep.subr.mxu0 0.0
      %2410 = vmatpush1.msra.mxu0 0.0
      %2411 = vmatprep.subr.mxu0 0.0
      %2412 = vmatpush1.msra.mxu0 0.0
      %2413 = vmatprep.subr.mxu0 0.0
      %2414 = vmatpush1.msra.mxu0 0.0
      %2415 = vmatprep.subr.mxu0 0.0
      %2416 = vmatpush1.msra.mxu0 0.0
      %2417 = vmatprep.subr.mxu0 0.0
      %2418 = vmatpush1.msra.mxu0 0.0
      %2419 = vmatprep.subr.mxu0 0.0
      %2420 = vmatpush1.msra.mxu0 0.0
      %v2421 = vand.u32 %v2029, 4294901760
      %2422 = vmatprep.subr.mxu0 %v2421
      %v2423 = vand.u32 %v2028, 4294901760
      %2424 = vmatpush1.msra.mxu0 %v2423
      %v2425 = vand.u32 %v2013, 4294901760
      %2426 = vmatprep.subr.mxu0 %v2425
      %v2427 = vand.u32 %v2012, 4294901760
      %2428 = vmatpush1.msra.mxu0 %v2427
      %v2429 = vand.u32 %v1997, 4294901760
      %2430 = vmatprep.subr.mxu0 %v2429
      %v2431 = vand.u32 %v1996, 4294901760
      %2432 = vmatpush1.msra.mxu0 %v2431
      %v2433 = vand.u32 %v1981, 4294901760
      %2434 = vmatprep.subr.mxu0 %v2433
      %v2435 = vand.u32 %v1980, 4294901760
      %2436 = vmatpush1.msra.mxu0 %v2435
      %v2437 = vand.u32 %v1901, 4294901760
      %2438 = vmatprep.subr.mxu0 %v2437
      %v2439 = vand.u32 %v1900, 4294901760
      %2440 = vmatpush1.msra.mxu0 %v2439
      %v2441 = vand.u32 %v1965, 4294901760
      %2442 = vmatprep.subr.mxu0 %v2441
      %v2443 = vand.u32 %v1964, 4294901760
      %2444 = vmatpush1.msra.mxu0 %v2443
      %v2445 = vand.u32 %v1949, 4294901760
      %2446 = vmatprep.subr.mxu0 %v2445
      %v2447 = vand.u32 %v1948, 4294901760
      %2448 = vmatpush1.msra.mxu0 %v2447
      %v2449 = vand.u32 %v1933, 4294901760
      %2450 = vmatprep.subr.mxu0 %v2449
      %v2451 = vand.u32 %v1932, 4294901760
      %2452 = vmatpush1.msra.mxu0 %v2451
      %v2453 = vand.u32 %v1917, 4294901760
      %2454 = vmatprep.subr.mxu0 %v2453
      %v2455 = vand.u32 %v1916, 4294901760
      %2456 = vmatpush1.msra.mxu0 %v2455
      %2457 = vmatprep.subr.mxu0 0.0
      %2458 = vmatpush2.msra.mxu0 0.0
      %2459 = vmatprep.subr.mxu0 0.0
      %2460 = vmatpush2.msra.mxu0 0.0
      %2461 = vmatprep.subr.mxu0 0.0
      %2462 = vmatpush2.msra.mxu0 0.0
      %2463 = vmatprep.subr.mxu0 0.0
      %2464 = vmatpush2.msra.mxu0 0.0
      %2465 = vmatprep.subr.mxu0 0.0
      %2466 = vmatpush2.msra.mxu0 0.0
      %2467 = vmatprep.subr.mxu0 0.0
      %2468 = vmatpush2.msra.mxu0 0.0
      %2469 = vmatprep.subr.mxu0 0.0
      %2470 = vmatpush2.msra.mxu0 0.0
      %2471 = vmatprep.subr.mxu0 0.0
      %2472 = vmatpush2.msra.mxu0 0.0
      %2473 = vmatprep.subr.mxu0 0.0
      %2474 = vmatpush2.msra.mxu0 0.0
      %2475 = vmatprep.subr.mxu0 0.0
      %2476 = vmatpush2.msra.mxu0 0.0
      %2477 = vmatprep.subr.mxu0 0.0
      %2478 = vmatpush2.msra.mxu0 0.0
      %2479 = vmatprep.subr.mxu0 0.0
      %2480 = vmatpush2.msra.mxu0 0.0
      %2481 = vmatprep.subr.mxu0 0.0
      %2482 = vmatpush2.msra.mxu0 0.0
      %2483 = vmatprep.subr.mxu0 0.0
      %2484 = vmatpush2.msra.mxu0 0.0
      %2485 = vmatprep.subr.mxu0 0.0
      %2486 = vmatpush2.msra.mxu0 0.0
      %2487 = vmatprep.subr.mxu0 0.0
      %2488 = vmatpush2.msra.mxu0 0.0
      %2489 = vmatprep.mubr.f32.mxu0 0.0
      %v2490 = vand.u32 %v2040, 4294901760
      %v2491 = vsub.f32 %v2040, %v2490
      %v2492 = vand.u32 %v2491, 4294901760
      %2493 = vmatmul.mubr.f32.gmra.mxu0 %v2492
      %v2494 = vpop.f32.mrf.mxu0
      %v2495 = vadd.f32 %v2403, %v2494
      %v2496 = vpop.f32.mrf.mxu0
      %v2497 = vadd.f32 %v2405, %v2496
      %2498 = vdwg.mxu0
      %2499 = vmatprep.subr.mxu0 0.0
      %2500 = vmatpush1.msra.mxu0 0.0
      %2501 = vmatprep.subr.mxu0 0.0
      %2502 = vmatpush1.msra.mxu0 0.0
      %2503 = vmatprep.subr.mxu0 0.0
      %2504 = vmatpush1.msra.mxu0 0.0
      %2505 = vmatprep.subr.mxu0 0.0
      %2506 = vmatpush1.msra.mxu0 0.0
      %2507 = vmatprep.subr.mxu0 0.0
      %2508 = vmatpush1.msra.mxu0 0.0
      %2509 = vmatprep.subr.mxu0 0.0
      %2510 = vmatpush1.msra.mxu0 0.0
      %2511 = vmatprep.subr.mxu0 0.0
      %2512 = vmatpush1.msra.mxu0 0.0
      %v2513 = vand.u32 %v2029, 4294901760
      %v2514 = vsub.f32 %v2029, %v2513
      %v2515 = vand.u32 %v2514, 4294901760
      %2516 = vmatprep.subr.mxu0 %v2515
      %v2517 = vand.u32 %v2028, 4294901760
      %v2518 = vsub.f32 %v2028, %v2517
      %v2519 = vand.u32 %v2518, 4294901760
      %2520 = vmatpush1.msra.mxu0 %v2519
      %v2521 = vand.u32 %v2013, 4294901760
      %v2522 = vsub.f32 %v2013, %v2521
      %v2523 = vand.u32 %v2522, 4294901760
      %2524 = vmatprep.subr.mxu0 %v2523
      %v2525 = vand.u32 %v2012, 4294901760
      %v2526 = vsub.f32 %v2012, %v2525
      %v2527 = vand.u32 %v2526, 4294901760
      %2528 = vmatpush1.msra.mxu0 %v2527
      %v2529 = vand.u32 %v1997, 4294901760
      %v2530 = vsub.f32 %v1997, %v2529
      %v2531 = vand.u32 %v2530, 4294901760
      %2532 = vmatprep.subr.mxu0 %v2531
      %v2533 = vand.u32 %v1996, 4294901760
      %v2534 = vsub.f32 %v1996, %v2533
      %v2535 = vand.u32 %v2534, 4294901760
      %2536 = vmatpush1.msra.mxu0 %v2535
      %v2537 = vand.u32 %v1981, 4294901760
      %v2538 = vsub.f32 %v1981, %v2537
      %v2539 = vand.u32 %v2538, 4294901760
      %2540 = vmatprep.subr.mxu0 %v2539
      %v2541 = vand.u32 %v1980, 4294901760
      %v2542 = vsub.f32 %v1980, %v2541
      %v2543 = vand.u32 %v2542, 4294901760
      %2544 = vmatpush1.msra.mxu0 %v2543
      %v2545 = vand.u32 %v1901, 4294901760
      %v2546 = vsub.f32 %v1901, %v2545
      %v2547 = vand.u32 %v2546, 4294901760
      %2548 = vmatprep.subr.mxu0 %v2547
      %v2549 = vand.u32 %v1900, 4294901760
      %v2550 = vsub.f32 %v1900, %v2549
      %v2551 = vand.u32 %v2550, 4294901760
      %2552 = vmatpush1.msra.mxu0 %v2551
      %v2553 = vand.u32 %v1965, 4294901760
      %v2554 = vsub.f32 %v1965, %v2553
      %v2555 = vand.u32 %v2554, 4294901760
      %2556 = vmatprep.subr.mxu0 %v2555
      %v2557 = vand.u32 %v1964, 4294901760
      %v2558 = vsub.f32 %v1964, %v2557
      %v2559 = vand.u32 %v2558, 4294901760
      %2560 = vmatpush1.msra.mxu0 %v2559
      %v2561 = vand.u32 %v1949, 4294901760
      %v2562 = vsub.f32 %v1949, %v2561
      %v2563 = vand.u32 %v2562, 4294901760
      %2564 = vmatprep.subr.mxu0 %v2563
      %v2565 = vand.u32 %v1948, 4294901760
      %v2566 = vsub.f32 %v1948, %v2565
      %v2567 = vand.u32 %v2566, 4294901760
      %2568 = vmatpush1.msra.mxu0 %v2567
      %v2569 = vand.u32 %v1933, 4294901760
      %v2570 = vsub.f32 %v1933, %v2569
      %v2571 = vand.u32 %v2570, 4294901760
      %2572 = vmatprep.subr.mxu0 %v2571
      %v2573 = vand.u32 %v1932, 4294901760
      %v2574 = vsub.f32 %v1932, %v2573
      %v2575 = vand.u32 %v2574, 4294901760
      %2576 = vmatpush1.msra.mxu0 %v2575
      %v2577 = vand.u32 %v1917, 4294901760
      %v2578 = vsub.f32 %v1917, %v2577
      %v2579 = vand.u32 %v2578, 4294901760
      %2580 = vmatprep.subr.mxu0 %v2579
      %v2581 = vand.u32 %v1916, 4294901760
      %v2582 = vsub.f32 %v1916, %v2581
      %v2583 = vand.u32 %v2582, 4294901760
      %2584 = vmatpush1.msra.mxu0 %v2583
      %2585 = vmatprep.subr.mxu0 0.0
      %2586 = vmatpush2.msra.mxu0 0.0
      %2587 = vmatprep.subr.mxu0 0.0
      %2588 = vmatpush2.msra.mxu0 0.0
      %2589 = vmatprep.subr.mxu0 0.0
      %2590 = vmatpush2.msra.mxu0 0.0
      %2591 = vmatprep.subr.mxu0 0.0
      %2592 = vmatpush2.msra.mxu0 0.0
      %2593 = vmatprep.subr.mxu0 0.0
      %2594 = vmatpush2.msra.mxu0 0.0
      %2595 = vmatprep.subr.mxu0 0.0
      %2596 = vmatpush2.msra.mxu0 0.0
      %2597 = vmatprep.subr.mxu0 0.0
      %2598 = vmatpush2.msra.mxu0 0.0
      %2599 = vmatprep.subr.mxu0 0.0
      %2600 = vmatpush2.msra.mxu0 0.0
      %2601 = vmatprep.subr.mxu0 0.0
      %2602 = vmatpush2.msra.mxu0 0.0
      %2603 = vmatprep.subr.mxu0 0.0
      %2604 = vmatpush2.msra.mxu0 0.0
      %2605 = vmatprep.subr.mxu0 0.0
      %2606 = vmatpush2.msra.mxu0 0.0
      %2607 = vmatprep.subr.mxu0 0.0
      %2608 = vmatpush2.msra.mxu0 0.0
      %2609 = vmatprep.subr.mxu0 0.0
      %2610 = vmatpush2.msra.mxu0 0.0
      %2611 = vmatprep.subr.mxu0 0.0
      %2612 = vmatpush2.msra.mxu0 0.0
      %2613 = vmatprep.subr.mxu0 0.0
      %2614 = vmatpush2.msra.mxu0 0.0
      %2615 = vmatprep.subr.mxu0 0.0
      %2616 = vmatpush2.msra.mxu0 0.0
      %2617 = vmatprep.mubr.f32.mxu0 0.0
      %v2618 = vand.u32 %v2040, 4294901760
      %2619 = vmatmul.mubr.f32.gmra.mxu0 %v2618
      %v2620 = vpop.f32.mrf.mxu0
      %v2621 = vadd.f32 %v2495, %v2620
      %v2622 = vpop.f32.mrf.mxu0
      %v2623 = vadd.f32 %v2497, %v2622
      %2624 = vdwg.mxu0
      %2625 = vmatprep.subr.mxu0 0.0
      %2626 = vmatpush1.msra.mxu0 0.0
      %2627 = vmatprep.subr.mxu0 0.0
      %2628 = vmatpush1.msra.mxu0 0.0
      %2629 = vmatprep.subr.mxu0 0.0
      %2630 = vmatpush1.msra.mxu0 0.0
      %2631 = vmatprep.subr.mxu0 0.0
      %2632 = vmatpush1.msra.mxu0 0.0
      %2633 = vmatprep.subr.mxu0 0.0
      %2634 = vmatpush1.msra.mxu0 0.0
      %2635 = vmatprep.subr.mxu0 0.0
      %2636 = vmatpush1.msra.mxu0 0.0
      %2637 = vmatprep.subr.mxu0 0.0
      %2638 = vmatpush1.msra.mxu0 0.0
      %v2639 = vand.u32 %v2029, 4294901760
      %2640 = vmatprep.subr.mxu0 %v2639
      %v2641 = vand.u32 %v2028, 4294901760
      %2642 = vmatpush1.msra.mxu0 %v2641
      %v2643 = vand.u32 %v2013, 4294901760
      %2644 = vmatprep.subr.mxu0 %v2643
      %v2645 = vand.u32 %v2012, 4294901760
      %2646 = vmatpush1.msra.mxu0 %v2645
      %v2647 = vand.u32 %v1997, 4294901760
      %2648 = vmatprep.subr.mxu0 %v2647
      %v2649 = vand.u32 %v1996, 4294901760
      %2650 = vmatpush1.msra.mxu0 %v2649
      %v2651 = vand.u32 %v1981, 4294901760
      %2652 = vmatprep.subr.mxu0 %v2651
      %v2653 = vand.u32 %v1980, 4294901760
      %2654 = vmatpush1.msra.mxu0 %v2653
      %v2655 = vand.u32 %v1901, 4294901760
      %2656 = vmatprep.subr.mxu0 %v2655
      %v2657 = vand.u32 %v1900, 4294901760
      %2658 = vmatpush1.msra.mxu0 %v2657
      %v2659 = vand.u32 %v1965, 4294901760
      %2660 = vmatprep.subr.mxu0 %v2659
      %v2661 = vand.u32 %v1964, 4294901760
      %2662 = vmatpush1.msra.mxu0 %v2661
      %v2663 = vand.u32 %v1949, 4294901760
      %2664 = vmatprep.subr.mxu0 %v2663
      %v2665 = vand.u32 %v1948, 4294901760
      %2666 = vmatpush1.msra.mxu0 %v2665
      %v2667 = vand.u32 %v1933, 4294901760
      %2668 = vmatprep.subr.mxu0 %v2667
      %v2669 = vand.u32 %v1932, 4294901760
      %2670 = vmatpush1.msra.mxu0 %v2669
      %v2671 = vand.u32 %v1917, 4294901760
      %2672 = vmatprep.subr.mxu0 %v2671
      %v2673 = vand.u32 %v1916, 4294901760
      %2674 = vmatpush1.msra.mxu0 %v2673
      %2675 = vmatprep.subr.mxu0 0.0
      %2676 = vmatpush2.msra.mxu0 0.0
      %2677 = vmatprep.subr.mxu0 0.0
      %2678 = vmatpush2.msra.mxu0 0.0
      %2679 = vmatprep.subr.mxu0 0.0
      %2680 = vmatpush2.msra.mxu0 0.0
      %2681 = vmatprep.subr.mxu0 0.0
      %2682 = vmatpush2.msra.mxu0 0.0
      %2683 = vmatprep.subr.mxu0 0.0
      %2684 = vmatpush2.msra.mxu0 0.0
      %2685 = vmatprep.subr.mxu0 0.0
      %2686 = vmatpush2.msra.mxu0 0.0
      %2687 = vmatprep.subr.mxu0 0.0
      %2688 = vmatpush2.msra.mxu0 0.0
      %2689 = vmatprep.subr.mxu0 0.0
      %2690 = vmatpush2.msra.mxu0 0.0
      %2691 = vmatprep.subr.mxu0 0.0
      %2692 = vmatpush2.msra.mxu0 0.0
      %2693 = vmatprep.subr.mxu0 0.0
      %2694 = vmatpush2.msra.mxu0 0.0
      %2695 = vmatprep.subr.mxu0 0.0
      %2696 = vmatpush2.msra.mxu0 0.0
      %2697 = vmatprep.subr.mxu0 0.0
      %2698 = vmatpush2.msra.mxu0 0.0
      %2699 = vmatprep.subr.mxu0 0.0
      %2700 = vmatpush2.msra.mxu0 0.0
      %2701 = vmatprep.subr.mxu0 0.0
      %2702 = vmatpush2.msra.mxu0 0.0
      %2703 = vmatprep.subr.mxu0 0.0
      %2704 = vmatpush2.msra.mxu0 0.0
      %2705 = vmatprep.subr.mxu0 0.0
      %2706 = vmatpush2.msra.mxu0 0.0
      %2707 = vmatprep.mubr.f32.mxu0 0.0
      %v2708 = vand.u32 %v2040, 4294901760
      %2709 = vmatmul.mubr.f32.gmra.mxu0 %v2708
      %v2710 = vpop.f32.mrf.mxu0
      %v2711 = vadd.f32 %v2621, %v2710
      %v2712 = vpop.f32.mrf.mxu0
      %v2713 = vadd.f32 %v2623, %v2712
      %2714 = vdwg.mxu0
      %2715 = vmatprep.subr.mxu0 0.0
      %2716 = vmatpush1.msra.mxu0 0.0
      %2717 = vmatprep.subr.mxu0 0.0
      %2718 = vmatpush1.msra.mxu0 0.0
      %2719 = vmatprep.subr.mxu0 0.0
      %2720 = vmatpush1.msra.mxu0 0.0
      %2721 = vmatprep.subr.mxu0 0.0
      %2722 = vmatpush1.msra.mxu0 0.0
      %2723 = vmatprep.subr.mxu0 0.0
      %2724 = vmatpush1.msra.mxu0 0.0
      %2725 = vmatprep.subr.mxu0 0.0
      %2726 = vmatpush1.msra.mxu0 0.0
      %2727 = vmatprep.subr.mxu0 0.0
      %2728 = vmatpush1.msra.mxu0 0.0
      %v2729 = vand.u32 %v2031, 4294901760
      %2730 = vmatprep.subr.mxu0 %v2729
      %v2731 = vand.u32 %v2030, 4294901760
      %2732 = vmatpush1.msra.mxu0 %v2731
      %v2733 = vand.u32 %v2015, 4294901760
      %2734 = vmatprep.subr.mxu0 %v2733
      %v2735 = vand.u32 %v2014, 4294901760
      %2736 = vmatpush1.msra.mxu0 %v2735
      %v2737 = vand.u32 %v1999, 4294901760
      %2738 = vmatprep.subr.mxu0 %v2737
      %v2739 = vand.u32 %v1998, 4294901760
      %2740 = vmatpush1.msra.mxu0 %v2739
      %v2741 = vand.u32 %v1983, 4294901760
      %2742 = vmatprep.subr.mxu0 %v2741
      %v2743 = vand.u32 %v1982, 4294901760
      %2744 = vmatpush1.msra.mxu0 %v2743
      %v2745 = vand.u32 %v1903, 4294901760
      %2746 = vmatprep.subr.mxu0 %v2745
      %v2747 = vand.u32 %v1902, 4294901760
      %2748 = vmatpush1.msra.mxu0 %v2747
      %v2749 = vand.u32 %v1967, 4294901760
      %2750 = vmatprep.subr.mxu0 %v2749
      %v2751 = vand.u32 %v1966, 4294901760
      %2752 = vmatpush1.msra.mxu0 %v2751
      %v2753 = vand.u32 %v1951, 4294901760
      %2754 = vmatprep.subr.mxu0 %v2753
      %v2755 = vand.u32 %v1950, 4294901760
      %2756 = vmatpush1.msra.mxu0 %v2755
      %v2757 = vand.u32 %v1935, 4294901760
      %2758 = vmatprep.subr.mxu0 %v2757
      %v2759 = vand.u32 %v1934, 4294901760
      %2760 = vmatpush1.msra.mxu0 %v2759
      %v2761 = vand.u32 %v1919, 4294901760
      %2762 = vmatprep.subr.mxu0 %v2761
      %v2763 = vand.u32 %v1918, 4294901760
      %2764 = vmatpush1.msra.mxu0 %v2763
      %2765 = vmatprep.subr.mxu0 0.0
      %2766 = vmatpush2.msra.mxu0 0.0
      %2767 = vmatprep.subr.mxu0 0.0
      %2768 = vmatpush2.msra.mxu0 0.0
      %2769 = vmatprep.subr.mxu0 0.0
      %2770 = vmatpush2.msra.mxu0 0.0
      %2771 = vmatprep.subr.mxu0 0.0
      %2772 = vmatpush2.msra.mxu0 0.0
      %2773 = vmatprep.subr.mxu0 0.0
      %2774 = vmatpush2.msra.mxu0 0.0
      %2775 = vmatprep.subr.mxu0 0.0
      %2776 = vmatpush2.msra.mxu0 0.0
      %2777 = vmatprep.subr.mxu0 0.0
      %2778 = vmatpush2.msra.mxu0 0.0
      %2779 = vmatprep.subr.mxu0 0.0
      %2780 = vmatpush2.msra.mxu0 0.0
      %2781 = vmatprep.subr.mxu0 0.0
      %2782 = vmatpush2.msra.mxu0 0.0
      %2783 = vmatprep.subr.mxu0 0.0
      %2784 = vmatpush2.msra.mxu0 0.0
      %2785 = vmatprep.subr.mxu0 0.0
      %2786 = vmatpush2.msra.mxu0 0.0
      %2787 = vmatprep.subr.mxu0 0.0
      %2788 = vmatpush2.msra.mxu0 0.0
      %2789 = vmatprep.subr.mxu0 0.0
      %2790 = vmatpush2.msra.mxu0 0.0
      %2791 = vmatprep.subr.mxu0 0.0
      %2792 = vmatpush2.msra.mxu0 0.0
      %2793 = vmatprep.subr.mxu0 0.0
      %2794 = vmatpush2.msra.mxu0 0.0
      %2795 = vmatprep.subr.mxu0 0.0
      %2796 = vmatpush2.msra.mxu0 0.0
      %2797 = vmatprep.mubr.f32.mxu0 0.0
      %v2798 = vand.u32 %v2040, 4294901760
      %v2799 = vsub.f32 %v2040, %v2798
      %v2800 = vand.u32 %v2799, 4294901760
      %v2801 = vsub.f32 %v2799, %v2800
      %v2802 = vand.u32 %v2801, 4294901760
      %2803 = vmatmul.mubr.f32.gmra.mxu0 %v2802
      %v2804 = vpop.f32.mrf.mxu0
      %v2805 = vadd.f32 %v2036, %v2804
      %v2806 = vpop.f32.mrf.mxu0
      %v2807 = vadd.f32 %v2036, %v2806
      %2808 = vdwg.mxu0
      %2809 = vmatprep.subr.mxu0 0.0
      %2810 = vmatpush1.msra.mxu0 0.0
      %2811 = vmatprep.subr.mxu0 0.0
      %2812 = vmatpush1.msra.mxu0 0.0
      %2813 = vmatprep.subr.mxu0 0.0
      %2814 = vmatpush1.msra.mxu0 0.0
      %2815 = vmatprep.subr.mxu0 0.0
      %2816 = vmatpush1.msra.mxu0 0.0
      %2817 = vmatprep.subr.mxu0 0.0
      %2818 = vmatpush1.msra.mxu0 0.0
      %2819 = vmatprep.subr.mxu0 0.0
      %2820 = vmatpush1.msra.mxu0 0.0
      %2821 = vmatprep.subr.mxu0 0.0
      %2822 = vmatpush1.msra.mxu0 0.0
      %v2823 = vand.u32 %v2031, 4294901760
      %v2824 = vsub.f32 %v2031, %v2823
      %v2825 = vand.u32 %v2824, 4294901760
      %v2826 = vsub.f32 %v2824, %v2825
      %v2827 = vand.u32 %v2826, 4294901760
      %2828 = vmatprep.subr.mxu0 %v2827
      %v2829 = vand.u32 %v2030, 4294901760
      %v2830 = vsub.f32 %v2030, %v2829
      %v2831 = vand.u32 %v2830, 4294901760
      %v2832 = vsub.f32 %v2830, %v2831
      %v2833 = vand.u32 %v2832, 4294901760
      %2834 = vmatpush1.msra.mxu0 %v2833
      %v2835 = vand.u32 %v2015, 4294901760
      %v2836 = vsub.f32 %v2015, %v2835
      %v2837 = vand.u32 %v2836, 4294901760
      %v2838 = vsub.f32 %v2836, %v2837
      %v2839 = vand.u32 %v2838, 4294901760
      %2840 = vmatprep.subr.mxu0 %v2839
      %v2841 = vand.u32 %v2014, 4294901760
      %v2842 = vsub.f32 %v2014, %v2841
      %v2843 = vand.u32 %v2842, 4294901760
      %v2844 = vsub.f32 %v2842, %v2843
      %v2845 = vand.u32 %v2844, 4294901760
      %2846 = vmatpush1.msra.mxu0 %v2845
      %v2847 = vand.u32 %v1999, 4294901760
      %v2848 = vsub.f32 %v1999, %v2847
      %v2849 = vand.u32 %v2848, 4294901760
      %v2850 = vsub.f32 %v2848, %v2849
      %v2851 = vand.u32 %v2850, 4294901760
      %2852 = vmatprep.subr.mxu0 %v2851
      %v2853 = vand.u32 %v1998, 4294901760
      %v2854 = vsub.f32 %v1998, %v2853
      %v2855 = vand.u32 %v2854, 4294901760
      %v2856 = vsub.f32 %v2854, %v2855
      %v2857 = vand.u32 %v2856, 4294901760
      %2858 = vmatpush1.msra.mxu0 %v2857
      %v2859 = vand.u32 %v1983, 4294901760
      %v2860 = vsub.f32 %v1983, %v2859
      %v2861 = vand.u32 %v2860, 4294901760
      %v2862 = vsub.f32 %v2860, %v2861
      %v2863 = vand.u32 %v2862, 4294901760
      %2864 = vmatprep.subr.mxu0 %v2863
      %v2865 = vand.u32 %v1982, 4294901760
      %v2866 = vsub.f32 %v1982, %v2865
      %v2867 = vand.u32 %v2866, 4294901760
      %v2868 = vsub.f32 %v2866, %v2867
      %v2869 = vand.u32 %v2868, 4294901760
      %2870 = vmatpush1.msra.mxu0 %v2869
      %v2871 = vand.u32 %v1903, 4294901760
      %v2872 = vsub.f32 %v1903, %v2871
      %v2873 = vand.u32 %v2872, 4294901760
      %v2874 = vsub.f32 %v2872, %v2873
      %v2875 = vand.u32 %v2874, 4294901760
      %2876 = vmatprep.subr.mxu0 %v2875
      %v2877 = vand.u32 %v1902, 4294901760
      %v2878 = vsub.f32 %v1902, %v2877
      %v2879 = vand.u32 %v2878, 4294901760
      %v2880 = vsub.f32 %v2878, %v2879
      %v2881 = vand.u32 %v2880, 4294901760
      %2882 = vmatpush1.msra.mxu0 %v2881
      %v2883 = vand.u32 %v1967, 4294901760
      %v2884 = vsub.f32 %v1967, %v2883
      %v2885 = vand.u32 %v2884, 4294901760
      %v2886 = vsub.f32 %v2884, %v2885
      %v2887 = vand.u32 %v2886, 4294901760
      %2888 = vmatprep.subr.mxu0 %v2887
      %v2889 = vand.u32 %v1966, 4294901760
      %v2890 = vsub.f32 %v1966, %v2889
      %v2891 = vand.u32 %v2890, 4294901760
      %v2892 = vsub.f32 %v2890, %v2891
      %v2893 = vand.u32 %v2892, 4294901760
      %2894 = vmatpush1.msra.mxu0 %v2893
      %v2895 = vand.u32 %v1951, 4294901760
      %v2896 = vsub.f32 %v1951, %v2895
      %v2897 = vand.u32 %v2896, 4294901760
      %v2898 = vsub.f32 %v2896, %v2897
      %v2899 = vand.u32 %v2898, 4294901760
      %2900 = vmatprep.subr.mxu0 %v2899
      %v2901 = vand.u32 %v1950, 4294901760
      %v2902 = vsub.f32 %v1950, %v2901
      %v2903 = vand.u32 %v2902, 4294901760
      %v2904 = vsub.f32 %v2902, %v2903
      %v2905 = vand.u32 %v2904, 4294901760
      %2906 = vmatpush1.msra.mxu0 %v2905
      %v2907 = vand.u32 %v1935, 4294901760
      %v2908 = vsub.f32 %v1935, %v2907
      %v2909 = vand.u32 %v2908, 4294901760
      %v2910 = vsub.f32 %v2908, %v2909
      %v2911 = vand.u32 %v2910, 4294901760
      %2912 = vmatprep.subr.mxu0 %v2911
      %v2913 = vand.u32 %v1934, 4294901760
      %v2914 = vsub.f32 %v1934, %v2913
      %v2915 = vand.u32 %v2914, 4294901760
      %v2916 = vsub.f32 %v2914, %v2915
      %v2917 = vand.u32 %v2916, 4294901760
      %2918 = vmatpush1.msra.mxu0 %v2917
      %v2919 = vand.u32 %v1919, 4294901760
      %v2920 = vsub.f32 %v1919, %v2919
      %v2921 = vand.u32 %v2920, 4294901760
      %v2922 = vsub.f32 %v2920, %v2921
      %v2923 = vand.u32 %v2922, 4294901760
      %2924 = vmatprep.subr.mxu0 %v2923
      %v2925 = vand.u32 %v1918, 4294901760
      %v2926 = vsub.f32 %v1918, %v2925
      %v2927 = vand.u32 %v2926, 4294901760
      %v2928 = vsub.f32 %v2926, %v2927
      %v2929 = vand.u32 %v2928, 4294901760
      %2930 = vmatpush1.msra.mxu0 %v2929
      %2931 = vmatprep.subr.mxu0 0.0
      %2932 = vmatpush2.msra.mxu0 0.0
      %2933 = vmatprep.subr.mxu0 0.0
      %2934 = vmatpush2.msra.mxu0 0.0
      %2935 = vmatprep.subr.mxu0 0.0
      %2936 = vmatpush2.msra.mxu0 0.0
      %2937 = vmatprep.subr.mxu0 0.0
      %2938 = vmatpush2.msra.mxu0 0.0
      %2939 = vmatprep.subr.mxu0 0.0
      %2940 = vmatpush2.msra.mxu0 0.0
      %2941 = vmatprep.subr.mxu0 0.0
      %2942 = vmatpush2.msra.mxu0 0.0
      %2943 = vmatprep.subr.mxu0 0.0
      %2944 = vmatpush2.msra.mxu0 0.0
      %2945 = vmatprep.subr.mxu0 0.0
      %2946 = vmatpush2.msra.mxu0 0.0
      %2947 = vmatprep.subr.mxu0 0.0
      %2948 = vmatpush2.msra.mxu0 0.0
      %2949 = vmatprep.subr.mxu0 0.0
      %2950 = vmatpush2.msra.mxu0 0.0
      %2951 = vmatprep.subr.mxu0 0.0
      %2952 = vmatpush2.msra.mxu0 0.0
      %2953 = vmatprep.subr.mxu0 0.0
      %2954 = vmatpush2.msra.mxu0 0.0
      %2955 = vmatprep.subr.mxu0 0.0
      %2956 = vmatpush2.msra.mxu0 0.0
      %2957 = vmatprep.subr.mxu0 0.0
      %2958 = vmatpush2.msra.mxu0 0.0
      %2959 = vmatprep.subr.mxu0 0.0
      %2960 = vmatpush2.msra.mxu0 0.0
      %2961 = vmatprep.subr.mxu0 0.0
      %2962 = vmatpush2.msra.mxu0 0.0
      %2963 = vmatprep.mubr.f32.mxu0 0.0
      %v2964 = vand.u32 %v2040, 4294901760
      %2965 = vmatmul.mubr.f32.gmra.mxu0 %v2964
      %v2966 = vpop.f32.mrf.mxu0
      %v2967 = vadd.f32 %v2805, %v2966
      %v2968 = vpop.f32.mrf.mxu0
      %v2969 = vadd.f32 %v2807, %v2968
      %2970 = vdwg.mxu0
      %2971 = vmatprep.subr.mxu0 0.0
      %2972 = vmatpush1.msra.mxu0 0.0
      %2973 = vmatprep.subr.mxu0 0.0
      %2974 = vmatpush1.msra.mxu0 0.0
      %2975 = vmatprep.subr.mxu0 0.0
      %2976 = vmatpush1.msra.mxu0 0.0
      %2977 = vmatprep.subr.mxu0 0.0
      %2978 = vmatpush1.msra.mxu0 0.0
      %2979 = vmatprep.subr.mxu0 0.0
      %2980 = vmatpush1.msra.mxu0 0.0
      %2981 = vmatprep.subr.mxu0 0.0
      %2982 = vmatpush1.msra.mxu0 0.0
      %2983 = vmatprep.subr.mxu0 0.0
      %2984 = vmatpush1.msra.mxu0 0.0
      %v2985 = vand.u32 %v2031, 4294901760
      %v2986 = vsub.f32 %v2031, %v2985
      %2987 = vmatprep.subr.mxu0 %v2986
      %v2988 = vand.u32 %v2030, 4294901760
      %v2989 = vsub.f32 %v2030, %v2988
      %2990 = vmatpush1.msra.mxu0 %v2989
      %v2991 = vand.u32 %v2015, 4294901760
      %v2992 = vsub.f32 %v2015, %v2991
      %2993 = vmatprep.subr.mxu0 %v2992
      %v2994 = vand.u32 %v2014, 4294901760
      %v2995 = vsub.f32 %v2014, %v2994
      %2996 = vmatpush1.msra.mxu0 %v2995
      %v2997 = vand.u32 %v1999, 4294901760
      %v2998 = vsub.f32 %v1999, %v2997
      %2999 = vmatprep.subr.mxu0 %v2998
      %v3000 = vand.u32 %v1998, 4294901760
      %v3001 = vsub.f32 %v1998, %v3000
      %3002 = vmatpush1.msra.mxu0 %v3001
      %v3003 = vand.u32 %v1983, 4294901760
      %v3004 = vsub.f32 %v1983, %v3003
      %3005 = vmatprep.subr.mxu0 %v3004
      %v3006 = vand.u32 %v1982, 4294901760
      %v3007 = vsub.f32 %v1982, %v3006
      %3008 = vmatpush1.msra.mxu0 %v3007
      %v3009 = vand.u32 %v1903, 4294901760
      %v3010 = vsub.f32 %v1903, %v3009
      %3011 = vmatprep.subr.mxu0 %v3010
      %v3012 = vand.u32 %v1902, 4294901760
      %v3013 = vsub.f32 %v1902, %v3012
      %3014 = vmatpush1.msra.mxu0 %v3013
      %v3015 = vand.u32 %v1967, 4294901760
      %v3016 = vsub.f32 %v1967, %v3015
      %3017 = vmatprep.subr.mxu0 %v3016
      %v3018 = vand.u32 %v1966, 4294901760
      %v3019 = vsub.f32 %v1966, %v3018
      %3020 = vmatpush1.msra.mxu0 %v3019
      %v3021 = vand.u32 %v1951, 4294901760
      %v3022 = vsub.f32 %v1951, %v3021
      %3023 = vmatprep.subr.mxu0 %v3022
      %v3024 = vand.u32 %v1950, 4294901760
      %v3025 = vsub.f32 %v1950, %v3024
      %3026 = vmatpush1.msra.mxu0 %v3025
      %v3027 = vand.u32 %v1935, 4294901760
      %v3028 = vsub.f32 %v1935, %v3027
      %3029 = vmatprep.subr.mxu0 %v3028
      %v3030 = vand.u32 %v1934, 4294901760
      %v3031 = vsub.f32 %v1934, %v3030
      %3032 = vmatpush1.msra.mxu0 %v3031
      %v3033 = vand.u32 %v1919, 4294901760
      %v3034 = vsub.f32 %v1919, %v3033
      %3035 = vmatprep.subr.mxu0 %v3034
      %v3036 = vand.u32 %v1918, 4294901760
      %v3037 = vsub.f32 %v1918, %v3036
      %3038 = vmatpush1.msra.mxu0 %v3037
      %3039 = vmatprep.subr.mxu0 0.0
      %3040 = vmatpush2.msra.mxu0 0.0
      %3041 = vmatprep.subr.mxu0 0.0
      %3042 = vmatpush2.msra.mxu0 0.0
      %3043 = vmatprep.subr.mxu0 0.0
      %3044 = vmatpush2.msra.mxu0 0.0
      %3045 = vmatprep.subr.mxu0 0.0
      %3046 = vmatpush2.msra.mxu0 0.0
      %3047 = vmatprep.subr.mxu0 0.0
      %3048 = vmatpush2.msra.mxu0 0.0
      %3049 = vmatprep.subr.mxu0 0.0
      %3050 = vmatpush2.msra.mxu0 0.0
      %3051 = vmatprep.subr.mxu0 0.0
      %3052 = vmatpush2.msra.mxu0 0.0
      %3053 = vmatprep.subr.mxu0 0.0
      %3054 = vmatpush2.msra.mxu0 0.0
      %3055 = vmatprep.subr.mxu0 0.0
      %3056 = vmatpush2.msra.mxu0 0.0
      %3057 = vmatprep.subr.mxu0 0.0
      %3058 = vmatpush2.msra.mxu0 0.0
      %3059 = vmatprep.subr.mxu0 0.0
      %3060 = vmatpush2.msra.mxu0 0.0
      %3061 = vmatprep.subr.mxu0 0.0
      %3062 = vmatpush2.msra.mxu0 0.0
      %3063 = vmatprep.subr.mxu0 0.0
      %3064 = vmatpush2.msra.mxu0 0.0
      %3065 = vmatprep.subr.mxu0 0.0
      %3066 = vmatpush2.msra.mxu0 0.0
      %3067 = vmatprep.subr.mxu0 0.0
      %3068 = vmatpush2.msra.mxu0 0.0
      %3069 = vmatprep.subr.mxu0 0.0
      %3070 = vmatpush2.msra.mxu0 0.0
      %3071 = vmatprep.mubr.f32.mxu0 0.0
      %v3072 = vand.u32 %v2040, 4294901760
      %v3073 = vsub.f32 %v2040, %v3072
      %3074 = vmatmul.mubr.f32.gmra.mxu0 %v3073
      %v3075 = vpop.f32.mrf.mxu0
      %v3076 = vadd.f32 %v2967, %v3075
      %v3077 = vpop.f32.mrf.mxu0
      %v3078 = vadd.f32 %v2969, %v3077
      %3079 = vdwg.mxu0
      %3080 = vmatprep.subr.mxu0 0.0
      %3081 = vmatpush1.msra.mxu0 0.0
      %3082 = vmatprep.subr.mxu0 0.0
      %3083 = vmatpush1.msra.mxu0 0.0
      %3084 = vmatprep.subr.mxu0 0.0
      %3085 = vmatpush1.msra.mxu0 0.0
      %3086 = vmatprep.subr.mxu0 0.0
      %3087 = vmatpush1.msra.mxu0 0.0
      %3088 = vmatprep.subr.mxu0 0.0
      %3089 = vmatpush1.msra.mxu0 0.0
      %3090 = vmatprep.subr.mxu0 0.0
      %3091 = vmatpush1.msra.mxu0 0.0
      %3092 = vmatprep.subr.mxu0 0.0
      %3093 = vmatpush1.msra.mxu0 0.0
      %v3094 = vand.u32 %v2031, 4294901760
      %3095 = vmatprep.subr.mxu0 %v3094
      %v3096 = vand.u32 %v2030, 4294901760
      %3097 = vmatpush1.msra.mxu0 %v3096
      %v3098 = vand.u32 %v2015, 4294901760
      %3099 = vmatprep.subr.mxu0 %v3098
      %v3100 = vand.u32 %v2014, 4294901760
      %3101 = vmatpush1.msra.mxu0 %v3100
      %v3102 = vand.u32 %v1999, 4294901760
      %3103 = vmatprep.subr.mxu0 %v3102
      %v3104 = vand.u32 %v1998, 4294901760
      %3105 = vmatpush1.msra.mxu0 %v3104
      %v3106 = vand.u32 %v1983, 4294901760
      %3107 = vmatprep.subr.mxu0 %v3106
      %v3108 = vand.u32 %v1982, 4294901760
      %3109 = vmatpush1.msra.mxu0 %v3108
      %v3110 = vand.u32 %v1903, 4294901760
      %3111 = vmatprep.subr.mxu0 %v3110
      %v3112 = vand.u32 %v1902, 4294901760
      %3113 = vmatpush1.msra.mxu0 %v3112
      %v3114 = vand.u32 %v1967, 4294901760
      %3115 = vmatprep.subr.mxu0 %v3114
      %v3116 = vand.u32 %v1966, 4294901760
      %3117 = vmatpush1.msra.mxu0 %v3116
      %v3118 = vand.u32 %v1951, 4294901760
      %3119 = vmatprep.subr.mxu0 %v3118
      %v3120 = vand.u32 %v1950, 4294901760
      %3121 = vmatpush1.msra.mxu0 %v3120
      %v3122 = vand.u32 %v1935, 4294901760
      %3123 = vmatprep.subr.mxu0 %v3122
      %v3124 = vand.u32 %v1934, 4294901760
      %3125 = vmatpush1.msra.mxu0 %v3124
      %v3126 = vand.u32 %v1919, 4294901760
      %3127 = vmatprep.subr.mxu0 %v3126
      %v3128 = vand.u32 %v1918, 4294901760
      %3129 = vmatpush1.msra.mxu0 %v3128
      %3130 = vmatprep.subr.mxu0 0.0
      %3131 = vmatpush2.msra.mxu0 0.0
      %3132 = vmatprep.subr.mxu0 0.0
      %3133 = vmatpush2.msra.mxu0 0.0
      %3134 = vmatprep.subr.mxu0 0.0
      %3135 = vmatpush2.msra.mxu0 0.0
      %3136 = vmatprep.subr.mxu0 0.0
      %3137 = vmatpush2.msra.mxu0 0.0
      %3138 = vmatprep.subr.mxu0 0.0
      %3139 = vmatpush2.msra.mxu0 0.0
      %3140 = vmatprep.subr.mxu0 0.0
      %3141 = vmatpush2.msra.mxu0 0.0
      %3142 = vmatprep.subr.mxu0 0.0
      %3143 = vmatpush2.msra.mxu0 0.0
      %3144 = vmatprep.subr.mxu0 0.0
      %3145 = vmatpush2.msra.mxu0 0.0
      %3146 = vmatprep.subr.mxu0 0.0
      %3147 = vmatpush2.msra.mxu0 0.0
      %3148 = vmatprep.subr.mxu0 0.0
      %3149 = vmatpush2.msra.mxu0 0.0
      %3150 = vmatprep.subr.mxu0 0.0
      %3151 = vmatpush2.msra.mxu0 0.0
      %3152 = vmatprep.subr.mxu0 0.0
      %3153 = vmatpush2.msra.mxu0 0.0
      %3154 = vmatprep.subr.mxu0 0.0
      %3155 = vmatpush2.msra.mxu0 0.0
      %3156 = vmatprep.subr.mxu0 0.0
      %3157 = vmatpush2.msra.mxu0 0.0
      %3158 = vmatprep.subr.mxu0 0.0
      %3159 = vmatpush2.msra.mxu0 0.0
      %3160 = vmatprep.subr.mxu0 0.0
      %3161 = vmatpush2.msra.mxu0 0.0
      %3162 = vmatprep.mubr.f32.mxu0 0.0
      %v3163 = vand.u32 %v2040, 4294901760
      %v3164 = vsub.f32 %v2040, %v3163
      %v3165 = vand.u32 %v3164, 4294901760
      %3166 = vmatmul.mubr.f32.gmra.mxu0 %v3165
      %v3167 = vpop.f32.mrf.mxu0
      %v3168 = vadd.f32 %v3076, %v3167
      %v3169 = vpop.f32.mrf.mxu0
      %v3170 = vadd.f32 %v3078, %v3169
      %3171 = vdwg.mxu0
      %3172 = vmatprep.subr.mxu0 0.0
      %3173 = vmatpush1.msra.mxu0 0.0
      %3174 = vmatprep.subr.mxu0 0.0
      %3175 = vmatpush1.msra.mxu0 0.0
      %3176 = vmatprep.subr.mxu0 0.0
      %3177 = vmatpush1.msra.mxu0 0.0
      %3178 = vmatprep.subr.mxu0 0.0
      %3179 = vmatpush1.msra.mxu0 0.0
      %3180 = vmatprep.subr.mxu0 0.0
      %3181 = vmatpush1.msra.mxu0 0.0
      %3182 = vmatprep.subr.mxu0 0.0
      %3183 = vmatpush1.msra.mxu0 0.0
      %3184 = vmatprep.subr.mxu0 0.0
      %3185 = vmatpush1.msra.mxu0 0.0
      %v3186 = vand.u32 %v2031, 4294901760
      %v3187 = vsub.f32 %v2031, %v3186
      %v3188 = vand.u32 %v3187, 4294901760
      %3189 = vmatprep.subr.mxu0 %v3188
      %v3190 = vand.u32 %v2030, 4294901760
      %v3191 = vsub.f32 %v2030, %v3190
      %v3192 = vand.u32 %v3191, 4294901760
      %3193 = vmatpush1.msra.mxu0 %v3192
      %v3194 = vand.u32 %v2015, 4294901760
      %v3195 = vsub.f32 %v2015, %v3194
      %v3196 = vand.u32 %v3195, 4294901760
      %3197 = vmatprep.subr.mxu0 %v3196
      %v3198 = vand.u32 %v2014, 4294901760
      %v3199 = vsub.f32 %v2014, %v3198
      %v3200 = vand.u32 %v3199, 4294901760
      %3201 = vmatpush1.msra.mxu0 %v3200
      %v3202 = vand.u32 %v1999, 4294901760
      %v3203 = vsub.f32 %v1999, %v3202
      %v3204 = vand.u32 %v3203, 4294901760
      %3205 = vmatprep.subr.mxu0 %v3204
      %v3206 = vand.u32 %v1998, 4294901760
      %v3207 = vsub.f32 %v1998, %v3206
      %v3208 = vand.u32 %v3207, 4294901760
      %3209 = vmatpush1.msra.mxu0 %v3208
      %v3210 = vand.u32 %v1983, 4294901760
      %v3211 = vsub.f32 %v1983, %v3210
      %v3212 = vand.u32 %v3211, 4294901760
      %3213 = vmatprep.subr.mxu0 %v3212
      %v3214 = vand.u32 %v1982, 4294901760
      %v3215 = vsub.f32 %v1982, %v3214
      %v3216 = vand.u32 %v3215, 4294901760
      %3217 = vmatpush1.msra.mxu0 %v3216
      %v3218 = vand.u32 %v1903, 4294901760
      %v3219 = vsub.f32 %v1903, %v3218
      %v3220 = vand.u32 %v3219, 4294901760
      %3221 = vmatprep.subr.mxu0 %v3220
      %v3222 = vand.u32 %v1902, 4294901760
      %v3223 = vsub.f32 %v1902, %v3222
      %v3224 = vand.u32 %v3223, 4294901760
      %3225 = vmatpush1.msra.mxu0 %v3224
      %v3226 = vand.u32 %v1967, 4294901760
      %v3227 = vsub.f32 %v1967, %v3226
      %v3228 = vand.u32 %v3227, 4294901760
      %3229 = vmatprep.subr.mxu0 %v3228
      %v3230 = vand.u32 %v1966, 4294901760
      %v3231 = vsub.f32 %v1966, %v3230
      %v3232 = vand.u32 %v3231, 4294901760
      %3233 = vmatpush1.msra.mxu0 %v3232
      %v3234 = vand.u32 %v1951, 4294901760
      %v3235 = vsub.f32 %v1951, %v3234
      %v3236 = vand.u32 %v3235, 4294901760
      %3237 = vmatprep.subr.mxu0 %v3236
      %v3238 = vand.u32 %v1950, 4294901760
      %v3239 = vsub.f32 %v1950, %v3238
      %v3240 = vand.u32 %v3239, 4294901760
      %3241 = vmatpush1.msra.mxu0 %v3240
      %v3242 = vand.u32 %v1935, 4294901760
      %v3243 = vsub.f32 %v1935, %v3242
      %v3244 = vand.u32 %v3243, 4294901760
      %3245 = vmatprep.subr.mxu0 %v3244
      %v3246 = vand.u32 %v1934, 4294901760
      %v3247 = vsub.f32 %v1934, %v3246
      %v3248 = vand.u32 %v3247, 4294901760
      %3249 = vmatpush1.msra.mxu0 %v3248
      %v3250 = vand.u32 %v1919, 4294901760
      %v3251 = vsub.f32 %v1919, %v3250
      %v3252 = vand.u32 %v3251, 4294901760
      %3253 = vmatprep.subr.mxu0 %v3252
      %v3254 = vand.u32 %v1918, 4294901760
      %v3255 = vsub.f32 %v1918, %v3254
      %v3256 = vand.u32 %v3255, 4294901760
      %3257 = vmatpush1.msra.mxu0 %v3256
      %3258 = vmatprep.subr.mxu0 0.0
      %3259 = vmatpush2.msra.mxu0 0.0
      %3260 = vmatprep.subr.mxu0 0.0
      %3261 = vmatpush2.msra.mxu0 0.0
      %3262 = vmatprep.subr.mxu0 0.0
      %3263 = vmatpush2.msra.mxu0 0.0
      %3264 = vmatprep.subr.mxu0 0.0
      %3265 = vmatpush2.msra.mxu0 0.0
      %3266 = vmatprep.subr.mxu0 0.0
      %3267 = vmatpush2.msra.mxu0 0.0
      %3268 = vmatprep.subr.mxu0 0.0
      %3269 = vmatpush2.msra.mxu0 0.0
      %3270 = vmatprep.subr.mxu0 0.0
      %3271 = vmatpush2.msra.mxu0 0.0
      %3272 = vmatprep.subr.mxu0 0.0
      %3273 = vmatpush2.msra.mxu0 0.0
      %3274 = vmatprep.subr.mxu0 0.0
      %3275 = vmatpush2.msra.mxu0 0.0
      %3276 = vmatprep.subr.mxu0 0.0
      %3277 = vmatpush2.msra.mxu0 0.0
      %3278 = vmatprep.subr.mxu0 0.0
      %3279 = vmatpush2.msra.mxu0 0.0
      %3280 = vmatprep.subr.mxu0 0.0
      %3281 = vmatpush2.msra.mxu0 0.0
      %3282 = vmatprep.subr.mxu0 0.0
      %3283 = vmatpush2.msra.mxu0 0.0
      %3284 = vmatprep.subr.mxu0 0.0
      %3285 = vmatpush2.msra.mxu0 0.0
      %3286 = vmatprep.subr.mxu0 0.0
      %3287 = vmatpush2.msra.mxu0 0.0
      %3288 = vmatprep.subr.mxu0 0.0
      %3289 = vmatpush2.msra.mxu0 0.0
      %3290 = vmatprep.mubr.f32.mxu0 0.0
      %v3291 = vand.u32 %v2040, 4294901760
      %3292 = vmatmul.mubr.f32.gmra.mxu0 %v3291
      %v3293 = vpop.f32.mrf.mxu0
      %v3294 = vadd.f32 %v3168, %v3293
      %v3295 = vpop.f32.mrf.mxu0
      %v3296 = vadd.f32 %v3170, %v3295
      %3297 = vdwg.mxu0
      %3298 = vmatprep.subr.mxu0 0.0
      %3299 = vmatpush1.msra.mxu0 0.0
      %3300 = vmatprep.subr.mxu0 0.0
      %3301 = vmatpush1.msra.mxu0 0.0
      %3302 = vmatprep.subr.mxu0 0.0
      %3303 = vmatpush1.msra.mxu0 0.0
      %3304 = vmatprep.subr.mxu0 0.0
      %3305 = vmatpush1.msra.mxu0 0.0
      %3306 = vmatprep.subr.mxu0 0.0
      %3307 = vmatpush1.msra.mxu0 0.0
      %3308 = vmatprep.subr.mxu0 0.0
      %3309 = vmatpush1.msra.mxu0 0.0
      %3310 = vmatprep.subr.mxu0 0.0
      %3311 = vmatpush1.msra.mxu0 0.0
      %v3312 = vand.u32 %v2031, 4294901760
      %3313 = vmatprep.subr.mxu0 %v3312
      %v3314 = vand.u32 %v2030, 4294901760
      %3315 = vmatpush1.msra.mxu0 %v3314
      %v3316 = vand.u32 %v2015, 4294901760
      %3317 = vmatprep.subr.mxu0 %v3316
      %v3318 = vand.u32 %v2014, 4294901760
      %3319 = vmatpush1.msra.mxu0 %v3318
      %v3320 = vand.u32 %v1999, 4294901760
      %3321 = vmatprep.subr.mxu0 %v3320
      %v3322 = vand.u32 %v1998, 4294901760
      %3323 = vmatpush1.msra.mxu0 %v3322
      %v3324 = vand.u32 %v1983, 4294901760
      %3325 = vmatprep.subr.mxu0 %v3324
      %v3326 = vand.u32 %v1982, 4294901760
      %3327 = vmatpush1.msra.mxu0 %v3326
      %v3328 = vand.u32 %v1903, 4294901760
      %3329 = vmatprep.subr.mxu0 %v3328
      %v3330 = vand.u32 %v1902, 4294901760
      %3331 = vmatpush1.msra.mxu0 %v3330
      %v3332 = vand.u32 %v1967, 4294901760
      %3333 = vmatprep.subr.mxu0 %v3332
      %v3334 = vand.u32 %v1966, 4294901760
      %3335 = vmatpush1.msra.mxu0 %v3334
      %v3336 = vand.u32 %v1951, 4294901760
      %3337 = vmatprep.subr.mxu0 %v3336
      %v3338 = vand.u32 %v1950, 4294901760
      %3339 = vmatpush1.msra.mxu0 %v3338
      %v3340 = vand.u32 %v1935, 4294901760
      %3341 = vmatprep.subr.mxu0 %v3340
      %v3342 = vand.u32 %v1934, 4294901760
      %3343 = vmatpush1.msra.mxu0 %v3342
      %v3344 = vand.u32 %v1919, 4294901760
      %3345 = vmatprep.subr.mxu0 %v3344
      %v3346 = vand.u32 %v1918, 4294901760
      %3347 = vmatpush1.msra.mxu0 %v3346
      %3348 = vmatprep.subr.mxu0 0.0
      %3349 = vmatpush2.msra.mxu0 0.0
      %3350 = vmatprep.subr.mxu0 0.0
      %3351 = vmatpush2.msra.mxu0 0.0
      %3352 = vmatprep.subr.mxu0 0.0
      %3353 = vmatpush2.msra.mxu0 0.0
      %3354 = vmatprep.subr.mxu0 0.0
      %3355 = vmatpush2.msra.mxu0 0.0
      %3356 = vmatprep.subr.mxu0 0.0
      %3357 = vmatpush2.msra.mxu0 0.0
      %3358 = vmatprep.subr.mxu0 0.0
      %3359 = vmatpush2.msra.mxu0 0.0
      %3360 = vmatprep.subr.mxu0 0.0
      %3361 = vmatpush2.msra.mxu0 0.0
      %3362 = vmatprep.subr.mxu0 0.0
      %3363 = vmatpush2.msra.mxu0 0.0
      %3364 = vmatprep.subr.mxu0 0.0
      %3365 = vmatpush2.msra.mxu0 0.0
      %3366 = vmatprep.subr.mxu0 0.0
      %3367 = vmatpush2.msra.mxu0 0.0
      %3368 = vmatprep.subr.mxu0 0.0
      %3369 = vmatpush2.msra.mxu0 0.0
      %3370 = vmatprep.subr.mxu0 0.0
      %3371 = vmatpush2.msra.mxu0 0.0
      %3372 = vmatprep.subr.mxu0 0.0
      %3373 = vmatpush2.msra.mxu0 0.0
      %3374 = vmatprep.subr.mxu0 0.0
      %3375 = vmatpush2.msra.mxu0 0.0
      %3376 = vmatprep.subr.mxu0 0.0
      %3377 = vmatpush2.msra.mxu0 0.0
      %3378 = vmatprep.subr.mxu0 0.0
      %3379 = vmatpush2.msra.mxu0 0.0
      %3380 = vmatprep.mubr.f32.mxu0 0.0
      %v3381 = vand.u32 %v2040, 4294901760
      %3382 = vmatmul.mubr.f32.gmra.mxu0 %v3381
      %v3383 = vpop.f32.mrf.mxu0
      %v3384 = vadd.f32 %v3294, %v3383
      %v3385 = vpop.f32.mrf.mxu0
      %v3386 = vadd.f32 %v3296, %v3385
      %3387 = vdwg.mxu0
      %v3388 = vtanh.pop %v2711
      %v3389 = vtanh.pop %v2713
      %v3390 = vtanh.pop %v3384
      %v3391 = vtanh.pop %v3386
      %3393 = vset.pattern.permute.xlu0 0
      %3394 = vperm.xlu0 %3393, %v337
      %v3395 = vpop.permute.xlu0 %3394
      %v3397 = vmul.f32 %v3395, %v3388
      %v3398 = vmul.f32 %v3395, %v3389
      %v3399 = vmul.f32 %v3395, %v3390
      %v3400 = vmul.f32 %v3395, %v3391
      %v3405 = vrot.slane %v2711, 2
      %v3406 = vrot.slane %v2713, 2
      %v3407 = vrot.slane %v3384, 2
      %v3408 = vrot.slane %v3386, 2
      %v3413 = vadd.f32 %v826, %v3405
      %v3414 = vadd.f32 %v828, %v3406
      %v3415 = vadd.f32 %v1291, %v3407
      %v3416 = vadd.f32 %v1293, %v3408
      %v3417 = vmul.f32 %v3397, 1.442695
      %v3418 = vpow.pop %v3417
      %v3419 = vmul.f32 %v3398, 1.442695
      %v3420 = vpow.pop %v3419
      %v3421 = vmul.f32 %v3399, 1.442695
      %v3422 = vpow.pop %v3421
      %v3423 = vmul.f32 %v3400, 1.442695
      %v3424 = vpow.pop %v3423
      %v3425 = vmul.f32 %v3413, %v3418
      %v3426 = vmul.f32 %v3414, %v3420
      %v3427 = vmul.f32 %v3415, %v3422
      %v3428 = vmul.f32 %v3416, %v3424
      %v3429 = vsel %vm1649, %v3425, %v826
      %v3430 = vsel %vm1649, %v3426, %v828
      %v3431 = vsel %vm1649, %v3427, %v1291
      %v3432 = vsel %vm1649, %v3428, %v1293
      %v3435 = vcombine.low %v3429, %v3430
      %3437 = vst [vmem:[%s319] sm:$0xff] %v3435
      %v3438 = vsel %vm1649, %v3397, 0.0
      %v3439 = vsel %vm1649, %v3398, 0.0
      %v3440 = vadd.f32 %v3438, %v3439
      %3441 = vadd.xlane.f32.xlu0 %v3440
      %v3442 = vpop.xlane.xlu0 %3441
      %v3443 = vsel %vm1649, %v3442, 0.0
      %v3444 = vrot.slane %v3443, 4
      %v3445 = vadd.f32 %v3443, %v3444
      %v3446 = vrot.slane %v3445, 2
      %v3447 = vadd.f32 %v3445, %v3446
      %v3448 = vrot.slane %v3447, 1
      %v3449 = vadd.f32 %v3447, %v3448
      %v3452 = vcombine.low %v3431, %v3432
      %s3454 = scalar_lea.vmem %s319, 8
      %3455 = vst [vmem:[%s3454] sm:$0xff] %v3452
      %v3456 = vsel %vm1649, %v3399, 0.0
      %v3457 = vsel %vm1649, %v3400, 0.0
      %v3458 = vadd.f32 %v3456, %v3457
      %3459 = vadd.xlane.f32.xlu0 %v3458
      %v3460 = vpop.xlane.xlu0 %3459
      %v3461 = vsel %vm1649, %v3460, 0.0
      %v3462 = vrot.slane %v3461, 4
      %v3463 = vadd.f32 %v3461, %v3462
      %v3464 = vrot.slane %v3463, 2
      %v3465 = vadd.f32 %v3463, %v3464
      %v3466 = vrot.slane %v3465, 1
      %v3467 = vadd.f32 %v3465, %v3466
      %v3468 = vsel %vm1693, %v3449, %v3467
      %3469 = vst [vmem:[%s324] sm:$0x3] %v3468
      %s3470 = smul.u32 2, %s20
      %p3471 = scmp.lt.s32.totalorder %s3470, 3
      %s3472 = scalar_select %p3471, %s3470, 3
      %s3473 = smul.addr %s3472, 2
      %s3474 = smul.addr %s3473, 4
      %s3475 = scalar_lea.vmem %s7, %s3474
      %p3476 = scmp.lt.s32.totalorder %s20, 1
      %s3477 = scalar_select %p3476, %s20, 1
      %s3478 = smul.addr %s3477, 2
      %s3479 = scalar_lea.vmem %s8, %s3478
      // Predicated region
      $region49: #{flow_step_forward.1} parent=47 // pred_check
        %p3480 = pneg %p190
      $region50: #{flow_step_forward.1} parent=47 // pred_check_branch
        %3482 = sbr.rel (%p3480) target = $region52
      $region51: #{flow_step_forward.1} parent=47 // pred_region
        %s3483 = smul.u32 2, %s20
      $region52: #{flow_step_forward.1} parent=47 // pred_fallthru
        _
      // Predicated region
      $region53: #{flow_step_forward.1} parent=47 // pred_check
        %p3484 = pneg %p216
      $region54: #{flow_step_forward.1} parent=47 // pred_check_branch
        %3486 = sbr.rel (%p3484) target = $region56
      $region55: #{flow_step_forward.1} parent=47 // pred_region
        _
      $region56: #{flow_step_forward.1} parent=47 // pred_fallthru
        _
    $region48: #{flow_step_forward.1} parent=5 // pred_fallthru
      _
    %p3487 = scmp.le.s32.totalorder 2, %s15
    // Predicated region
    $region57: #{flow_step_forward.1} parent=5 // pred_check
      %p3488 = pneg %p3487
    $region58: #{flow_step_forward.1} parent=5 // pred_check_branch
      %3490 = sbr.rel (%p3488) target = $region60
    $region59: #{flow_step_forward.1} parent=5 // pred_region
      %s3491 = ssub.s32 %s15, 2
      // Predicated region
      $region61: #{flow_step_forward.1} parent=59 // pred_check
        %p3492 = pneg %p196
      $region62: #{flow_step_forward.1} parent=59 // pred_check_branch
        %3494 = sbr.rel (%p3492) target = $region64
      $region63: #{flow_step_forward.1} parent=59 // pred_region
        %s3495 = smul.u32 2, %s21
        %p3496 = scmp.lt.s32.totalorder %s3495, 3
        %s3497 = scalar_select %p3496, %s3495, 3
        %s3498 = smul.addr %s3497, 2
        %s3499 = smul.addr %s3498, 4
        %s3500 = scalar_lea.vmem %s7, %s3499
      $region64: #{flow_step_forward.1} parent=59 // pred_fallthru
        _
      // Predicated region
      $region65: #{flow_step_forward.1} parent=59 // pred_check
        %p3501 = pneg %p222
      $region66: #{flow_step_forward.1} parent=59 // pred_check_branch
        %3503 = sbr.rel (%p3501) target = $region68
      $region67: #{flow_step_forward.1} parent=59 // pred_region
        %p3504 = scmp.lt.s32.totalorder %s21, 1
        %s3505 = scalar_select %p3504, %s21, 1
        %s3506 = smul.addr %s3505, 2
        %s3507 = scalar_lea.vmem %s8, %s3506
      $region68: #{flow_step_forward.1} parent=59 // pred_fallthru
        _
    $region60: #{flow_step_forward.1} parent=5 // pred_fallthru
      _
  $region6: #{flow_step_forward.1} parent=0 // loop_footer
    %s19 = sadd.s32 1, %s15
  $region7: #{flow_step_forward.1} parent=0 // loop_footer_branch
    %14 = sbr.rel target = $region3
  $region8: #{flow_step_forward.1} parent=0 // loop_exit
    _

</llo_original>
